<compile_context>
chip_gen: v7x
topology: tpu7x:2x2x1
jax: 0.10.0
libtpu: 0.0.40
codegen_flags: <defaults>
</compile_context>

<pallas_src>
import functools

import jax
import jax.numpy as jnp
from jax import lax
from jax.experimental import pallas as pl
from jax.experimental.pallas import tpu as pltpu


def _cbam_kernel(x_ref, wfc_ref, bfc_ref, wsa_ref, o_ref, pad_ref, *,
                 kernel_size, width, pad_len):
    # x_ref:   (Bt, C, H*W)          VMEM, lane-dense
    # wfc_ref: (C, C)                VMEM, 1x1 conv weight, pre-transposed (in, out)
    # bfc_ref: (1, C)                VMEM, 1x1 conv bias
    # wsa_ref: (2, K*K)              SMEM, 7x7 conv taps; row 0 = mean map, row 1 = max map
    # o_ref:   (Bt, C, H*W)          VMEM
    # pad_ref: (2, Bt, H*W + 2*pad_len) VMEM scratch (zero-bordered flat maps)
    Bt, C, HW = x_ref.shape
    K = kernel_size
    W = width
    p = K // 2

    x = x_ref[...]                                          # (Bt, C, HW)

    # ---------- Channel attention: x * sigmoid(fc(global_avg_pool(x))) ----------
    avg = jnp.mean(x.astype(jnp.float32), axis=2)           # (Bt, C): single lane reduce
    y = jnp.dot(avg, wfc_ref[...],
                preferred_element_type=jnp.float32) + bfc_ref[...]
    ca = jax.nn.sigmoid(y).astype(x.dtype)                  # (Bt, C)
    xc = x * ca[:, :, None]                                 # (Bt, C, HW), stays in x dtype

    # ---------- Channel-wise stats (sublane reduce, still lane-dense) ----------
    xcf = xc.astype(jnp.float32)
    mean_c = jnp.mean(xcf, axis=1)                          # (Bt, HW)
    max_c = jnp.max(xcf, axis=1)                            # (Bt, HW)

    # ---------- KxK spatial conv on the two tiny maps, flat row-major domain ----------
    # Zero-bordered scratch written once; each tap (dy, dx) is a static lane
    # slice at offset (dy-p)*W + (dx-p).  Wrap-around across row boundaries is
    # exactly the set of column-invalid positions, removed by col_masks[dx].
    pad_ref[...] = jnp.zeros_like(pad_ref)
    pad_ref[0, :, pad_len:pad_len + HW] = mean_c
    pad_ref[1, :, pad_len:pad_len + HW] = max_c
    pmx = pad_ref[...]                                      # (2, Bt, L)

    col = lax.broadcasted_iota(jnp.int32, (1, HW), 1) % W
    col_masks = [
        jnp.logical_and(col >= (p - dx), col <= (W - 1 + p - dx))
        for dx in range(K)
    ]

    acc = jnp.zeros((Bt, HW), jnp.float32)
    for dy in range(K):
        row_off = pad_len + (dy - p) * W
        for dx in range(K):
            k = dy * K + dx
            start = row_off + (dx - p)
            win = pmx[:, :, start:start + HW]               # one slice per tap
            tap = wsa_ref[0, k] * win[0] + wsa_ref[1, k] * win[1]
            acc = acc + jnp.where(col_masks[dx], tap, 0.0)

    sa = jax.nn.sigmoid(acc).astype(x.dtype)                # (Bt, HW)
    o_ref[...] = (xc * sa[:, None, :]).astype(o_ref.dtype)  # lane-dense store


def _pick_bt(batch, channels, hw):
    """Batch-tile so blocks are big (DMA-efficient) but fit all generations.

    ~3 MiB (f32-equivalent) per input block keeps double-buffered in+out plus
    the in-kernel f32 intermediates comfortably under a 32 MiB scoped-VMEM
    limit (and well under v7x's 64 MiB physical VMEM).
    """
    budget = 3 * 1024 * 1024
    cap = max(1, budget // (channels * hw * 4))
    if batch >= 2:
        cap = min(cap, batch // 2)      # keep >=2 grid steps -> both v7x TCs get work
    cap = max(1, min(cap, batch))
    bt = 1
    for d in range(1, cap + 1):         # largest divisor of batch not exceeding cap
        if batch % d == 0:
            bt = d
    return bt


def cbam_pallas(x, w_fc, b_fc, w_sa, kernel_size=7):
    """x: (B, C, H, W); w_fc: (C, C); b_fc: (C,); w_sa: (1, 2, K, K)."""
    B, C, H, W = x.shape
    HW = H * W
    K = kernel_size
    p = K // 2

    x_flat = x.reshape(B, C, HW)                              # free row-major reshape
    wfc_t = jnp.asarray(w_fc, jnp.float32).T                  # (C_in, C_out)
    bfc = jnp.asarray(b_fc, jnp.float32).reshape(1, C)
    wsa_flat = jnp.asarray(w_sa, jnp.float32).reshape(2, K * K)

    Bt = _pick_bt(B, C, HW)
    grid = (B // Bt,)
    pad_len = p * W + p
    L = HW + 2 * pad_len

    itemsize = jnp.dtype(x.dtype).itemsize
    block_bytes = Bt * C * HW * itemsize
    vmem_limit = int(min(64 * 1024 * 1024,
                         max(32 * 1024 * 1024, 8 * block_bytes)))

    kernel = functools.partial(_cbam_kernel, kernel_size=K, width=W,
                               pad_len=pad_len)

    out = pl.pallas_call(
        kernel,
        out_shape=jax.ShapeDtypeStruct((B, C, HW), x.dtype),
        grid_spec=pltpu.PrefetchScalarGridSpec(
            num_scalar_prefetch=0,
            grid=grid,
            in_specs=[
                pl.BlockSpec((Bt, C, HW), lambda b: (b, 0, 0)),
                pl.BlockSpec((C, C), lambda b: (0, 0)),
                pl.BlockSpec((1, C), lambda b: (0, 0)),
                pl.BlockSpec(memory_space=pltpu.MemorySpace.SMEM),
            ],
            out_specs=pl.BlockSpec((Bt, C, HW), lambda b: (b, 0, 0)),
            scratch_shapes=[pltpu.VMEM((2, Bt, L), jnp.float32)],
        ),
        compiler_params=pltpu.CompilerParams(
            dimension_semantics=("parallel",),
            vmem_limit_bytes=vmem_limit),
    )(x_flat, wfc_t, bfc, wsa_flat)
    return out.reshape(B, C, H, W)


def cbam_ref(x, w_fc, b_fc, w_sa):
    """Pure-JAX reference mirroring the PyTorch forward (NCHW)."""
    # Channel attention
    avg = jnp.mean(x, axis=(2, 3), keepdims=True)                      # (B,C,1,1)
    y = jnp.einsum('oc,bcij->boij', w_fc, avg) + b_fc[None, :, None, None]
    xc = x * jax.nn.sigmoid(y)
    # Spatial attention
    mean_c = jnp.mean(xc, axis=1, keepdims=True)
    max_c = jnp.max(xc, axis=1, keepdims=True)
    cat = jnp.concatenate([mean_c, max_c], axis=1)                     # (B,2,H,W)
    conv = lax.conv_general_dilated(
        cat, w_sa, window_strides=(1, 1), padding=[(3, 3), (3, 3)],
        dimension_numbers=('NCHW', 'OIHW', 'NCHW'))
    return xc * jax.nn.sigmoid(conv)


if __name__ == "__main__":
    B, C, H, W = 2, 4, 16, 16
    K = 7

    key = jax.random.PRNGKey(0)
    k1, k2, k3, k4 = jax.random.split(key, 4)
    x = jax.random.normal(k1, (B, C, H, W), dtype=jnp.float32)
    # Deterministic synthetic parameters (shapes from the module __init__):
    w_fc = jax.random.normal(k2, (C, C), dtype=jnp.float32) * 0.3        # Conv2d(C, C, 1) weight
    b_fc = jax.random.normal(k3, (C,), dtype=jnp.float32) * 0.1          # Conv2d(C, C, 1) bias
    w_sa = jax.random.normal(k4, (1, 2, K, K), dtype=jnp.float32) * 0.2  # Conv2d(2, 1, 7) weight

    out = cbam_pallas(x, w_fc, b_fc, w_sa, kernel_size=K)
    out = jax.block_until_ready(out)

    ref = cbam_ref(x, w_fc, b_fc, w_sa)
    max_err = float(jnp.max(jnp.abs(out - ref)))
    assert jnp.allclose(out, ref, atol=1e-4, rtol=1e-4), f"max_err={max_err}"

    print("KERNEL_OK")
</pallas_src>

<mosaic_0001>
module attributes {stable_mosaic.version = 11 : i64} {
  func.func @_cbam_kernel(%arg0: i32, %arg1: memref<1x4x256xf32, #tpu.memory_space<vmem>>, %arg2: memref<4x4xf32, #tpu.memory_space<vmem>>, %arg3: memref<1x4xf32, #tpu.memory_space<vmem>>, %arg4: memref<2x49xf32, #tpu.memory_space<smem>>, %arg5: memref<1x4x256xf32, #tpu.memory_space<vmem>>, %arg6: memref<2x1x358xf32, #tpu.memory_space<vmem>>) attributes {dimension_semantics = [#tpu.dimension_semantics<parallel>], iteration_bounds = array<i64: 2>, scalar_prefetch = 0 : i64, scratch_operands = 1 : i64, tpu.core_type = #tpu.core_type<tc>, window_params = [{transform_indices = @transform_0, window_bounds = array<i64: 1, 4, 256>}, {pipeline_mode = #tpu.pipeline_mode<synchronous>, transform_indices = @transform_1, window_bounds = array<i64: 4, 4>}, {pipeline_mode = #tpu.pipeline_mode<synchronous>, transform_indices = @transform_2, window_bounds = array<i64: 1, 4>}, {transform_indices = @transform_3, window_bounds = array<i64: 2, 49>}, {transform_indices = @transform_4, window_bounds = array<i64: 1, 4, 256>}]} {
    %c0 = arith.constant 0 : index
    %c0_0 = arith.constant 0 : index
    %c0_1 = arith.constant 0 : index
    %0 = vector.load %arg1[%c0, %c0_0, %c0_1] : memref<1x4x256xf32, #tpu.memory_space<vmem>>, vector<1x4x256xf32>
    %cst = arith.constant dense<0.000000e+00> : vector<1x4xf32>
    %1 = vector.multi_reduction <add>, %0, %cst [2] : vector<1x4x256xf32> to vector<1x4xf32>
    %cst_2 = arith.constant 2.560000e+02 : f32
    %2 = vector.broadcast %cst_2 : f32 to vector<1x4xf32>
    %3 = arith.divf %1, %2 : vector<1x4xf32>
    %c0_3 = arith.constant 0 : index
    %c0_4 = arith.constant 0 : index
    %4 = vector.load %arg2[%c0_3, %c0_4] : memref<4x4xf32, #tpu.memory_space<vmem>>, vector<4x4xf32>
    %cst_5 = arith.constant dense<0.000000e+00> : vector<1x4xf32>
    %5 = tpu.matmul %3, %4, %cst_5 {dimension_numbers = #tpu.dot_dimension_numbers<[1], [0], [0], [1], [0, 0, 1, 1], [], []>} : vector<1x4xf32>, vector<4x4xf32>, vector<1x4xf32> -> vector<1x4xf32>
    %c0_6 = arith.constant 0 : index
    %c0_7 = arith.constant 0 : index
    %6 = vector.load %arg3[%c0_6, %c0_7] : memref<1x4xf32, #tpu.memory_space<vmem>>, vector<1x4xf32>
    %7 = arith.addf %5, %6 : vector<1x4xf32>
    %8 = arith.negf %7 : vector<1x4xf32>
    %9 = math.exp %8 : vector<1x4xf32>
    %cst_8 = arith.constant 1.000000e+00 : f32
    %10 = vector.broadcast %cst_8 : f32 to vector<1x4xf32>
    %11 = arith.addf %10, %9 : vector<1x4xf32>
    %12 = arith.divf %10, %11 : vector<1x4xf32>
    %13 = vector.shape_cast %12 : vector<1x4xf32> to vector<1x4x1xf32>
    %14 = vector.broadcast %13 : vector<1x4x1xf32> to vector<1x4x256xf32>
    %15 = arith.mulf %0, %14 : vector<1x4x256xf32>
    %cst_9 = arith.constant dense<0.000000e+00> : vector<1x256xf32>
    %16 = vector.multi_reduction <add>, %15, %cst_9 [1] : vector<1x4x256xf32> to vector<1x256xf32>
    %cst_10 = arith.constant 4.000000e+00 : f32
    %17 = vector.broadcast %cst_10 : f32 to vector<1x256xf32>
    %18 = arith.divf %16, %17 : vector<1x256xf32>
    %cst_11 = arith.constant dense<0xFF800000> : vector<1x256xf32>
    %19 = vector.multi_reduction <maximumf>, %15, %cst_11 [1] : vector<1x4x256xf32> to vector<1x256xf32>
    %cst_12 = arith.constant 0.000000e+00 : f32
    %20 = vector.broadcast %cst_12 : f32 to vector<2x1x358xf32>
    %c0_13 = arith.constant 0 : index
    %c0_14 = arith.constant 0 : index
    %c0_15 = arith.constant 0 : index
    %21 = vector.load %arg6[%c0_13, %c0_14, %c0_15] : memref<2x1x358xf32, #tpu.memory_space<vmem>>, vector<2x1x358xf32>
    tpu.vector_store %arg6[%c0_13, %c0_14, %c0_15], %20 {strides = array<i32>} : memref<2x1x358xf32, #tpu.memory_space<vmem>>, vector<2x1x358xf32>,
    %c0_16 = arith.constant 0 : index
    %c0_17 = arith.constant 0 : index
    %c51 = arith.constant 51 : index
    %22 = vector.load %arg6[%c0_16, %c0_17, %c51] : memref<2x1x358xf32, #tpu.memory_space<vmem>>, vector<1x1x256xf32>
    %23 = vector.shape_cast %22 : vector<1x1x256xf32> to vector<1x256xf32>
    %24 = vector.shape_cast %18 : vector<1x256xf32> to vector<1x1x256xf32>
    tpu.vector_store %arg6[%c0_16, %c0_17, %c51], %24 {strides = array<i32>} : memref<2x1x358xf32, #tpu.memory_space<vmem>>, vector<1x1x256xf32>,
    %c1 = arith.constant 1 : index
    %c0_18 = arith.constant 0 : index
    %c51_19 = arith.constant 51 : index
    %25 = vector.load %arg6[%c1, %c0_18, %c51_19] : memref<2x1x358xf32, #tpu.memory_space<vmem>>, vector<1x1x256xf32>
    %26 = vector.shape_cast %25 : vector<1x1x256xf32> to vector<1x256xf32>
    %27 = vector.shape_cast %19 : vector<1x256xf32> to vector<1x1x256xf32>
    tpu.vector_store %arg6[%c1, %c0_18, %c51_19], %27 {strides = array<i32>} : memref<2x1x358xf32, #tpu.memory_space<vmem>>, vector<1x1x256xf32>,
    %c0_20 = arith.constant 0 : index
    %c0_21 = arith.constant 0 : index
    %c0_22 = arith.constant 0 : index
    %28 = vector.load %arg6[%c0_20, %c0_21, %c0_22] : memref<2x1x358xf32, #tpu.memory_space<vmem>>, vector<2x1x358xf32>
    %29 = tpu.iota {dimensions = array<i32: 1>} : vector<1x256xi32>
    %c16_i32 = arith.constant 16 : i32
    %c0_i32 = arith.constant 0 : i32
    %30 = arith.cmpi eq, %c16_i32, %c0_i32 : i32
    %c1_i32 = arith.constant 1 : i32
    %31 = arith.select %30, %c1_i32, %c16_i32 : i32
    %32 = vector.broadcast %31 : i32 to vector<1x256xi32>
    %33 = arith.remsi %29, %32 : vector<1x256xi32>
    %c0_i32_23 = arith.constant 0 : i32
    %34 = vector.broadcast %c0_i32_23 : i32 to vector<1x256xi32>
    %35 = arith.cmpi ne, %33, %34 : vector<1x256xi32>
    %c0_i32_24 = arith.constant 0 : i32
    %36 = vector.broadcast %c0_i32_24 : i32 to vector<1x256xi32>
    %37 = arith.cmpi slt, %33, %36 : vector<1x256xi32>
    %c0_i32_25 = arith.constant 0 : i32
    %38 = arith.cmpi slt, %31, %c0_i32_25 : i32
    %39 = vector.broadcast %38 : i1 to vector<1x256xi1>
    %40 = vector.broadcast %39 : vector<1x256xi1> to vector<1x256xi1>
    %41 = arith.xori %37, %40 : vector<1x256xi1>
    %42 = arith.andi %41, %35 : vector<1x256xi1>
    %43 = vector.broadcast %31 : i32 to vector<1x256xi32>
    %44 = arith.addi %33, %43 : vector<1x256xi32>
    %45 = arith.select %42, %44, %33 : vector<1x256xi1>, vector<1x256xi32>
    %c3_i32 = arith.constant 3 : i32
    %46 = vector.broadcast %c3_i32 : i32 to vector<1x256xi32>
    %47 = arith.cmpi sge, %45, %46 : vector<1x256xi32>
    %c18_i32 = arith.constant 18 : i32
    %48 = vector.broadcast %c18_i32 : i32 to vector<1x256xi32>
    %49 = arith.cmpi sle, %45, %48 : vector<1x256xi32>
    %50 = arith.andi %47, %49 : vector<1x256xi1>
    %c2_i32 = arith.constant 2 : i32
    %51 = vector.broadcast %c2_i32 : i32 to vector<1x256xi32>
    %52 = arith.cmpi sge, %45, %51 : vector<1x256xi32>
    %c17_i32 = arith.constant 17 : i32
    %53 = vector.broadcast %c17_i32 : i32 to vector<1x256xi32>
    %54 = arith.cmpi sle, %45, %53 : vector<1x256xi32>
    %55 = arith.andi %52, %54 : vector<1x256xi1>
    %c1_i32_26 = arith.constant 1 : i32
    %56 = vector.broadcast %c1_i32_26 : i32 to vector<1x256xi32>
    %57 = arith.cmpi sge, %45, %56 : vector<1x256xi32>
    %c16_i32_27 = arith.constant 16 : i32
    %58 = vector.broadcast %c16_i32_27 : i32 to vector<1x256xi32>
    %59 = arith.cmpi sle, %45, %58 : vector<1x256xi32>
    %60 = arith.andi %57, %59 : vector<1x256xi1>
    %c0_i32_28 = arith.constant 0 : i32
    %61 = vector.broadcast %c0_i32_28 : i32 to vector<1x256xi32>
    %62 = arith.cmpi sge, %45, %61 : vector<1x256xi32>
    %c15_i32 = arith.constant 15 : i32
    %63 = vector.broadcast %c15_i32 : i32 to vector<1x256xi32>
    %64 = arith.cmpi sle, %45, %63 : vector<1x256xi32>
    %65 = arith.andi %62, %64 : vector<1x256xi1>
    %c-1_i32 = arith.constant -1 : i32
    %66 = vector.broadcast %c-1_i32 : i32 to vector<1x256xi32>
    %67 = arith.cmpi sge, %45, %66 : vector<1x256xi32>
    %c14_i32 = arith.constant 14 : i32
    %68 = vector.broadcast %c14_i32 : i32 to vector<1x256xi32>
    %69 = arith.cmpi sle, %45, %68 : vector<1x256xi32>
    %70 = arith.andi %67, %69 : vector<1x256xi1>
    %c-2_i32 = arith.constant -2 : i32
    %71 = vector.broadcast %c-2_i32 : i32 to vector<1x256xi32>
    %72 = arith.cmpi sge, %45, %71 : vector<1x256xi32>
    %c13_i32 = arith.constant 13 : i32
    %73 = vector.broadcast %c13_i32 : i32 to vector<1x256xi32>
    %74 = arith.cmpi sle, %45, %73 : vector<1x256xi32>
    %75 = arith.andi %72, %74 : vector<1x256xi1>
    %c-3_i32 = arith.constant -3 : i32
    %76 = vector.broadcast %c-3_i32 : i32 to vector<1x256xi32>
    %77 = arith.cmpi sge, %45, %76 : vector<1x256xi32>
    %c12_i32 = arith.constant 12 : i32
    %78 = vector.broadcast %c12_i32 : i32 to vector<1x256xi32>
    %79 = arith.cmpi sle, %45, %78 : vector<1x256xi32>
    %80 = arith.andi %77, %79 : vector<1x256xi1>
    %cst_29 = arith.constant 0.000000e+00 : f32
    %81 = vector.broadcast %cst_29 : f32 to vector<1x256xf32>
    %82 = vector.extract_strided_slice %28 {offsets = [0, 0, 0], sizes = [2, 1, 256], strides = [1, 1, 1]} : vector<2x1x358xf32> to vector<2x1x256xf32>
    %c0_30 = arith.constant 0 : index
    %c0_31 = arith.constant 0 : index
    %83 = memref.load %arg4[%c0_30, %c0_31] : memref<2x49xf32, #tpu.memory_space<smem>>
    %84 = vector.extract_strided_slice %82 {offsets = [0, 0, 0], sizes = [1, 1, 256], strides = [1, 1, 1]} : vector<2x1x256xf32> to vector<1x1x256xf32>
    %85 = vector.shape_cast %84 : vector<1x1x256xf32> to vector<1x256xf32>
    %86 = vector.broadcast %83 : f32 to vector<1x256xf32>
    %87 = arith.mulf %86, %85 : vector<1x256xf32>
    %c1_32 = arith.constant 1 : index
    %c0_33 = arith.constant 0 : index
    %88 = memref.load %arg4[%c1_32, %c0_33] : memref<2x49xf32, #tpu.memory_space<smem>>
    %89 = vector.extract_strided_slice %82 {offsets = [1, 0, 0], sizes = [1, 1, 256], strides = [1, 1, 1]} : vector<2x1x256xf32> to vector<1x1x256xf32>
    %90 = vector.shape_cast %89 : vector<1x1x256xf32> to vector<1x256xf32>
    %91 = vector.broadcast %88 : f32 to vector<1x256xf32>
    %92 = arith.mulf %91, %90 : vector<1x256xf32>
    %93 = arith.addf %87, %92 : vector<1x256xf32>
    %cst_34 = arith.constant 0.000000e+00 : f32
    %94 = vector.broadcast %cst_34 : f32 to vector<1x256xf32>
    %95 = arith.select %50, %93, %94 : vector<1x256xi1>, vector<1x256xf32>
    %96 = arith.addf %81, %95 : vector<1x256xf32>
    %97 = vector.extract_strided_slice %28 {offsets = [0, 0, 1], sizes = [2, 1, 256], strides = [1, 1, 1]} : vector<2x1x358xf32> to vector<2x1x256xf32>
    %c0_35 = arith.constant 0 : index
    %c1_36 = arith.constant 1 : index
    %98 = memref.load %arg4[%c0_35, %c1_36] : memref<2x49xf32, #tpu.memory_space<smem>>
    %99 = vector.extract_strided_slice %97 {offsets = [0, 0, 0], sizes = [1, 1, 256], strides = [1, 1, 1]} : vector<2x1x256xf32> to vector<1x1x256xf32>
    %100 = vector.shape_cast %99 : vector<1x1x256xf32> to vector<1x256xf32>
    %101 = vector.broadcast %98 : f32 to vector<1x256xf32>
    %102 = arith.mulf %101, %100 : vector<1x256xf32>
    %c1_37 = arith.constant 1 : index
    %c1_38 = arith.constant 1 : index
    %103 = memref.load %arg4[%c1_37, %c1_38] : memref<2x49xf32, #tpu.memory_space<smem>>
    %104 = vector.extract_strided_slice %97 {offsets = [1, 0, 0], sizes = [1, 1, 256], strides = [1, 1, 1]} : vector<2x1x256xf32> to vector<1x1x256xf32>
    %105 = vector.shape_cast %104 : vector<1x1x256xf32> to vector<1x256xf32>
    %106 = vector.broadcast %103 : f32 to vector<1x256xf32>
    %107 = arith.mulf %106, %105 : vector<1x256xf32>
    %108 = arith.addf %102, %107 : vector<1x256xf32>
    %cst_39 = arith.constant 0.000000e+00 : f32
    %109 = vector.broadcast %cst_39 : f32 to vector<1x256xf32>
    %110 = arith.select %55, %108, %109 : vector<1x256xi1>, vector<1x256xf32>
    %111 = arith.addf %96, %110 : vector<1x256xf32>
    %112 = vector.extract_strided_slice %28 {offsets = [0, 0, 2], sizes = [2, 1, 256], strides = [1, 1, 1]} : vector<2x1x358xf32> to vector<2x1x256xf32>
    %c0_40 = arith.constant 0 : index
    %c2 = arith.constant 2 : index
    %113 = memref.load %arg4[%c0_40, %c2] : memref<2x49xf32, #tpu.memory_space<smem>>
    %114 = vector.extract_strided_slice %112 {offsets = [0, 0, 0], sizes = [1, 1, 256], strides = [1, 1, 1]} : vector<2x1x256xf32> to vector<1x1x256xf32>
    %115 = vector.shape_cast %114 : vector<1x1x256xf32> to vector<1x256xf32>
    %116 = vector.broadcast %113 : f32 to vector<1x256xf32>
    %117 = arith.mulf %116, %115 : vector<1x256xf32>
    %c1_41 = arith.constant 1 : index
    %c2_42 = arith.constant 2 : index
    %118 = memref.load %arg4[%c1_41, %c2_42] : memref<2x49xf32, #tpu.memory_space<smem>>
    %119 = vector.extract_strided_slice %112 {offsets = [1, 0, 0], sizes = [1, 1, 256], strides = [1, 1, 1]} : vector<2x1x256xf32> to vector<1x1x256xf32>
    %120 = vector.shape_cast %119 : vector<1x1x256xf32> to vector<1x256xf32>
    %121 = vector.broadcast %118 : f32 to vector<1x256xf32>
    %122 = arith.mulf %121, %120 : vector<1x256xf32>
    %123 = arith.addf %117, %122 : vector<1x256xf32>
    %cst_43 = arith.constant 0.000000e+00 : f32
    %124 = vector.broadcast %cst_43 : f32 to vector<1x256xf32>
    %125 = arith.select %60, %123, %124 : vector<1x256xi1>, vector<1x256xf32>
    %126 = arith.addf %111, %125 : vector<1x256xf32>
    %127 = vector.extract_strided_slice %28 {offsets = [0, 0, 3], sizes = [2, 1, 256], strides = [1, 1, 1]} : vector<2x1x358xf32> to vector<2x1x256xf32>
    %c0_44 = arith.constant 0 : index
    %c3 = arith.constant 3 : index
    %128 = memref.load %arg4[%c0_44, %c3] : memref<2x49xf32, #tpu.memory_space<smem>>
    %129 = vector.extract_strided_slice %127 {offsets = [0, 0, 0], sizes = [1, 1, 256], strides = [1, 1, 1]} : vector<2x1x256xf32> to vector<1x1x256xf32>
    %130 = vector.shape_cast %129 : vector<1x1x256xf32> to vector<1x256xf32>
    %131 = vector.broadcast %128 : f32 to vector<1x256xf32>
    %132 = arith.mulf %131, %130 : vector<1x256xf32>
    %c1_45 = arith.constant 1 : index
    %c3_46 = arith.constant 3 : index
    %133 = memref.load %arg4[%c1_45, %c3_46] : memref<2x49xf32, #tpu.memory_space<smem>>
    %134 = vector.extract_strided_slice %127 {offsets = [1, 0, 0], sizes = [1, 1, 256], strides = [1, 1, 1]} : vector<2x1x256xf32> to vector<1x1x256xf32>
    %135 = vector.shape_cast %134 : vector<1x1x256xf32> to vector<1x256xf32>
    %136 = vector.broadcast %133 : f32 to vector<1x256xf32>
    %137 = arith.mulf %136, %135 : vector<1x256xf32>
    %138 = arith.addf %132, %137 : vector<1x256xf32>
    %cst_47 = arith.constant 0.000000e+00 : f32
    %139 = vector.broadcast %cst_47 : f32 to vector<1x256xf32>
    %140 = arith.select %65, %138, %139 : vector<1x256xi1>, vector<1x256xf32>
    %141 = arith.addf %126, %140 : vector<1x256xf32>
    %142 = vector.extract_strided_slice %28 {offsets = [0, 0, 4], sizes = [2, 1, 256], strides = [1, 1, 1]} : vector<2x1x358xf32> to vector<2x1x256xf32>
    %c0_48 = arith.constant 0 : index
    %c4 = arith.constant 4 : index
    %143 = memref.load %arg4[%c0_48, %c4] : memref<2x49xf32, #tpu.memory_space<smem>>
    %144 = vector.extract_strided_slice %142 {offsets = [0, 0, 0], sizes = [1, 1, 256], strides = [1, 1, 1]} : vector<2x1x256xf32> to vector<1x1x256xf32>
    %145 = vector.shape_cast %144 : vector<1x1x256xf32> to vector<1x256xf32>
    %146 = vector.broadcast %143 : f32 to vector<1x256xf32>
    %147 = arith.mulf %146, %145 : vector<1x256xf32>
    %c1_49 = arith.constant 1 : index
    %c4_50 = arith.constant 4 : index
    %148 = memref.load %arg4[%c1_49, %c4_50] : memref<2x49xf32, #tpu.memory_space<smem>>
    %149 = vector.extract_strided_slice %142 {offsets = [1, 0, 0], sizes = [1, 1, 256], strides = [1, 1, 1]} : vector<2x1x256xf32> to vector<1x1x256xf32>
    %150 = vector.shape_cast %149 : vector<1x1x256xf32> to vector<1x256xf32>
    %151 = vector.broadcast %148 : f32 to vector<1x256xf32>
    %152 = arith.mulf %151, %150 : vector<1x256xf32>
    %153 = arith.addf %147, %152 : vector<1x256xf32>
    %cst_51 = arith.constant 0.000000e+00 : f32
    %154 = vector.broadcast %cst_51 : f32 to vector<1x256xf32>
    %155 = arith.select %70, %153, %154 : vector<1x256xi1>, vector<1x256xf32>
    %156 = arith.addf %141, %155 : vector<1x256xf32>
    %157 = vector.extract_strided_slice %28 {offsets = [0, 0, 5], sizes = [2, 1, 256], strides = [1, 1, 1]} : vector<2x1x358xf32> to vector<2x1x256xf32>
    %c0_52 = arith.constant 0 : index
    %c5 = arith.constant 5 : index
    %158 = memref.load %arg4[%c0_52, %c5] : memref<2x49xf32, #tpu.memory_space<smem>>
    %159 = vector.extract_strided_slice %157 {offsets = [0, 0, 0], sizes = [1, 1, 256], strides = [1, 1, 1]} : vector<2x1x256xf32> to vector<1x1x256xf32>
    %160 = vector.shape_cast %159 : vector<1x1x256xf32> to vector<1x256xf32>
    %161 = vector.broadcast %158 : f32 to vector<1x256xf32>
    %162 = arith.mulf %161, %160 : vector<1x256xf32>
    %c1_53 = arith.constant 1 : index
    %c5_54 = arith.constant 5 : index
    %163 = memref.load %arg4[%c1_53, %c5_54] : memref<2x49xf32, #tpu.memory_space<smem>>
    %164 = vector.extract_strided_slice %157 {offsets = [1, 0, 0], sizes = [1, 1, 256], strides = [1, 1, 1]} : vector<2x1x256xf32> to vector<1x1x256xf32>
    %165 = vector.shape_cast %164 : vector<1x1x256xf32> to vector<1x256xf32>
    %166 = vector.broadcast %163 : f32 to vector<1x256xf32>
    %167 = arith.mulf %166, %165 : vector<1x256xf32>
    %168 = arith.addf %162, %167 : vector<1x256xf32>
    %cst_55 = arith.constant 0.000000e+00 : f32
    %169 = vector.broadcast %cst_55 : f32 to vector<1x256xf32>
    %170 = arith.select %75, %168, %169 : vector<1x256xi1>, vector<1x256xf32>
    %171 = arith.addf %156, %170 : vector<1x256xf32>
    %172 = vector.extract_strided_slice %28 {offsets = [0, 0, 6], sizes = [2, 1, 256], strides = [1, 1, 1]} : vector<2x1x358xf32> to vector<2x1x256xf32>
    %c0_56 = arith.constant 0 : index
    %c6 = arith.constant 6 : index
    %173 = memref.load %arg4[%c0_56, %c6] : memref<2x49xf32, #tpu.memory_space<smem>>
    %174 = vector.extract_strided_slice %172 {offsets = [0, 0, 0], sizes = [1, 1, 256], strides = [1, 1, 1]} : vector<2x1x256xf32> to vector<1x1x256xf32>
    %175 = vector.shape_cast %174 : vector<1x1x256xf32> to vector<1x256xf32>
    %176 = vector.broadcast %173 : f32 to vector<1x256xf32>
    %177 = arith.mulf %176, %175 : vector<1x256xf32>
    %c1_57 = arith.constant 1 : index
    %c6_58 = arith.constant 6 : index
    %178 = memref.load %arg4[%c1_57, %c6_58] : memref<2x49xf32, #tpu.memory_space<smem>>
    %179 = vector.extract_strided_slice %172 {offsets = [1, 0, 0], sizes = [1, 1, 256], strides = [1, 1, 1]} : vector<2x1x256xf32> to vector<1x1x256xf32>
    %180 = vector.shape_cast %179 : vector<1x1x256xf32> to vector<1x256xf32>
    %181 = vector.broadcast %178 : f32 to vector<1x256xf32>
    %182 = arith.mulf %181, %180 : vector<1x256xf32>
    %183 = arith.addf %177, %182 : vector<1x256xf32>
    %cst_59 = arith.constant 0.000000e+00 : f32
    %184 = vector.broadcast %cst_59 : f32 to vector<1x256xf32>
    %185 = arith.select %80, %183, %184 : vector<1x256xi1>, vector<1x256xf32>
    %186 = arith.addf %171, %185 : vector<1x256xf32>
    %187 = vector.extract_strided_slice %28 {offsets = [0, 0, 16], sizes = [2, 1, 256], strides = [1, 1, 1]} : vector<2x1x358xf32> to vector<2x1x256xf32>
    %c0_60 = arith.constant 0 : index
    %c7 = arith.constant 7 : index
    %188 = memref.load %arg4[%c0_60, %c7] : memref<2x49xf32, #tpu.memory_space<smem>>
    %189 = vector.extract_strided_slice %187 {offsets = [0, 0, 0], sizes = [1, 1, 256], strides = [1, 1, 1]} : vector<2x1x256xf32> to vector<1x1x256xf32>
    %190 = vector.shape_cast %189 : vector<1x1x256xf32> to vector<1x256xf32>
    %191 = vector.broadcast %188 : f32 to vector<1x256xf32>
    %192 = arith.mulf %191, %190 : vector<1x256xf32>
    %c1_61 = arith.constant 1 : index
    %c7_62 = arith.constant 7 : index
    %193 = memref.load %arg4[%c1_61, %c7_62] : memref<2x49xf32, #tpu.memory_space<smem>>
    %194 = vector.extract_strided_slice %187 {offsets = [1, 0, 0], sizes = [1, 1, 256], strides = [1, 1, 1]} : vector<2x1x256xf32> to vector<1x1x256xf32>
    %195 = vector.shape_cast %194 : vector<1x1x256xf32> to vector<1x256xf32>
    %196 = vector.broadcast %193 : f32 to vector<1x256xf32>
    %197 = arith.mulf %196, %195 : vector<1x256xf32>
    %198 = arith.addf %192, %197 : vector<1x256xf32>
    %cst_63 = arith.constant 0.000000e+00 : f32
    %199 = vector.broadcast %cst_63 : f32 to vector<1x256xf32>
    %200 = arith.select %50, %198, %199 : vector<1x256xi1>, vector<1x256xf32>
    %201 = arith.addf %186, %200 : vector<1x256xf32>
    %202 = vector.extract_strided_slice %28 {offsets = [0, 0, 17], sizes = [2, 1, 256], strides = [1, 1, 1]} : vector<2x1x358xf32> to vector<2x1x256xf32>
    %c0_64 = arith.constant 0 : index
    %c8 = arith.constant 8 : index
    %203 = memref.load %arg4[%c0_64, %c8] : memref<2x49xf32, #tpu.memory_space<smem>>
    %204 = vector.extract_strided_slice %202 {offsets = [0, 0, 0], sizes = [1, 1, 256], strides = [1, 1, 1]} : vector<2x1x256xf32> to vector<1x1x256xf32>
    %205 = vector.shape_cast %204 : vector<1x1x256xf32> to vector<1x256xf32>
    %206 = vector.broadcast %203 : f32 to vector<1x256xf32>
    %207 = arith.mulf %206, %205 : vector<1x256xf32>
    %c1_65 = arith.constant 1 : index
    %c8_66 = arith.constant 8 : index
    %208 = memref.load %arg4[%c1_65, %c8_66] : memref<2x49xf32, #tpu.memory_space<smem>>
    %209 = vector.extract_strided_slice %202 {offsets = [1, 0, 0], sizes = [1, 1, 256], strides = [1, 1, 1]} : vector<2x1x256xf32> to vector<1x1x256xf32>
    %210 = vector.shape_cast %209 : vector<1x1x256xf32> to vector<1x256xf32>
    %211 = vector.broadcast %208 : f32 to vector<1x256xf32>
    %212 = arith.mulf %211, %210 : vector<1x256xf32>
    %213 = arith.addf %207, %212 : vector<1x256xf32>
    %cst_67 = arith.constant 0.000000e+00 : f32
    %214 = vector.broadcast %cst_67 : f32 to vector<1x256xf32>
    %215 = arith.select %55, %213, %214 : vector<1x256xi1>, vector<1x256xf32>
    %216 = arith.addf %201, %215 : vector<1x256xf32>
    %217 = vector.extract_strided_slice %28 {offsets = [0, 0, 18], sizes = [2, 1, 256], strides = [1, 1, 1]} : vector<2x1x358xf32> to vector<2x1x256xf32>
    %c0_68 = arith.constant 0 : index
    %c9 = arith.constant 9 : index
    %218 = memref.load %arg4[%c0_68, %c9] : memref<2x49xf32, #tpu.memory_space<smem>>
    %219 = vector.extract_strided_slice %217 {offsets = [0, 0, 0], sizes = [1, 1, 256], strides = [1, 1, 1]} : vector<2x1x256xf32> to vector<1x1x256xf32>
    %220 = vector.shape_cast %219 : vector<1x1x256xf32> to vector<1x256xf32>
    %221 = vector.broadcast %218 : f32 to vector<1x256xf32>
    %222 = arith.mulf %221, %220 : vector<1x256xf32>
    %c1_69 = arith.constant 1 : index
    %c9_70 = arith.constant 9 : index
    %223 = memref.load %arg4[%c1_69, %c9_70] : memref<2x49xf32, #tpu.memory_space<smem>>
    %224 = vector.extract_strided_slice %217 {offsets = [1, 0, 0], sizes = [1, 1, 256], strides = [1, 1, 1]} : vector<2x1x256xf32> to vector<1x1x256xf32>
    %225 = vector.shape_cast %224 : vector<1x1x256xf32> to vector<1x256xf32>
    %226 = vector.broadcast %223 : f32 to vector<1x256xf32>
    %227 = arith.mulf %226, %225 : vector<1x256xf32>
    %228 = arith.addf %222, %227 : vector<1x256xf32>
    %cst_71 = arith.constant 0.000000e+00 : f32
    %229 = vector.broadcast %cst_71 : f32 to vector<1x256xf32>
    %230 = arith.select %60, %228, %229 : vector<1x256xi1>, vector<1x256xf32>
    %231 = arith.addf %216, %230 : vector<1x256xf32>
    %232 = vector.extract_strided_slice %28 {offsets = [0, 0, 19], sizes = [2, 1, 256], strides = [1, 1, 1]} : vector<2x1x358xf32> to vector<2x1x256xf32>
    %c0_72 = arith.constant 0 : index
    %c10 = arith.constant 10 : index
    %233 = memref.load %arg4[%c0_72, %c10] : memref<2x49xf32, #tpu.memory_space<smem>>
    %234 = vector.extract_strided_slice %232 {offsets = [0, 0, 0], sizes = [1, 1, 256], strides = [1, 1, 1]} : vector<2x1x256xf32> to vector<1x1x256xf32>
    %235 = vector.shape_cast %234 : vector<1x1x256xf32> to vector<1x256xf32>
    %236 = vector.broadcast %233 : f32 to vector<1x256xf32>
    %237 = arith.mulf %236, %235 : vector<1x256xf32>
    %c1_73 = arith.constant 1 : index
    %c10_74 = arith.constant 10 : index
    %238 = memref.load %arg4[%c1_73, %c10_74] : memref<2x49xf32, #tpu.memory_space<smem>>
    %239 = vector.extract_strided_slice %232 {offsets = [1, 0, 0], sizes = [1, 1, 256], strides = [1, 1, 1]} : vector<2x1x256xf32> to vector<1x1x256xf32>
    %240 = vector.shape_cast %239 : vector<1x1x256xf32> to vector<1x256xf32>
    %241 = vector.broadcast %238 : f32 to vector<1x256xf32>
    %242 = arith.mulf %241, %240 : vector<1x256xf32>
    %243 = arith.addf %237, %242 : vector<1x256xf32>
    %cst_75 = arith.constant 0.000000e+00 : f32
    %244 = vector.broadcast %cst_75 : f32 to vector<1x256xf32>
    %245 = arith.select %65, %243, %244 : vector<1x256xi1>, vector<1x256xf32>
    %246 = arith.addf %231, %245 : vector<1x256xf32>
    %247 = vector.extract_strided_slice %28 {offsets = [0, 0, 20], sizes = [2, 1, 256], strides = [1, 1, 1]} : vector<2x1x358xf32> to vector<2x1x256xf32>
    %c0_76 = arith.constant 0 : index
    %c11 = arith.constant 11 : index
    %248 = memref.load %arg4[%c0_76, %c11] : memref<2x49xf32, #tpu.memory_space<smem>>
    %249 = vector.extract_strided_slice %247 {offsets = [0, 0, 0], sizes = [1, 1, 256], strides = [1, 1, 1]} : vector<2x1x256xf32> to vector<1x1x256xf32>
    %250 = vector.shape_cast %249 : vector<1x1x256xf32> to vector<1x256xf32>
    %251 = vector.broadcast %248 : f32 to vector<1x256xf32>
    %252 = arith.mulf %251, %250 : vector<1x256xf32>
    %c1_77 = arith.constant 1 : index
    %c11_78 = arith.constant 11 : index
    %253 = memref.load %arg4[%c1_77, %c11_78] : memref<2x49xf32, #tpu.memory_space<smem>>
    %254 = vector.extract_strided_slice %247 {offsets = [1, 0, 0], sizes = [1, 1, 256], strides = [1, 1, 1]} : vector<2x1x256xf32> to vector<1x1x256xf32>
    %255 = vector.shape_cast %254 : vector<1x1x256xf32> to vector<1x256xf32>
    %256 = vector.broadcast %253 : f32 to vector<1x256xf32>
    %257 = arith.mulf %256, %255 : vector<1x256xf32>
    %258 = arith.addf %252, %257 : vector<1x256xf32>
    %cst_79 = arith.constant 0.000000e+00 : f32
    %259 = vector.broadcast %cst_79 : f32 to vector<1x256xf32>
    %260 = arith.select %70, %258, %259 : vector<1x256xi1>, vector<1x256xf32>
    %261 = arith.addf %246, %260 : vector<1x256xf32>
    %262 = vector.extract_strided_slice %28 {offsets = [0, 0, 21], sizes = [2, 1, 256], strides = [1, 1, 1]} : vector<2x1x358xf32> to vector<2x1x256xf32>
    %c0_80 = arith.constant 0 : index
    %c12 = arith.constant 12 : index
    %263 = memref.load %arg4[%c0_80, %c12] : memref<2x49xf32, #tpu.memory_space<smem>>
    %264 = vector.extract_strided_slice %262 {offsets = [0, 0, 0], sizes = [1, 1, 256], strides = [1, 1, 1]} : vector<2x1x256xf32> to vector<1x1x256xf32>
    %265 = vector.shape_cast %264 : vector<1x1x256xf32> to vector<1x256xf32>
    %266 = vector.broadcast %263 : f32 to vector<1x256xf32>
    %267 = arith.mulf %266, %265 : vector<1x256xf32>
    %c1_81 = arith.constant 1 : index
    %c12_82 = arith.constant 12 : index
    %268 = memref.load %arg4[%c1_81, %c12_82] : memref<2x49xf32, #tpu.memory_space<smem>>
    %269 = vector.extract_strided_slice %262 {offsets = [1, 0, 0], sizes = [1, 1, 256], strides = [1, 1, 1]} : vector<2x1x256xf32> to vector<1x1x256xf32>
    %270 = vector.shape_cast %269 : vector<1x1x256xf32> to vector<1x256xf32>
    %271 = vector.broadcast %268 : f32 to vector<1x256xf32>
    %272 = arith.mulf %271, %270 : vector<1x256xf32>
    %273 = arith.addf %267, %272 : vector<1x256xf32>
    %cst_83 = arith.constant 0.000000e+00 : f32
    %274 = vector.broadcast %cst_83 : f32 to vector<1x256xf32>
    %275 = arith.select %75, %273, %274 : vector<1x256xi1>, vector<1x256xf32>
    %276 = arith.addf %261, %275 : vector<1x256xf32>
    %277 = vector.extract_strided_slice %28 {offsets = [0, 0, 22], sizes = [2, 1, 256], strides = [1, 1, 1]} : vector<2x1x358xf32> to vector<2x1x256xf32>
    %c0_84 = arith.constant 0 : index
    %c13 = arith.constant 13 : index
    %278 = memref.load %arg4[%c0_84, %c13] : memref<2x49xf32, #tpu.memory_space<smem>>
    %279 = vector.extract_strided_slice %277 {offsets = [0, 0, 0], sizes = [1, 1, 256], strides = [1, 1, 1]} : vector<2x1x256xf32> to vector<1x1x256xf32>
    %280 = vector.shape_cast %279 : vector<1x1x256xf32> to vector<1x256xf32>
    %281 = vector.broadcast %278 : f32 to vector<1x256xf32>
    %282 = arith.mulf %281, %280 : vector<1x256xf32>
    %c1_85 = arith.constant 1 : index
    %c13_86 = arith.constant 13 : index
    %283 = memref.load %arg4[%c1_85, %c13_86] : memref<2x49xf32, #tpu.memory_space<smem>>
    %284 = vector.extract_strided_slice %277 {offsets = [1, 0, 0], sizes = [1, 1, 256], strides = [1, 1, 1]} : vector<2x1x256xf32> to vector<1x1x256xf32>
    %285 = vector.shape_cast %284 : vector<1x1x256xf32> to vector<1x256xf32>
    %286 = vector.broadcast %283 : f32 to vector<1x256xf32>
    %287 = arith.mulf %286, %285 : vector<1x256xf32>
    %288 = arith.addf %282, %287 : vector<1x256xf32>
    %cst_87 = arith.constant 0.000000e+00 : f32
    %289 = vector.broadcast %cst_87 : f32 to vector<1x256xf32>
    %290 = arith.select %80, %288, %289 : vector<1x256xi1>, vector<1x256xf32>
    %291 = arith.addf %276, %290 : vector<1x256xf32>
    %292 = vector.extract_strided_slice %28 {offsets = [0, 0, 32], sizes = [2, 1, 256], strides = [1, 1, 1]} : vector<2x1x358xf32> to vector<2x1x256xf32>
    %c0_88 = arith.constant 0 : index
    %c14 = arith.constant 14 : index
    %293 = memref.load %arg4[%c0_88, %c14] : memref<2x49xf32, #tpu.memory_space<smem>>
    %294 = vector.extract_strided_slice %292 {offsets = [0, 0, 0], sizes = [1, 1, 256], strides = [1, 1, 1]} : vector<2x1x256xf32> to vector<1x1x256xf32>
    %295 = vector.shape_cast %294 : vector<1x1x256xf32> to vector<1x256xf32>
    %296 = vector.broadcast %293 : f32 to vector<1x256xf32>
    %297 = arith.mulf %296, %295 : vector<1x256xf32>
    %c1_89 = arith.constant 1 : index
    %c14_90 = arith.constant 14 : index
    %298 = memref.load %arg4[%c1_89, %c14_90] : memref<2x49xf32, #tpu.memory_space<smem>>
    %299 = vector.extract_strided_slice %292 {offsets = [1, 0, 0], sizes = [1, 1, 256], strides = [1, 1, 1]} : vector<2x1x256xf32> to vector<1x1x256xf32>
    %300 = vector.shape_cast %299 : vector<1x1x256xf32> to vector<1x256xf32>
    %301 = vector.broadcast %298 : f32 to vector<1x256xf32>
    %302 = arith.mulf %301, %300 : vector<1x256xf32>
    %303 = arith.addf %297, %302 : vector<1x256xf32>
    %cst_91 = arith.constant 0.000000e+00 : f32
    %304 = vector.broadcast %cst_91 : f32 to vector<1x256xf32>
    %305 = arith.select %50, %303, %304 : vector<1x256xi1>, vector<1x256xf32>
    %306 = arith.addf %291, %305 : vector<1x256xf32>
    %307 = vector.extract_strided_slice %28 {offsets = [0, 0, 33], sizes = [2, 1, 256], strides = [1, 1, 1]} : vector<2x1x358xf32> to vector<2x1x256xf32>
    %c0_92 = arith.constant 0 : index
    %c15 = arith.constant 15 : index
    %308 = memref.load %arg4[%c0_92, %c15] : memref<2x49xf32, #tpu.memory_space<smem>>
    %309 = vector.extract_strided_slice %307 {offsets = [0, 0, 0], sizes = [1, 1, 256], strides = [1, 1, 1]} : vector<2x1x256xf32> to vector<1x1x256xf32>
    %310 = vector.shape_cast %309 : vector<1x1x256xf32> to vector<1x256xf32>
    %311 = vector.broadcast %308 : f32 to vector<1x256xf32>
    %312 = arith.mulf %311, %310 : vector<1x256xf32>
    %c1_93 = arith.constant 1 : index
    %c15_94 = arith.constant 15 : index
    %313 = memref.load %arg4[%c1_93, %c15_94] : memref<2x49xf32, #tpu.memory_space<smem>>
    %314 = vector.extract_strided_slice %307 {offsets = [1, 0, 0], sizes = [1, 1, 256], strides = [1, 1, 1]} : vector<2x1x256xf32> to vector<1x1x256xf32>
    %315 = vector.shape_cast %314 : vector<1x1x256xf32> to vector<1x256xf32>
    %316 = vector.broadcast %313 : f32 to vector<1x256xf32>
    %317 = arith.mulf %316, %315 : vector<1x256xf32>
    %318 = arith.addf %312, %317 : vector<1x256xf32>
    %cst_95 = arith.constant 0.000000e+00 : f32
    %319 = vector.broadcast %cst_95 : f32 to vector<1x256xf32>
    %320 = arith.select %55, %318, %319 : vector<1x256xi1>, vector<1x256xf32>
    %321 = arith.addf %306, %320 : vector<1x256xf32>
    %322 = vector.extract_strided_slice %28 {offsets = [0, 0, 34], sizes = [2, 1, 256], strides = [1, 1, 1]} : vector<2x1x358xf32> to vector<2x1x256xf32>
    %c0_96 = arith.constant 0 : index
    %c16 = arith.constant 16 : index
    %323 = memref.load %arg4[%c0_96, %c16] : memref<2x49xf32, #tpu.memory_space<smem>>
    %324 = vector.extract_strided_slice %322 {offsets = [0, 0, 0], sizes = [1, 1, 256], strides = [1, 1, 1]} : vector<2x1x256xf32> to vector<1x1x256xf32>
    %325 = vector.shape_cast %324 : vector<1x1x256xf32> to vector<1x256xf32>
    %326 = vector.broadcast %323 : f32 to vector<1x256xf32>
    %327 = arith.mulf %326, %325 : vector<1x256xf32>
    %c1_97 = arith.constant 1 : index
    %c16_98 = arith.constant 16 : index
    %328 = memref.load %arg4[%c1_97, %c16_98] : memref<2x49xf32, #tpu.memory_space<smem>>
    %329 = vector.extract_strided_slice %322 {offsets = [1, 0, 0], sizes = [1, 1, 256], strides = [1, 1, 1]} : vector<2x1x256xf32> to vector<1x1x256xf32>
    %330 = vector.shape_cast %329 : vector<1x1x256xf32> to vector<1x256xf32>
    %331 = vector.broadcast %328 : f32 to vector<1x256xf32>
    %332 = arith.mulf %331, %330 : vector<1x256xf32>
    %333 = arith.addf %327, %332 : vector<1x256xf32>
    %cst_99 = arith.constant 0.000000e+00 : f32
    %334 = vector.broadcast %cst_99 : f32 to vector<1x256xf32>
    %335 = arith.select %60, %333, %334 : vector<1x256xi1>, vector<1x256xf32>
    %336 = arith.addf %321, %335 : vector<1x256xf32>
    %337 = vector.extract_strided_slice %28 {offsets = [0, 0, 35], sizes = [2, 1, 256], strides = [1, 1, 1]} : vector<2x1x358xf32> to vector<2x1x256xf32>
    %c0_100 = arith.constant 0 : index
    %c17 = arith.constant 17 : index
    %338 = memref.load %arg4[%c0_100, %c17] : memref<2x49xf32, #tpu.memory_space<smem>>
    %339 = vector.extract_strided_slice %337 {offsets = [0, 0, 0], sizes = [1, 1, 256], strides = [1, 1, 1]} : vector<2x1x256xf32> to vector<1x1x256xf32>
    %340 = vector.shape_cast %339 : vector<1x1x256xf32> to vector<1x256xf32>
    %341 = vector.broadcast %338 : f32 to vector<1x256xf32>
    %342 = arith.mulf %341, %340 : vector<1x256xf32>
    %c1_101 = arith.constant 1 : index
    %c17_102 = arith.constant 17 : index
    %343 = memref.load %arg4[%c1_101, %c17_102] : memref<2x49xf32, #tpu.memory_space<smem>>
    %344 = vector.extract_strided_slice %337 {offsets = [1, 0, 0], sizes = [1, 1, 256], strides = [1, 1, 1]} : vector<2x1x256xf32> to vector<1x1x256xf32>
    %345 = vector.shape_cast %344 : vector<1x1x256xf32> to vector<1x256xf32>
    %346 = vector.broadcast %343 : f32 to vector<1x256xf32>
    %347 = arith.mulf %346, %345 : vector<1x256xf32>
    %348 = arith.addf %342, %347 : vector<1x256xf32>
    %cst_103 = arith.constant 0.000000e+00 : f32
    %349 = vector.broadcast %cst_103 : f32 to vector<1x256xf32>
    %350 = arith.select %65, %348, %349 : vector<1x256xi1>, vector<1x256xf32>
    %351 = arith.addf %336, %350 : vector<1x256xf32>
    %352 = vector.extract_strided_slice %28 {offsets = [0, 0, 36], sizes = [2, 1, 256], strides = [1, 1, 1]} : vector<2x1x358xf32> to vector<2x1x256xf32>
    %c0_104 = arith.constant 0 : index
    %c18 = arith.constant 18 : index
    %353 = memref.load %arg4[%c0_104, %c18] : memref<2x49xf32, #tpu.memory_space<smem>>
    %354 = vector.extract_strided_slice %352 {offsets = [0, 0, 0], sizes = [1, 1, 256], strides = [1, 1, 1]} : vector<2x1x256xf32> to vector<1x1x256xf32>
    %355 = vector.shape_cast %354 : vector<1x1x256xf32> to vector<1x256xf32>
    %356 = vector.broadcast %353 : f32 to vector<1x256xf32>
    %357 = arith.mulf %356, %355 : vector<1x256xf32>
    %c1_105 = arith.constant 1 : index
    %c18_106 = arith.constant 18 : index
    %358 = memref.load %arg4[%c1_105, %c18_106] : memref<2x49xf32, #tpu.memory_space<smem>>
    %359 = vector.extract_strided_slice %352 {offsets = [1, 0, 0], sizes = [1, 1, 256], strides = [1, 1, 1]} : vector<2x1x256xf32> to vector<1x1x256xf32>
    %360 = vector.shape_cast %359 : vector<1x1x256xf32> to vector<1x256xf32>
    %361 = vector.broadcast %358 : f32 to vector<1x256xf32>
    %362 = arith.mulf %361, %360 : vector<1x256xf32>
    %363 = arith.addf %357, %362 : vector<1x256xf32>
    %cst_107 = arith.constant 0.000000e+00 : f32
    %364 = vector.broadcast %cst_107 : f32 to vector<1x256xf32>
    %365 = arith.select %70, %363, %364 : vector<1x256xi1>, vector<1x256xf32>
    %366 = arith.addf %351, %365 : vector<1x256xf32>
    %367 = vector.extract_strided_slice %28 {offsets = [0, 0, 37], sizes = [2, 1, 256], strides = [1, 1, 1]} : vector<2x1x358xf32> to vector<2x1x256xf32>
    %c0_108 = arith.constant 0 : index
    %c19 = arith.constant 19 : index
    %368 = memref.load %arg4[%c0_108, %c19] : memref<2x49xf32, #tpu.memory_space<smem>>
    %369 = vector.extract_strided_slice %367 {offsets = [0, 0, 0], sizes = [1, 1, 256], strides = [1, 1, 1]} : vector<2x1x256xf32> to vector<1x1x256xf32>
    %370 = vector.shape_cast %369 : vector<1x1x256xf32> to vector<1x256xf32>
    %371 = vector.broadcast %368 : f32 to vector<1x256xf32>
    %372 = arith.mulf %371, %370 : vector<1x256xf32>
    %c1_109 = arith.constant 1 : index
    %c19_110 = arith.constant 19 : index
    %373 = memref.load %arg4[%c1_109, %c19_110] : memref<2x49xf32, #tpu.memory_space<smem>>
    %374 = vector.extract_strided_slice %367 {offsets = [1, 0, 0], sizes = [1, 1, 256], strides = [1, 1, 1]} : vector<2x1x256xf32> to vector<1x1x256xf32>
    %375 = vector.shape_cast %374 : vector<1x1x256xf32> to vector<1x256xf32>
    %376 = vector.broadcast %373 : f32 to vector<1x256xf32>
    %377 = arith.mulf %376, %375 : vector<1x256xf32>
    %378 = arith.addf %372, %377 : vector<1x256xf32>
    %cst_111 = arith.constant 0.000000e+00 : f32
    %379 = vector.broadcast %cst_111 : f32 to vector<1x256xf32>
    %380 = arith.select %75, %378, %379 : vector<1x256xi1>, vector<1x256xf32>
    %381 = arith.addf %366, %380 : vector<1x256xf32>
    %382 = vector.extract_strided_slice %28 {offsets = [0, 0, 38], sizes = [2, 1, 256], strides = [1, 1, 1]} : vector<2x1x358xf32> to vector<2x1x256xf32>
    %c0_112 = arith.constant 0 : index
    %c20 = arith.constant 20 : index
    %383 = memref.load %arg4[%c0_112, %c20] : memref<2x49xf32, #tpu.memory_space<smem>>
    %384 = vector.extract_strided_slice %382 {offsets = [0, 0, 0], sizes = [1, 1, 256], strides = [1, 1, 1]} : vector<2x1x256xf32> to vector<1x1x256xf32>
    %385 = vector.shape_cast %384 : vector<1x1x256xf32> to vector<1x256xf32>
    %386 = vector.broadcast %383 : f32 to vector<1x256xf32>
    %387 = arith.mulf %386, %385 : vector<1x256xf32>
    %c1_113 = arith.constant 1 : index
    %c20_114 = arith.constant 20 : index
    %388 = memref.load %arg4[%c1_113, %c20_114] : memref<2x49xf32, #tpu.memory_space<smem>>
    %389 = vector.extract_strided_slice %382 {offsets = [1, 0, 0], sizes = [1, 1, 256], strides = [1, 1, 1]} : vector<2x1x256xf32> to vector<1x1x256xf32>
    %390 = vector.shape_cast %389 : vector<1x1x256xf32> to vector<1x256xf32>
    %391 = vector.broadcast %388 : f32 to vector<1x256xf32>
    %392 = arith.mulf %391, %390 : vector<1x256xf32>
    %393 = arith.addf %387, %392 : vector<1x256xf32>
    %cst_115 = arith.constant 0.000000e+00 : f32
    %394 = vector.broadcast %cst_115 : f32 to vector<1x256xf32>
    %395 = arith.select %80, %393, %394 : vector<1x256xi1>, vector<1x256xf32>
    %396 = arith.addf %381, %395 : vector<1x256xf32>
    %397 = vector.extract_strided_slice %28 {offsets = [0, 0, 48], sizes = [2, 1, 256], strides = [1, 1, 1]} : vector<2x1x358xf32> to vector<2x1x256xf32>
    %c0_116 = arith.constant 0 : index
    %c21 = arith.constant 21 : index
    %398 = memref.load %arg4[%c0_116, %c21] : memref<2x49xf32, #tpu.memory_space<smem>>
    %399 = vector.extract_strided_slice %397 {offsets = [0, 0, 0], sizes = [1, 1, 256], strides = [1, 1, 1]} : vector<2x1x256xf32> to vector<1x1x256xf32>
    %400 = vector.shape_cast %399 : vector<1x1x256xf32> to vector<1x256xf32>
    %401 = vector.broadcast %398 : f32 to vector<1x256xf32>
    %402 = arith.mulf %401, %400 : vector<1x256xf32>
    %c1_117 = arith.constant 1 : index
    %c21_118 = arith.constant 21 : index
    %403 = memref.load %arg4[%c1_117, %c21_118] : memref<2x49xf32, #tpu.memory_space<smem>>
    %404 = vector.extract_strided_slice %397 {offsets = [1, 0, 0], sizes = [1, 1, 256], strides = [1, 1, 1]} : vector<2x1x256xf32> to vector<1x1x256xf32>
    %405 = vector.shape_cast %404 : vector<1x1x256xf32> to vector<1x256xf32>
    %406 = vector.broadcast %403 : f32 to vector<1x256xf32>
    %407 = arith.mulf %406, %405 : vector<1x256xf32>
    %408 = arith.addf %402, %407 : vector<1x256xf32>
    %cst_119 = arith.constant 0.000000e+00 : f32
    %409 = vector.broadcast %cst_119 : f32 to vector<1x256xf32>
    %410 = arith.select %50, %408, %409 : vector<1x256xi1>, vector<1x256xf32>
    %411 = arith.addf %396, %410 : vector<1x256xf32>
    %412 = vector.extract_strided_slice %28 {offsets = [0, 0, 49], sizes = [2, 1, 256], strides = [1, 1, 1]} : vector<2x1x358xf32> to vector<2x1x256xf32>
    %c0_120 = arith.constant 0 : index
    %c22 = arith.constant 22 : index
    %413 = memref.load %arg4[%c0_120, %c22] : memref<2x49xf32, #tpu.memory_space<smem>>
    %414 = vector.extract_strided_slice %412 {offsets = [0, 0, 0], sizes = [1, 1, 256], strides = [1, 1, 1]} : vector<2x1x256xf32> to vector<1x1x256xf32>
    %415 = vector.shape_cast %414 : vector<1x1x256xf32> to vector<1x256xf32>
    %416 = vector.broadcast %413 : f32 to vector<1x256xf32>
    %417 = arith.mulf %416, %415 : vector<1x256xf32>
    %c1_121 = arith.constant 1 : index
    %c22_122 = arith.constant 22 : index
    %418 = memref.load %arg4[%c1_121, %c22_122] : memref<2x49xf32, #tpu.memory_space<smem>>
    %419 = vector.extract_strided_slice %412 {offsets = [1, 0, 0], sizes = [1, 1, 256], strides = [1, 1, 1]} : vector<2x1x256xf32> to vector<1x1x256xf32>
    %420 = vector.shape_cast %419 : vector<1x1x256xf32> to vector<1x256xf32>
    %421 = vector.broadcast %418 : f32 to vector<1x256xf32>
    %422 = arith.mulf %421, %420 : vector<1x256xf32>
    %423 = arith.addf %417, %422 : vector<1x256xf32>
    %cst_123 = arith.constant 0.000000e+00 : f32
    %424 = vector.broadcast %cst_123 : f32 to vector<1x256xf32>
    %425 = arith.select %55, %423, %424 : vector<1x256xi1>, vector<1x256xf32>
    %426 = arith.addf %411, %425 : vector<1x256xf32>
    %427 = vector.extract_strided_slice %28 {offsets = [0, 0, 50], sizes = [2, 1, 256], strides = [1, 1, 1]} : vector<2x1x358xf32> to vector<2x1x256xf32>
    %c0_124 = arith.constant 0 : index
    %c23 = arith.constant 23 : index
    %428 = memref.load %arg4[%c0_124, %c23] : memref<2x49xf32, #tpu.memory_space<smem>>
    %429 = vector.extract_strided_slice %427 {offsets = [0, 0, 0], sizes = [1, 1, 256], strides = [1, 1, 1]} : vector<2x1x256xf32> to vector<1x1x256xf32>
    %430 = vector.shape_cast %429 : vector<1x1x256xf32> to vector<1x256xf32>
    %431 = vector.broadcast %428 : f32 to vector<1x256xf32>
    %432 = arith.mulf %431, %430 : vector<1x256xf32>
    %c1_125 = arith.constant 1 : index
    %c23_126 = arith.constant 23 : index
    %433 = memref.load %arg4[%c1_125, %c23_126] : memref<2x49xf32, #tpu.memory_space<smem>>
    %434 = vector.extract_strided_slice %427 {offsets = [1, 0, 0], sizes = [1, 1, 256], strides = [1, 1, 1]} : vector<2x1x256xf32> to vector<1x1x256xf32>
    %435 = vector.shape_cast %434 : vector<1x1x256xf32> to vector<1x256xf32>
    %436 = vector.broadcast %433 : f32 to vector<1x256xf32>
    %437 = arith.mulf %436, %435 : vector<1x256xf32>
    %438 = arith.addf %432, %437 : vector<1x256xf32>
    %cst_127 = arith.constant 0.000000e+00 : f32
    %439 = vector.broadcast %cst_127 : f32 to vector<1x256xf32>
    %440 = arith.select %60, %438, %439 : vector<1x256xi1>, vector<1x256xf32>
    %441 = arith.addf %426, %440 : vector<1x256xf32>
    %442 = vector.extract_strided_slice %28 {offsets = [0, 0, 51], sizes = [2, 1, 256], strides = [1, 1, 1]} : vector<2x1x358xf32> to vector<2x1x256xf32>
    %c0_128 = arith.constant 0 : index
    %c24 = arith.constant 24 : index
    %443 = memref.load %arg4[%c0_128, %c24] : memref<2x49xf32, #tpu.memory_space<smem>>
    %444 = vector.extract_strided_slice %442 {offsets = [0, 0, 0], sizes = [1, 1, 256], strides = [1, 1, 1]} : vector<2x1x256xf32> to vector<1x1x256xf32>
    %445 = vector.shape_cast %444 : vector<1x1x256xf32> to vector<1x256xf32>
    %446 = vector.broadcast %443 : f32 to vector<1x256xf32>
    %447 = arith.mulf %446, %445 : vector<1x256xf32>
    %c1_129 = arith.constant 1 : index
    %c24_130 = arith.constant 24 : index
    %448 = memref.load %arg4[%c1_129, %c24_130] : memref<2x49xf32, #tpu.memory_space<smem>>
    %449 = vector.extract_strided_slice %442 {offsets = [1, 0, 0], sizes = [1, 1, 256], strides = [1, 1, 1]} : vector<2x1x256xf32> to vector<1x1x256xf32>
    %450 = vector.shape_cast %449 : vector<1x1x256xf32> to vector<1x256xf32>
    %451 = vector.broadcast %448 : f32 to vector<1x256xf32>
    %452 = arith.mulf %451, %450 : vector<1x256xf32>
    %453 = arith.addf %447, %452 : vector<1x256xf32>
    %cst_131 = arith.constant 0.000000e+00 : f32
    %454 = vector.broadcast %cst_131 : f32 to vector<1x256xf32>
    %455 = arith.select %65, %453, %454 : vector<1x256xi1>, vector<1x256xf32>
    %456 = arith.addf %441, %455 : vector<1x256xf32>
    %457 = vector.extract_strided_slice %28 {offsets = [0, 0, 52], sizes = [2, 1, 256], strides = [1, 1, 1]} : vector<2x1x358xf32> to vector<2x1x256xf32>
    %c0_132 = arith.constant 0 : index
    %c25 = arith.constant 25 : index
    %458 = memref.load %arg4[%c0_132, %c25] : memref<2x49xf32, #tpu.memory_space<smem>>
    %459 = vector.extract_strided_slice %457 {offsets = [0, 0, 0], sizes = [1, 1, 256], strides = [1, 1, 1]} : vector<2x1x256xf32> to vector<1x1x256xf32>
    %460 = vector.shape_cast %459 : vector<1x1x256xf32> to vector<1x256xf32>
    %461 = vector.broadcast %458 : f32 to vector<1x256xf32>
    %462 = arith.mulf %461, %460 : vector<1x256xf32>
    %c1_133 = arith.constant 1 : index
    %c25_134 = arith.constant 25 : index
    %463 = memref.load %arg4[%c1_133, %c25_134] : memref<2x49xf32, #tpu.memory_space<smem>>
    %464 = vector.extract_strided_slice %457 {offsets = [1, 0, 0], sizes = [1, 1, 256], strides = [1, 1, 1]} : vector<2x1x256xf32> to vector<1x1x256xf32>
    %465 = vector.shape_cast %464 : vector<1x1x256xf32> to vector<1x256xf32>
    %466 = vector.broadcast %463 : f32 to vector<1x256xf32>
    %467 = arith.mulf %466, %465 : vector<1x256xf32>
    %468 = arith.addf %462, %467 : vector<1x256xf32>
    %cst_135 = arith.constant 0.000000e+00 : f32
    %469 = vector.broadcast %cst_135 : f32 to vector<1x256xf32>
    %470 = arith.select %70, %468, %469 : vector<1x256xi1>, vector<1x256xf32>
    %471 = arith.addf %456, %470 : vector<1x256xf32>
    %472 = vector.extract_strided_slice %28 {offsets = [0, 0, 53], sizes = [2, 1, 256], strides = [1, 1, 1]} : vector<2x1x358xf32> to vector<2x1x256xf32>
    %c0_136 = arith.constant 0 : index
    %c26 = arith.constant 26 : index
    %473 = memref.load %arg4[%c0_136, %c26] : memref<2x49xf32, #tpu.memory_space<smem>>
    %474 = vector.extract_strided_slice %472 {offsets = [0, 0, 0], sizes = [1, 1, 256], strides = [1, 1, 1]} : vector<2x1x256xf32> to vector<1x1x256xf32>
    %475 = vector.shape_cast %474 : vector<1x1x256xf32> to vector<1x256xf32>
    %476 = vector.broadcast %473 : f32 to vector<1x256xf32>
    %477 = arith.mulf %476, %475 : vector<1x256xf32>
    %c1_137 = arith.constant 1 : index
    %c26_138 = arith.constant 26 : index
    %478 = memref.load %arg4[%c1_137, %c26_138] : memref<2x49xf32, #tpu.memory_space<smem>>
    %479 = vector.extract_strided_slice %472 {offsets = [1, 0, 0], sizes = [1, 1, 256], strides = [1, 1, 1]} : vector<2x1x256xf32> to vector<1x1x256xf32>
    %480 = vector.shape_cast %479 : vector<1x1x256xf32> to vector<1x256xf32>
    %481 = vector.broadcast %478 : f32 to vector<1x256xf32>
    %482 = arith.mulf %481, %480 : vector<1x256xf32>
    %483 = arith.addf %477, %482 : vector<1x256xf32>
    %cst_139 = arith.constant 0.000000e+00 : f32
    %484 = vector.broadcast %cst_139 : f32 to vector<1x256xf32>
    %485 = arith.select %75, %483, %484 : vector<1x256xi1>, vector<1x256xf32>
    %486 = arith.addf %471, %485 : vector<1x256xf32>
    %487 = vector.extract_strided_slice %28 {offsets = [0, 0, 54], sizes = [2, 1, 256], strides = [1, 1, 1]} : vector<2x1x358xf32> to vector<2x1x256xf32>
    %c0_140 = arith.constant 0 : index
    %c27 = arith.constant 27 : index
    %488 = memref.load %arg4[%c0_140, %c27] : memref<2x49xf32, #tpu.memory_space<smem>>
    %489 = vector.extract_strided_slice %487 {offsets = [0, 0, 0], sizes = [1, 1, 256], strides = [1, 1, 1]} : vector<2x1x256xf32> to vector<1x1x256xf32>
    %490 = vector.shape_cast %489 : vector<1x1x256xf32> to vector<1x256xf32>
    %491 = vector.broadcast %488 : f32 to vector<1x256xf32>
    %492 = arith.mulf %491, %490 : vector<1x256xf32>
    %c1_141 = arith.constant 1 : index
    %c27_142 = arith.constant 27 : index
    %493 = memref.load %arg4[%c1_141, %c27_142] : memref<2x49xf32, #tpu.memory_space<smem>>
    %494 = vector.extract_strided_slice %487 {offsets = [1, 0, 0], sizes = [1, 1, 256], strides = [1, 1, 1]} : vector<2x1x256xf32> to vector<1x1x256xf32>
    %495 = vector.shape_cast %494 : vector<1x1x256xf32> to vector<1x256xf32>
    %496 = vector.broadcast %493 : f32 to vector<1x256xf32>
    %497 = arith.mulf %496, %495 : vector<1x256xf32>
    %498 = arith.addf %492, %497 : vector<1x256xf32>
    %cst_143 = arith.constant 0.000000e+00 : f32
    %499 = vector.broadcast %cst_143 : f32 to vector<1x256xf32>
    %500 = arith.select %80, %498, %499 : vector<1x256xi1>, vector<1x256xf32>
    %501 = arith.addf %486, %500 : vector<1x256xf32>
    %502 = vector.extract_strided_slice %28 {offsets = [0, 0, 64], sizes = [2, 1, 256], strides = [1, 1, 1]} : vector<2x1x358xf32> to vector<2x1x256xf32>
    %c0_144 = arith.constant 0 : index
    %c28 = arith.constant 28 : index
    %503 = memref.load %arg4[%c0_144, %c28] : memref<2x49xf32, #tpu.memory_space<smem>>
    %504 = vector.extract_strided_slice %502 {offsets = [0, 0, 0], sizes = [1, 1, 256], strides = [1, 1, 1]} : vector<2x1x256xf32> to vector<1x1x256xf32>
    %505 = vector.shape_cast %504 : vector<1x1x256xf32> to vector<1x256xf32>
    %506 = vector.broadcast %503 : f32 to vector<1x256xf32>
    %507 = arith.mulf %506, %505 : vector<1x256xf32>
    %c1_145 = arith.constant 1 : index
    %c28_146 = arith.constant 28 : index
    %508 = memref.load %arg4[%c1_145, %c28_146] : memref<2x49xf32, #tpu.memory_space<smem>>
    %509 = vector.extract_strided_slice %502 {offsets = [1, 0, 0], sizes = [1, 1, 256], strides = [1, 1, 1]} : vector<2x1x256xf32> to vector<1x1x256xf32>
    %510 = vector.shape_cast %509 : vector<1x1x256xf32> to vector<1x256xf32>
    %511 = vector.broadcast %508 : f32 to vector<1x256xf32>
    %512 = arith.mulf %511, %510 : vector<1x256xf32>
    %513 = arith.addf %507, %512 : vector<1x256xf32>
    %cst_147 = arith.constant 0.000000e+00 : f32
    %514 = vector.broadcast %cst_147 : f32 to vector<1x256xf32>
    %515 = arith.select %50, %513, %514 : vector<1x256xi1>, vector<1x256xf32>
    %516 = arith.addf %501, %515 : vector<1x256xf32>
    %517 = vector.extract_strided_slice %28 {offsets = [0, 0, 65], sizes = [2, 1, 256], strides = [1, 1, 1]} : vector<2x1x358xf32> to vector<2x1x256xf32>
    %c0_148 = arith.constant 0 : index
    %c29 = arith.constant 29 : index
    %518 = memref.load %arg4[%c0_148, %c29] : memref<2x49xf32, #tpu.memory_space<smem>>
    %519 = vector.extract_strided_slice %517 {offsets = [0, 0, 0], sizes = [1, 1, 256], strides = [1, 1, 1]} : vector<2x1x256xf32> to vector<1x1x256xf32>
    %520 = vector.shape_cast %519 : vector<1x1x256xf32> to vector<1x256xf32>
    %521 = vector.broadcast %518 : f32 to vector<1x256xf32>
    %522 = arith.mulf %521, %520 : vector<1x256xf32>
    %c1_149 = arith.constant 1 : index
    %c29_150 = arith.constant 29 : index
    %523 = memref.load %arg4[%c1_149, %c29_150] : memref<2x49xf32, #tpu.memory_space<smem>>
    %524 = vector.extract_strided_slice %517 {offsets = [1, 0, 0], sizes = [1, 1, 256], strides = [1, 1, 1]} : vector<2x1x256xf32> to vector<1x1x256xf32>
    %525 = vector.shape_cast %524 : vector<1x1x256xf32> to vector<1x256xf32>
    %526 = vector.broadcast %523 : f32 to vector<1x256xf32>
    %527 = arith.mulf %526, %525 : vector<1x256xf32>
    %528 = arith.addf %522, %527 : vector<1x256xf32>
    %cst_151 = arith.constant 0.000000e+00 : f32
    %529 = vector.broadcast %cst_151 : f32 to vector<1x256xf32>
    %530 = arith.select %55, %528, %529 : vector<1x256xi1>, vector<1x256xf32>
    %531 = arith.addf %516, %530 : vector<1x256xf32>
    %532 = vector.extract_strided_slice %28 {offsets = [0, 0, 66], sizes = [2, 1, 256], strides = [1, 1, 1]} : vector<2x1x358xf32> to vector<2x1x256xf32>
    %c0_152 = arith.constant 0 : index
    %c30 = arith.constant 30 : index
    %533 = memref.load %arg4[%c0_152, %c30] : memref<2x49xf32, #tpu.memory_space<smem>>
    %534 = vector.extract_strided_slice %532 {offsets = [0, 0, 0], sizes = [1, 1, 256], strides = [1, 1, 1]} : vector<2x1x256xf32> to vector<1x1x256xf32>
    %535 = vector.shape_cast %534 : vector<1x1x256xf32> to vector<1x256xf32>
    %536 = vector.broadcast %533 : f32 to vector<1x256xf32>
    %537 = arith.mulf %536, %535 : vector<1x256xf32>
    %c1_153 = arith.constant 1 : index
    %c30_154 = arith.constant 30 : index
    %538 = memref.load %arg4[%c1_153, %c30_154] : memref<2x49xf32, #tpu.memory_space<smem>>
    %539 = vector.extract_strided_slice %532 {offsets = [1, 0, 0], sizes = [1, 1, 256], strides = [1, 1, 1]} : vector<2x1x256xf32> to vector<1x1x256xf32>
    %540 = vector.shape_cast %539 : vector<1x1x256xf32> to vector<1x256xf32>
    %541 = vector.broadcast %538 : f32 to vector<1x256xf32>
    %542 = arith.mulf %541, %540 : vector<1x256xf32>
    %543 = arith.addf %537, %542 : vector<1x256xf32>
    %cst_155 = arith.constant 0.000000e+00 : f32
    %544 = vector.broadcast %cst_155 : f32 to vector<1x256xf32>
    %545 = arith.select %60, %543, %544 : vector<1x256xi1>, vector<1x256xf32>
    %546 = arith.addf %531, %545 : vector<1x256xf32>
    %547 = vector.extract_strided_slice %28 {offsets = [0, 0, 67], sizes = [2, 1, 256], strides = [1, 1, 1]} : vector<2x1x358xf32> to vector<2x1x256xf32>
    %c0_156 = arith.constant 0 : index
    %c31 = arith.constant 31 : index
    %548 = memref.load %arg4[%c0_156, %c31] : memref<2x49xf32, #tpu.memory_space<smem>>
    %549 = vector.extract_strided_slice %547 {offsets = [0, 0, 0], sizes = [1, 1, 256], strides = [1, 1, 1]} : vector<2x1x256xf32> to vector<1x1x256xf32>
    %550 = vector.shape_cast %549 : vector<1x1x256xf32> to vector<1x256xf32>
    %551 = vector.broadcast %548 : f32 to vector<1x256xf32>
    %552 = arith.mulf %551, %550 : vector<1x256xf32>
    %c1_157 = arith.constant 1 : index
    %c31_158 = arith.constant 31 : index
    %553 = memref.load %arg4[%c1_157, %c31_158] : memref<2x49xf32, #tpu.memory_space<smem>>
    %554 = vector.extract_strided_slice %547 {offsets = [1, 0, 0], sizes = [1, 1, 256], strides = [1, 1, 1]} : vector<2x1x256xf32> to vector<1x1x256xf32>
    %555 = vector.shape_cast %554 : vector<1x1x256xf32> to vector<1x256xf32>
    %556 = vector.broadcast %553 : f32 to vector<1x256xf32>
    %557 = arith.mulf %556, %555 : vector<1x256xf32>
    %558 = arith.addf %552, %557 : vector<1x256xf32>
    %cst_159 = arith.constant 0.000000e+00 : f32
    %559 = vector.broadcast %cst_159 : f32 to vector<1x256xf32>
    %560 = arith.select %65, %558, %559 : vector<1x256xi1>, vector<1x256xf32>
    %561 = arith.addf %546, %560 : vector<1x256xf32>
    %562 = vector.extract_strided_slice %28 {offsets = [0, 0, 68], sizes = [2, 1, 256], strides = [1, 1, 1]} : vector<2x1x358xf32> to vector<2x1x256xf32>
    %c0_160 = arith.constant 0 : index
    %c32 = arith.constant 32 : index
    %563 = memref.load %arg4[%c0_160, %c32] : memref<2x49xf32, #tpu.memory_space<smem>>
    %564 = vector.extract_strided_slice %562 {offsets = [0, 0, 0], sizes = [1, 1, 256], strides = [1, 1, 1]} : vector<2x1x256xf32> to vector<1x1x256xf32>
    %565 = vector.shape_cast %564 : vector<1x1x256xf32> to vector<1x256xf32>
    %566 = vector.broadcast %563 : f32 to vector<1x256xf32>
    %567 = arith.mulf %566, %565 : vector<1x256xf32>
    %c1_161 = arith.constant 1 : index
    %c32_162 = arith.constant 32 : index
    %568 = memref.load %arg4[%c1_161, %c32_162] : memref<2x49xf32, #tpu.memory_space<smem>>
    %569 = vector.extract_strided_slice %562 {offsets = [1, 0, 0], sizes = [1, 1, 256], strides = [1, 1, 1]} : vector<2x1x256xf32> to vector<1x1x256xf32>
    %570 = vector.shape_cast %569 : vector<1x1x256xf32> to vector<1x256xf32>
    %571 = vector.broadcast %568 : f32 to vector<1x256xf32>
    %572 = arith.mulf %571, %570 : vector<1x256xf32>
    %573 = arith.addf %567, %572 : vector<1x256xf32>
    %cst_163 = arith.constant 0.000000e+00 : f32
    %574 = vector.broadcast %cst_163 : f32 to vector<1x256xf32>
    %575 = arith.select %70, %573, %574 : vector<1x256xi1>, vector<1x256xf32>
    %576 = arith.addf %561, %575 : vector<1x256xf32>
    %577 = vector.extract_strided_slice %28 {offsets = [0, 0, 69], sizes = [2, 1, 256], strides = [1, 1, 1]} : vector<2x1x358xf32> to vector<2x1x256xf32>
    %c0_164 = arith.constant 0 : index
    %c33 = arith.constant 33 : index
    %578 = memref.load %arg4[%c0_164, %c33] : memref<2x49xf32, #tpu.memory_space<smem>>
    %579 = vector.extract_strided_slice %577 {offsets = [0, 0, 0], sizes = [1, 1, 256], strides = [1, 1, 1]} : vector<2x1x256xf32> to vector<1x1x256xf32>
    %580 = vector.shape_cast %579 : vector<1x1x256xf32> to vector<1x256xf32>
    %581 = vector.broadcast %578 : f32 to vector<1x256xf32>
    %582 = arith.mulf %581, %580 : vector<1x256xf32>
    %c1_165 = arith.constant 1 : index
    %c33_166 = arith.constant 33 : index
    %583 = memref.load %arg4[%c1_165, %c33_166] : memref<2x49xf32, #tpu.memory_space<smem>>
    %584 = vector.extract_strided_slice %577 {offsets = [1, 0, 0], sizes = [1, 1, 256], strides = [1, 1, 1]} : vector<2x1x256xf32> to vector<1x1x256xf32>
    %585 = vector.shape_cast %584 : vector<1x1x256xf32> to vector<1x256xf32>
    %586 = vector.broadcast %583 : f32 to vector<1x256xf32>
    %587 = arith.mulf %586, %585 : vector<1x256xf32>
    %588 = arith.addf %582, %587 : vector<1x256xf32>
    %cst_167 = arith.constant 0.000000e+00 : f32
    %589 = vector.broadcast %cst_167 : f32 to vector<1x256xf32>
    %590 = arith.select %75, %588, %589 : vector<1x256xi1>, vector<1x256xf32>
    %591 = arith.addf %576, %590 : vector<1x256xf32>
    %592 = vector.extract_strided_slice %28 {offsets = [0, 0, 70], sizes = [2, 1, 256], strides = [1, 1, 1]} : vector<2x1x358xf32> to vector<2x1x256xf32>
    %c0_168 = arith.constant 0 : index
    %c34 = arith.constant 34 : index
    %593 = memref.load %arg4[%c0_168, %c34] : memref<2x49xf32, #tpu.memory_space<smem>>
    %594 = vector.extract_strided_slice %592 {offsets = [0, 0, 0], sizes = [1, 1, 256], strides = [1, 1, 1]} : vector<2x1x256xf32> to vector<1x1x256xf32>
    %595 = vector.shape_cast %594 : vector<1x1x256xf32> to vector<1x256xf32>
    %596 = vector.broadcast %593 : f32 to vector<1x256xf32>
    %597 = arith.mulf %596, %595 : vector<1x256xf32>
    %c1_169 = arith.constant 1 : index
    %c34_170 = arith.constant 34 : index
    %598 = memref.load %arg4[%c1_169, %c34_170] : memref<2x49xf32, #tpu.memory_space<smem>>
    %599 = vector.extract_strided_slice %592 {offsets = [1, 0, 0], sizes = [1, 1, 256], strides = [1, 1, 1]} : vector<2x1x256xf32> to vector<1x1x256xf32>
    %600 = vector.shape_cast %599 : vector<1x1x256xf32> to vector<1x256xf32>
    %601 = vector.broadcast %598 : f32 to vector<1x256xf32>
    %602 = arith.mulf %601, %600 : vector<1x256xf32>
    %603 = arith.addf %597, %602 : vector<1x256xf32>
    %cst_171 = arith.constant 0.000000e+00 : f32
    %604 = vector.broadcast %cst_171 : f32 to vector<1x256xf32>
    %605 = arith.select %80, %603, %604 : vector<1x256xi1>, vector<1x256xf32>
    %606 = arith.addf %591, %605 : vector<1x256xf32>
    %607 = vector.extract_strided_slice %28 {offsets = [0, 0, 80], sizes = [2, 1, 256], strides = [1, 1, 1]} : vector<2x1x358xf32> to vector<2x1x256xf32>
    %c0_172 = arith.constant 0 : index
    %c35 = arith.constant 35 : index
    %608 = memref.load %arg4[%c0_172, %c35] : memref<2x49xf32, #tpu.memory_space<smem>>
    %609 = vector.extract_strided_slice %607 {offsets = [0, 0, 0], sizes = [1, 1, 256], strides = [1, 1, 1]} : vector<2x1x256xf32> to vector<1x1x256xf32>
    %610 = vector.shape_cast %609 : vector<1x1x256xf32> to vector<1x256xf32>
    %611 = vector.broadcast %608 : f32 to vector<1x256xf32>
    %612 = arith.mulf %611, %610 : vector<1x256xf32>
    %c1_173 = arith.constant 1 : index
    %c35_174 = arith.constant 35 : index
    %613 = memref.load %arg4[%c1_173, %c35_174] : memref<2x49xf32, #tpu.memory_space<smem>>
    %614 = vector.extract_strided_slice %607 {offsets = [1, 0, 0], sizes = [1, 1, 256], strides = [1, 1, 1]} : vector<2x1x256xf32> to vector<1x1x256xf32>
    %615 = vector.shape_cast %614 : vector<1x1x256xf32> to vector<1x256xf32>
    %616 = vector.broadcast %613 : f32 to vector<1x256xf32>
    %617 = arith.mulf %616, %615 : vector<1x256xf32>
    %618 = arith.addf %612, %617 : vector<1x256xf32>
    %cst_175 = arith.constant 0.000000e+00 : f32
    %619 = vector.broadcast %cst_175 : f32 to vector<1x256xf32>
    %620 = arith.select %50, %618, %619 : vector<1x256xi1>, vector<1x256xf32>
    %621 = arith.addf %606, %620 : vector<1x256xf32>
    %622 = vector.extract_strided_slice %28 {offsets = [0, 0, 81], sizes = [2, 1, 256], strides = [1, 1, 1]} : vector<2x1x358xf32> to vector<2x1x256xf32>
    %c0_176 = arith.constant 0 : index
    %c36 = arith.constant 36 : index
    %623 = memref.load %arg4[%c0_176, %c36] : memref<2x49xf32, #tpu.memory_space<smem>>
    %624 = vector.extract_strided_slice %622 {offsets = [0, 0, 0], sizes = [1, 1, 256], strides = [1, 1, 1]} : vector<2x1x256xf32> to vector<1x1x256xf32>
    %625 = vector.shape_cast %624 : vector<1x1x256xf32> to vector<1x256xf32>
    %626 = vector.broadcast %623 : f32 to vector<1x256xf32>
    %627 = arith.mulf %626, %625 : vector<1x256xf32>
    %c1_177 = arith.constant 1 : index
    %c36_178 = arith.constant 36 : index
    %628 = memref.load %arg4[%c1_177, %c36_178] : memref<2x49xf32, #tpu.memory_space<smem>>
    %629 = vector.extract_strided_slice %622 {offsets = [1, 0, 0], sizes = [1, 1, 256], strides = [1, 1, 1]} : vector<2x1x256xf32> to vector<1x1x256xf32>
    %630 = vector.shape_cast %629 : vector<1x1x256xf32> to vector<1x256xf32>
    %631 = vector.broadcast %628 : f32 to vector<1x256xf32>
    %632 = arith.mulf %631, %630 : vector<1x256xf32>
    %633 = arith.addf %627, %632 : vector<1x256xf32>
    %cst_179 = arith.constant 0.000000e+00 : f32
    %634 = vector.broadcast %cst_179 : f32 to vector<1x256xf32>
    %635 = arith.select %55, %633, %634 : vector<1x256xi1>, vector<1x256xf32>
    %636 = arith.addf %621, %635 : vector<1x256xf32>
    %637 = vector.extract_strided_slice %28 {offsets = [0, 0, 82], sizes = [2, 1, 256], strides = [1, 1, 1]} : vector<2x1x358xf32> to vector<2x1x256xf32>
    %c0_180 = arith.constant 0 : index
    %c37 = arith.constant 37 : index
    %638 = memref.load %arg4[%c0_180, %c37] : memref<2x49xf32, #tpu.memory_space<smem>>
    %639 = vector.extract_strided_slice %637 {offsets = [0, 0, 0], sizes = [1, 1, 256], strides = [1, 1, 1]} : vector<2x1x256xf32> to vector<1x1x256xf32>
    %640 = vector.shape_cast %639 : vector<1x1x256xf32> to vector<1x256xf32>
    %641 = vector.broadcast %638 : f32 to vector<1x256xf32>
    %642 = arith.mulf %641, %640 : vector<1x256xf32>
    %c1_181 = arith.constant 1 : index
    %c37_182 = arith.constant 37 : index
    %643 = memref.load %arg4[%c1_181, %c37_182] : memref<2x49xf32, #tpu.memory_space<smem>>
    %644 = vector.extract_strided_slice %637 {offsets = [1, 0, 0], sizes = [1, 1, 256], strides = [1, 1, 1]} : vector<2x1x256xf32> to vector<1x1x256xf32>
    %645 = vector.shape_cast %644 : vector<1x1x256xf32> to vector<1x256xf32>
    %646 = vector.broadcast %643 : f32 to vector<1x256xf32>
    %647 = arith.mulf %646, %645 : vector<1x256xf32>
    %648 = arith.addf %642, %647 : vector<1x256xf32>
    %cst_183 = arith.constant 0.000000e+00 : f32
    %649 = vector.broadcast %cst_183 : f32 to vector<1x256xf32>
    %650 = arith.select %60, %648, %649 : vector<1x256xi1>, vector<1x256xf32>
    %651 = arith.addf %636, %650 : vector<1x256xf32>
    %652 = vector.extract_strided_slice %28 {offsets = [0, 0, 83], sizes = [2, 1, 256], strides = [1, 1, 1]} : vector<2x1x358xf32> to vector<2x1x256xf32>
    %c0_184 = arith.constant 0 : index
    %c38 = arith.constant 38 : index
    %653 = memref.load %arg4[%c0_184, %c38] : memref<2x49xf32, #tpu.memory_space<smem>>
    %654 = vector.extract_strided_slice %652 {offsets = [0, 0, 0], sizes = [1, 1, 256], strides = [1, 1, 1]} : vector<2x1x256xf32> to vector<1x1x256xf32>
    %655 = vector.shape_cast %654 : vector<1x1x256xf32> to vector<1x256xf32>
    %656 = vector.broadcast %653 : f32 to vector<1x256xf32>
    %657 = arith.mulf %656, %655 : vector<1x256xf32>
    %c1_185 = arith.constant 1 : index
    %c38_186 = arith.constant 38 : index
    %658 = memref.load %arg4[%c1_185, %c38_186] : memref<2x49xf32, #tpu.memory_space<smem>>
    %659 = vector.extract_strided_slice %652 {offsets = [1, 0, 0], sizes = [1, 1, 256], strides = [1, 1, 1]} : vector<2x1x256xf32> to vector<1x1x256xf32>
    %660 = vector.shape_cast %659 : vector<1x1x256xf32> to vector<1x256xf32>
    %661 = vector.broadcast %658 : f32 to vector<1x256xf32>
    %662 = arith.mulf %661, %660 : vector<1x256xf32>
    %663 = arith.addf %657, %662 : vector<1x256xf32>
    %cst_187 = arith.constant 0.000000e+00 : f32
    %664 = vector.broadcast %cst_187 : f32 to vector<1x256xf32>
    %665 = arith.select %65, %663, %664 : vector<1x256xi1>, vector<1x256xf32>
    %666 = arith.addf %651, %665 : vector<1x256xf32>
    %667 = vector.extract_strided_slice %28 {offsets = [0, 0, 84], sizes = [2, 1, 256], strides = [1, 1, 1]} : vector<2x1x358xf32> to vector<2x1x256xf32>
    %c0_188 = arith.constant 0 : index
    %c39 = arith.constant 39 : index
    %668 = memref.load %arg4[%c0_188, %c39] : memref<2x49xf32, #tpu.memory_space<smem>>
    %669 = vector.extract_strided_slice %667 {offsets = [0, 0, 0], sizes = [1, 1, 256], strides = [1, 1, 1]} : vector<2x1x256xf32> to vector<1x1x256xf32>
    %670 = vector.shape_cast %669 : vector<1x1x256xf32> to vector<1x256xf32>
    %671 = vector.broadcast %668 : f32 to vector<1x256xf32>
    %672 = arith.mulf %671, %670 : vector<1x256xf32>
    %c1_189 = arith.constant 1 : index
    %c39_190 = arith.constant 39 : index
    %673 = memref.load %arg4[%c1_189, %c39_190] : memref<2x49xf32, #tpu.memory_space<smem>>
    %674 = vector.extract_strided_slice %667 {offsets = [1, 0, 0], sizes = [1, 1, 256], strides = [1, 1, 1]} : vector<2x1x256xf32> to vector<1x1x256xf32>
    %675 = vector.shape_cast %674 : vector<1x1x256xf32> to vector<1x256xf32>
    %676 = vector.broadcast %673 : f32 to vector<1x256xf32>
    %677 = arith.mulf %676, %675 : vector<1x256xf32>
    %678 = arith.addf %672, %677 : vector<1x256xf32>
    %cst_191 = arith.constant 0.000000e+00 : f32
    %679 = vector.broadcast %cst_191 : f32 to vector<1x256xf32>
    %680 = arith.select %70, %678, %679 : vector<1x256xi1>, vector<1x256xf32>
    %681 = arith.addf %666, %680 : vector<1x256xf32>
    %682 = vector.extract_strided_slice %28 {offsets = [0, 0, 85], sizes = [2, 1, 256], strides = [1, 1, 1]} : vector<2x1x358xf32> to vector<2x1x256xf32>
    %c0_192 = arith.constant 0 : index
    %c40 = arith.constant 40 : index
    %683 = memref.load %arg4[%c0_192, %c40] : memref<2x49xf32, #tpu.memory_space<smem>>
    %684 = vector.extract_strided_slice %682 {offsets = [0, 0, 0], sizes = [1, 1, 256], strides = [1, 1, 1]} : vector<2x1x256xf32> to vector<1x1x256xf32>
    %685 = vector.shape_cast %684 : vector<1x1x256xf32> to vector<1x256xf32>
    %686 = vector.broadcast %683 : f32 to vector<1x256xf32>
    %687 = arith.mulf %686, %685 : vector<1x256xf32>
    %c1_193 = arith.constant 1 : index
    %c40_194 = arith.constant 40 : index
    %688 = memref.load %arg4[%c1_193, %c40_194] : memref<2x49xf32, #tpu.memory_space<smem>>
    %689 = vector.extract_strided_slice %682 {offsets = [1, 0, 0], sizes = [1, 1, 256], strides = [1, 1, 1]} : vector<2x1x256xf32> to vector<1x1x256xf32>
    %690 = vector.shape_cast %689 : vector<1x1x256xf32> to vector<1x256xf32>
    %691 = vector.broadcast %688 : f32 to vector<1x256xf32>
    %692 = arith.mulf %691, %690 : vector<1x256xf32>
    %693 = arith.addf %687, %692 : vector<1x256xf32>
    %cst_195 = arith.constant 0.000000e+00 : f32
    %694 = vector.broadcast %cst_195 : f32 to vector<1x256xf32>
    %695 = arith.select %75, %693, %694 : vector<1x256xi1>, vector<1x256xf32>
    %696 = arith.addf %681, %695 : vector<1x256xf32>
    %697 = vector.extract_strided_slice %28 {offsets = [0, 0, 86], sizes = [2, 1, 256], strides = [1, 1, 1]} : vector<2x1x358xf32> to vector<2x1x256xf32>
    %c0_196 = arith.constant 0 : index
    %c41 = arith.constant 41 : index
    %698 = memref.load %arg4[%c0_196, %c41] : memref<2x49xf32, #tpu.memory_space<smem>>
    %699 = vector.extract_strided_slice %697 {offsets = [0, 0, 0], sizes = [1, 1, 256], strides = [1, 1, 1]} : vector<2x1x256xf32> to vector<1x1x256xf32>
    %700 = vector.shape_cast %699 : vector<1x1x256xf32> to vector<1x256xf32>
    %701 = vector.broadcast %698 : f32 to vector<1x256xf32>
    %702 = arith.mulf %701, %700 : vector<1x256xf32>
    %c1_197 = arith.constant 1 : index
    %c41_198 = arith.constant 41 : index
    %703 = memref.load %arg4[%c1_197, %c41_198] : memref<2x49xf32, #tpu.memory_space<smem>>
    %704 = vector.extract_strided_slice %697 {offsets = [1, 0, 0], sizes = [1, 1, 256], strides = [1, 1, 1]} : vector<2x1x256xf32> to vector<1x1x256xf32>
    %705 = vector.shape_cast %704 : vector<1x1x256xf32> to vector<1x256xf32>
    %706 = vector.broadcast %703 : f32 to vector<1x256xf32>
    %707 = arith.mulf %706, %705 : vector<1x256xf32>
    %708 = arith.addf %702, %707 : vector<1x256xf32>
    %cst_199 = arith.constant 0.000000e+00 : f32
    %709 = vector.broadcast %cst_199 : f32 to vector<1x256xf32>
    %710 = arith.select %80, %708, %709 : vector<1x256xi1>, vector<1x256xf32>
    %711 = arith.addf %696, %710 : vector<1x256xf32>
    %712 = vector.extract_strided_slice %28 {offsets = [0, 0, 96], sizes = [2, 1, 256], strides = [1, 1, 1]} : vector<2x1x358xf32> to vector<2x1x256xf32>
    %c0_200 = arith.constant 0 : index
    %c42 = arith.constant 42 : index
    %713 = memref.load %arg4[%c0_200, %c42] : memref<2x49xf32, #tpu.memory_space<smem>>
    %714 = vector.extract_strided_slice %712 {offsets = [0, 0, 0], sizes = [1, 1, 256], strides = [1, 1, 1]} : vector<2x1x256xf32> to vector<1x1x256xf32>
    %715 = vector.shape_cast %714 : vector<1x1x256xf32> to vector<1x256xf32>
    %716 = vector.broadcast %713 : f32 to vector<1x256xf32>
    %717 = arith.mulf %716, %715 : vector<1x256xf32>
    %c1_201 = arith.constant 1 : index
    %c42_202 = arith.constant 42 : index
    %718 = memref.load %arg4[%c1_201, %c42_202] : memref<2x49xf32, #tpu.memory_space<smem>>
    %719 = vector.extract_strided_slice %712 {offsets = [1, 0, 0], sizes = [1, 1, 256], strides = [1, 1, 1]} : vector<2x1x256xf32> to vector<1x1x256xf32>
    %720 = vector.shape_cast %719 : vector<1x1x256xf32> to vector<1x256xf32>
    %721 = vector.broadcast %718 : f32 to vector<1x256xf32>
    %722 = arith.mulf %721, %720 : vector<1x256xf32>
    %723 = arith.addf %717, %722 : vector<1x256xf32>
    %cst_203 = arith.constant 0.000000e+00 : f32
    %724 = vector.broadcast %cst_203 : f32 to vector<1x256xf32>
    %725 = arith.select %50, %723, %724 : vector<1x256xi1>, vector<1x256xf32>
    %726 = arith.addf %711, %725 : vector<1x256xf32>
    %727 = vector.extract_strided_slice %28 {offsets = [0, 0, 97], sizes = [2, 1, 256], strides = [1, 1, 1]} : vector<2x1x358xf32> to vector<2x1x256xf32>
    %c0_204 = arith.constant 0 : index
    %c43 = arith.constant 43 : index
    %728 = memref.load %arg4[%c0_204, %c43] : memref<2x49xf32, #tpu.memory_space<smem>>
    %729 = vector.extract_strided_slice %727 {offsets = [0, 0, 0], sizes = [1, 1, 256], strides = [1, 1, 1]} : vector<2x1x256xf32> to vector<1x1x256xf32>
    %730 = vector.shape_cast %729 : vector<1x1x256xf32> to vector<1x256xf32>
    %731 = vector.broadcast %728 : f32 to vector<1x256xf32>
    %732 = arith.mulf %731, %730 : vector<1x256xf32>
    %c1_205 = arith.constant 1 : index
    %c43_206 = arith.constant 43 : index
    %733 = memref.load %arg4[%c1_205, %c43_206] : memref<2x49xf32, #tpu.memory_space<smem>>
    %734 = vector.extract_strided_slice %727 {offsets = [1, 0, 0], sizes = [1, 1, 256], strides = [1, 1, 1]} : vector<2x1x256xf32> to vector<1x1x256xf32>
    %735 = vector.shape_cast %734 : vector<1x1x256xf32> to vector<1x256xf32>
    %736 = vector.broadcast %733 : f32 to vector<1x256xf32>
    %737 = arith.mulf %736, %735 : vector<1x256xf32>
    %738 = arith.addf %732, %737 : vector<1x256xf32>
    %cst_207 = arith.constant 0.000000e+00 : f32
    %739 = vector.broadcast %cst_207 : f32 to vector<1x256xf32>
    %740 = arith.select %55, %738, %739 : vector<1x256xi1>, vector<1x256xf32>
    %741 = arith.addf %726, %740 : vector<1x256xf32>
    %742 = vector.extract_strided_slice %28 {offsets = [0, 0, 98], sizes = [2, 1, 256], strides = [1, 1, 1]} : vector<2x1x358xf32> to vector<2x1x256xf32>
    %c0_208 = arith.constant 0 : index
    %c44 = arith.constant 44 : index
    %743 = memref.load %arg4[%c0_208, %c44] : memref<2x49xf32, #tpu.memory_space<smem>>
    %744 = vector.extract_strided_slice %742 {offsets = [0, 0, 0], sizes = [1, 1, 256], strides = [1, 1, 1]} : vector<2x1x256xf32> to vector<1x1x256xf32>
    %745 = vector.shape_cast %744 : vector<1x1x256xf32> to vector<1x256xf32>
    %746 = vector.broadcast %743 : f32 to vector<1x256xf32>
    %747 = arith.mulf %746, %745 : vector<1x256xf32>
    %c1_209 = arith.constant 1 : index
    %c44_210 = arith.constant 44 : index
    %748 = memref.load %arg4[%c1_209, %c44_210] : memref<2x49xf32, #tpu.memory_space<smem>>
    %749 = vector.extract_strided_slice %742 {offsets = [1, 0, 0], sizes = [1, 1, 256], strides = [1, 1, 1]} : vector<2x1x256xf32> to vector<1x1x256xf32>
    %750 = vector.shape_cast %749 : vector<1x1x256xf32> to vector<1x256xf32>
    %751 = vector.broadcast %748 : f32 to vector<1x256xf32>
    %752 = arith.mulf %751, %750 : vector<1x256xf32>
    %753 = arith.addf %747, %752 : vector<1x256xf32>
    %cst_211 = arith.constant 0.000000e+00 : f32
    %754 = vector.broadcast %cst_211 : f32 to vector<1x256xf32>
    %755 = arith.select %60, %753, %754 : vector<1x256xi1>, vector<1x256xf32>
    %756 = arith.addf %741, %755 : vector<1x256xf32>
    %757 = vector.extract_strided_slice %28 {offsets = [0, 0, 99], sizes = [2, 1, 256], strides = [1, 1, 1]} : vector<2x1x358xf32> to vector<2x1x256xf32>
    %c0_212 = arith.constant 0 : index
    %c45 = arith.constant 45 : index
    %758 = memref.load %arg4[%c0_212, %c45] : memref<2x49xf32, #tpu.memory_space<smem>>
    %759 = vector.extract_strided_slice %757 {offsets = [0, 0, 0], sizes = [1, 1, 256], strides = [1, 1, 1]} : vector<2x1x256xf32> to vector<1x1x256xf32>
    %760 = vector.shape_cast %759 : vector<1x1x256xf32> to vector<1x256xf32>
    %761 = vector.broadcast %758 : f32 to vector<1x256xf32>
    %762 = arith.mulf %761, %760 : vector<1x256xf32>
    %c1_213 = arith.constant 1 : index
    %c45_214 = arith.constant 45 : index
    %763 = memref.load %arg4[%c1_213, %c45_214] : memref<2x49xf32, #tpu.memory_space<smem>>
    %764 = vector.extract_strided_slice %757 {offsets = [1, 0, 0], sizes = [1, 1, 256], strides = [1, 1, 1]} : vector<2x1x256xf32> to vector<1x1x256xf32>
    %765 = vector.shape_cast %764 : vector<1x1x256xf32> to vector<1x256xf32>
    %766 = vector.broadcast %763 : f32 to vector<1x256xf32>
    %767 = arith.mulf %766, %765 : vector<1x256xf32>
    %768 = arith.addf %762, %767 : vector<1x256xf32>
    %cst_215 = arith.constant 0.000000e+00 : f32
    %769 = vector.broadcast %cst_215 : f32 to vector<1x256xf32>
    %770 = arith.select %65, %768, %769 : vector<1x256xi1>, vector<1x256xf32>
    %771 = arith.addf %756, %770 : vector<1x256xf32>
    %772 = vector.extract_strided_slice %28 {offsets = [0, 0, 100], sizes = [2, 1, 256], strides = [1, 1, 1]} : vector<2x1x358xf32> to vector<2x1x256xf32>
    %c0_216 = arith.constant 0 : index
    %c46 = arith.constant 46 : index
    %773 = memref.load %arg4[%c0_216, %c46] : memref<2x49xf32, #tpu.memory_space<smem>>
    %774 = vector.extract_strided_slice %772 {offsets = [0, 0, 0], sizes = [1, 1, 256], strides = [1, 1, 1]} : vector<2x1x256xf32> to vector<1x1x256xf32>
    %775 = vector.shape_cast %774 : vector<1x1x256xf32> to vector<1x256xf32>
    %776 = vector.broadcast %773 : f32 to vector<1x256xf32>
    %777 = arith.mulf %776, %775 : vector<1x256xf32>
    %c1_217 = arith.constant 1 : index
    %c46_218 = arith.constant 46 : index
    %778 = memref.load %arg4[%c1_217, %c46_218] : memref<2x49xf32, #tpu.memory_space<smem>>
    %779 = vector.extract_strided_slice %772 {offsets = [1, 0, 0], sizes = [1, 1, 256], strides = [1, 1, 1]} : vector<2x1x256xf32> to vector<1x1x256xf32>
    %780 = vector.shape_cast %779 : vector<1x1x256xf32> to vector<1x256xf32>
    %781 = vector.broadcast %778 : f32 to vector<1x256xf32>
    %782 = arith.mulf %781, %780 : vector<1x256xf32>
    %783 = arith.addf %777, %782 : vector<1x256xf32>
    %cst_219 = arith.constant 0.000000e+00 : f32
    %784 = vector.broadcast %cst_219 : f32 to vector<1x256xf32>
    %785 = arith.select %70, %783, %784 : vector<1x256xi1>, vector<1x256xf32>
    %786 = arith.addf %771, %785 : vector<1x256xf32>
    %787 = vector.extract_strided_slice %28 {offsets = [0, 0, 101], sizes = [2, 1, 256], strides = [1, 1, 1]} : vector<2x1x358xf32> to vector<2x1x256xf32>
    %c0_220 = arith.constant 0 : index
    %c47 = arith.constant 47 : index
    %788 = memref.load %arg4[%c0_220, %c47] : memref<2x49xf32, #tpu.memory_space<smem>>
    %789 = vector.extract_strided_slice %787 {offsets = [0, 0, 0], sizes = [1, 1, 256], strides = [1, 1, 1]} : vector<2x1x256xf32> to vector<1x1x256xf32>
    %790 = vector.shape_cast %789 : vector<1x1x256xf32> to vector<1x256xf32>
    %791 = vector.broadcast %788 : f32 to vector<1x256xf32>
    %792 = arith.mulf %791, %790 : vector<1x256xf32>
    %c1_221 = arith.constant 1 : index
    %c47_222 = arith.constant 47 : index
    %793 = memref.load %arg4[%c1_221, %c47_222] : memref<2x49xf32, #tpu.memory_space<smem>>
    %794 = vector.extract_strided_slice %787 {offsets = [1, 0, 0], sizes = [1, 1, 256], strides = [1, 1, 1]} : vector<2x1x256xf32> to vector<1x1x256xf32>
    %795 = vector.shape_cast %794 : vector<1x1x256xf32> to vector<1x256xf32>
    %796 = vector.broadcast %793 : f32 to vector<1x256xf32>
    %797 = arith.mulf %796, %795 : vector<1x256xf32>
    %798 = arith.addf %792, %797 : vector<1x256xf32>
    %cst_223 = arith.constant 0.000000e+00 : f32
    %799 = vector.broadcast %cst_223 : f32 to vector<1x256xf32>
    %800 = arith.select %75, %798, %799 : vector<1x256xi1>, vector<1x256xf32>
    %801 = arith.addf %786, %800 : vector<1x256xf32>
    %802 = vector.extract_strided_slice %28 {offsets = [0, 0, 102], sizes = [2, 1, 256], strides = [1, 1, 1]} : vector<2x1x358xf32> to vector<2x1x256xf32>
    %c0_224 = arith.constant 0 : index
    %c48 = arith.constant 48 : index
    %803 = memref.load %arg4[%c0_224, %c48] : memref<2x49xf32, #tpu.memory_space<smem>>
    %804 = vector.extract_strided_slice %802 {offsets = [0, 0, 0], sizes = [1, 1, 256], strides = [1, 1, 1]} : vector<2x1x256xf32> to vector<1x1x256xf32>
    %805 = vector.shape_cast %804 : vector<1x1x256xf32> to vector<1x256xf32>
    %806 = vector.broadcast %803 : f32 to vector<1x256xf32>
    %807 = arith.mulf %806, %805 : vector<1x256xf32>
    %c1_225 = arith.constant 1 : index
    %c48_226 = arith.constant 48 : index
    %808 = memref.load %arg4[%c1_225, %c48_226] : memref<2x49xf32, #tpu.memory_space<smem>>
    %809 = vector.extract_strided_slice %802 {offsets = [1, 0, 0], sizes = [1, 1, 256], strides = [1, 1, 1]} : vector<2x1x256xf32> to vector<1x1x256xf32>
    %810 = vector.shape_cast %809 : vector<1x1x256xf32> to vector<1x256xf32>
    %811 = vector.broadcast %808 : f32 to vector<1x256xf32>
    %812 = arith.mulf %811, %810 : vector<1x256xf32>
    %813 = arith.addf %807, %812 : vector<1x256xf32>
    %cst_227 = arith.constant 0.000000e+00 : f32
    %814 = vector.broadcast %cst_227 : f32 to vector<1x256xf32>
    %815 = arith.select %80, %813, %814 : vector<1x256xi1>, vector<1x256xf32>
    %816 = arith.addf %801, %815 : vector<1x256xf32>
    %817 = arith.negf %816 : vector<1x256xf32>
    %818 = math.exp %817 : vector<1x256xf32>
    %cst_228 = arith.constant 1.000000e+00 : f32
    %819 = vector.broadcast %cst_228 : f32 to vector<1x256xf32>
    %820 = arith.addf %819, %818 : vector<1x256xf32>
    %821 = arith.divf %819, %820 : vector<1x256xf32>
    %822 = vector.shape_cast %821 : vector<1x256xf32> to vector<1x1x256xf32>
    %823 = vector.broadcast %822 : vector<1x1x256xf32> to vector<1x4x256xf32>
    %824 = arith.mulf %15, %823 : vector<1x4x256xf32>
    %c0_229 = arith.constant 0 : index
    %c0_230 = arith.constant 0 : index
    %c0_231 = arith.constant 0 : index
    %825 = vector.load %arg5[%c0_229, %c0_230, %c0_231] : memref<1x4x256xf32, #tpu.memory_space<vmem>>, vector<1x4x256xf32>
    tpu.vector_store %arg5[%c0_229, %c0_230, %c0_231], %824 {strides = array<i32>} : memref<1x4x256xf32, #tpu.memory_space<vmem>>, vector<1x4x256xf32>,
    return
  }
  func.func @transform_0(%arg0: i32) -> (i32, i32, i32) {
    %c0_i32 = arith.constant 0 : i32
    %c0_i32_0 = arith.constant 0 : i32
    %c0_i32_1 = arith.constant 0 : i32
    return %arg0, %c0_i32, %c0_i32_0 : i32, i32, i32
  }
  func.func @transform_1(%arg0: i32) -> (i32, i32) {
    %c0_i32 = arith.constant 0 : i32
    %c0_i32_0 = arith.constant 0 : i32
    %c0_i32_1 = arith.constant 0 : i32
    return %c0_i32, %c0_i32_0 : i32, i32
  }
  func.func @transform_2(%arg0: i32) -> (i32, i32) {
    %c0_i32 = arith.constant 0 : i32
    %c0_i32_0 = arith.constant 0 : i32
    %c0_i32_1 = arith.constant 0 : i32
    return %c0_i32, %c0_i32_0 : i32, i32
  }
  func.func @transform_3(%arg0: i32) -> (i32, i32) {
    %c0_i32 = arith.constant 0 : i32
    %c0_i32_0 = arith.constant 0 : i32
    %c0_i32_1 = arith.constant 0 : i32
    return %c0_i32, %c0_i32_0 : i32, i32
  }
  func.func @transform_4(%arg0: i32) -> (i32, i32, i32) {
    %c0_i32 = arith.constant 0 : i32
    %c0_i32_0 = arith.constant 0 : i32
    %c0_i32_1 = arith.constant 0 : i32
    return %arg0, %c0_i32, %c0_i32_0 : i32, i32, i32
  }
}

</mosaic_0001>

<llo_original>
// kernel: tpu_custom_call.1
$region0: #{tpu_custom_call.1}
  #allocation0 [shape = 'u32[]', space=smem, size = 0x4, offset = 0x4, fixed_abs, tag = 'smem constant byte address 0x4 - core index']
  #allocation1 [shape = 'u32[144,128]{1,0:T(1,128)}', space=vmem, size = 0x12000, scoped, tag = 'internal scratch']
  #allocation2 [shape = 'f32[2,1,358]{2,1,0:T(1,128)}', space=vmem, size = 0xc00, scoped, tag = 'scratch operand']
  %s0 = inlined_call_operand.hbm [shape: f32[2,4,256], index: 0, kind: input, shape index: {}]
  %s1 = inlined_call_operand.hbm [shape: f32[4,4], index: 1, kind: input, shape index: {}]
  %s2 = inlined_call_operand.vmem [shape: f32[1,4], index: 2, kind: input, shape index: {}]
  %s3 = inlined_call_operand.vmem [shape: f32[2,49], index: 3, kind: input, shape index: {}]
  %s4 = inlined_call_operand.hbm [shape: f32[2,4,256], index: 4, kind: output, shape index: {}]
  %s5 = sld [smem:[#allocation0]]
  $region61: #{tpu_custom_call.1} parent=0
    _
  %s7 = ssub.s32 1, %s5
  %s8 = scalar_select 0, %s7, %s5
  $region1: #{tpu_custom_call.1} parent=0
    #allocation3 [shape = 'u8[8192]{0}', space=vmem, size = 0x2000, scoped, tag = 'input window, operand 0']
    #allocation4 [shape = 's32[2]{0}', space=sflag, size = 0x8, scoped, tag = 'scoped memory for tpu_custom_call.1']
    #allocation5 [shape = 's32[2]{0}', space=sflag, size = 0x8, scoped, tag = 'scoped memory for tpu_custom_call.1']
    #allocation6 [shape = 's32[2]{0}', space=sflag, size = 0x8, scoped, tag = 'scoped memory for tpu_custom_call.1']
    #allocation7 [shape = 'u8[2048]{0}', space=vmem, size = 0x800, scoped, tag = 'input window, operand 1, single buffered']
    #allocation8 [shape = 's32[1]{0}', space=sflag, size = 0x4, scoped, tag = 'scoped memory for tpu_custom_call.1']
    #allocation9 [shape = 'u8[1024]{0}', space=smem, size = 0x400, scoped, tag = 'input window, operand 3, single buffered']
    #allocation10 [shape = 'u8[8192]{0}', space=vmem, size = 0x2000, scoped, tag = 'output window, operand 0']
    %9 = vsyncpa [#allocation4], 0
    %s10 = scalar_lea.sflag [#allocation4], 1
    %11 = vsyncpa %s10, 0
    %12 = vsyncpa [#allocation8], 0
    %13 = vsyncpa [#allocation6], 0
    %14 = vsyncpa [#allocation5], 0
    %s15 = scalar_lea.sflag [#allocation5], 1
    %16 = vsyncpa %s15, 0
    loop: start=0, step=1, limit=4
    $region2: #{tpu_custom_call.1} parent=1 // loop_pre_header
      _
    $region3: #{tpu_custom_call.1} parent=1 // loop_header
      %s18 = sphi 0, %s22
      %p19 = scmp.ge.s32.totalorder %s18, 4
      %s28 = sphi 0, %s30
      %s31 = sphi 0, %s28
      %s32 = sphi 0, %s31
      %s48 = sphi 0, %s32
      %s52 = sphi 0, %s52
      %s54 = sphi 0, %s52
      %s55 = sphi 0, %s54
      %s69 = sphi 0, %s55
      %s73 = sphi 0, %s73
      %s75 = sphi 0, %s73
      %s76 = sphi 0, %s75
      %s90 = sphi 0, %s76
      %s94 = sphi 0, %s94
      %s96 = sphi 0, %s94
      %s97 = sphi 0, %s96
      %s111 = sphi 0, %s97
      %s117 = sphi 0, %s119
      %s120 = sphi 0, %s117
      %s121 = sphi 0, %s120
      %s137 = sphi 0, %s121
    $region4: #{tpu_custom_call.1} parent=1 // loop_header_branch
      %21 = sbr.rel (%p19) target = $region8
    $region5: #{tpu_custom_call.1} parent=1 // loop_body
      %s23 = ssub.s32 %s18, 1
      %s24 = ssub.s32 %s18, 2
      %s25 = sadd.s32 %s18, 1
      %s26 = ssub.s32 %s18, %s25
      %p27 = scmp.eq.s32.totalorder %s26, 0
      %s29 = sadd.s32 %s28, 1
      %s30 = scalar_select %p27, %s28, %s29
      %p33 = pneg %p27
      %p34 = scmp.eq.s32.totalorder %s18, 1
      %p35 = por %p33, %p34
      %p36 = scmp.ne.s32.totalorder %s28, %s31
      %p37 = scmp.eq.s32.totalorder %s18, 0
      %p38 = por %p36, %p37
      %p39 = scmp.ne.s32.totalorder %s28, %s31
      %p40 = scmp.eq.s32.totalorder %s23, 1
      %p41 = por %p39, %p40
      %p42 = scmp.ne.s32.totalorder %s31, %s32
      %p43 = scmp.eq.s32.totalorder %s23, 0
      %p44 = por %p42, %p43
      %p45 = scmp.ne.s32.totalorder %s31, %s32
      %p46 = scmp.eq.s32.totalorder %s24, 1
      %p47 = por %p45, %p46
      %p49 = scmp.ne.s32.totalorder %s32, %s48
      %p50 = scmp.eq.s32.totalorder %s24, 0
      %p51 = por %p49, %p50
      %s53 = sadd.s32 %s52, 1
      %p56 = scmp.eq.s32.totalorder %s18, 1
      %p57 = scmp.ne.s32.totalorder %s52, %s54
      %p58 = scmp.eq.s32.totalorder %s18, 0
      %p59 = por %p57, %p58
      %p60 = scmp.ne.s32.totalorder %s52, %s54
      %p61 = scmp.eq.s32.totalorder %s23, 1
      %p62 = por %p60, %p61
      %p63 = scmp.ne.s32.totalorder %s54, %s55
      %p64 = scmp.eq.s32.totalorder %s23, 0
      %p65 = por %p63, %p64
      %p66 = scmp.ne.s32.totalorder %s54, %s55
      %p67 = scmp.eq.s32.totalorder %s24, 1
      %p68 = por %p66, %p67
      %p70 = scmp.ne.s32.totalorder %s55, %s69
      %p71 = scmp.eq.s32.totalorder %s24, 0
      %p72 = por %p70, %p71
      %s74 = sadd.s32 %s73, 1
      %p77 = scmp.eq.s32.totalorder %s18, 1
      %p78 = scmp.ne.s32.totalorder %s73, %s75
      %p79 = scmp.eq.s32.totalorder %s18, 0
      %p80 = por %p78, %p79
      %p81 = scmp.ne.s32.totalorder %s73, %s75
      %p82 = scmp.eq.s32.totalorder %s23, 1
      %p83 = por %p81, %p82
      %p84 = scmp.ne.s32.totalorder %s75, %s76
      %p85 = scmp.eq.s32.totalorder %s23, 0
      %p86 = por %p84, %p85
      %p87 = scmp.ne.s32.totalorder %s75, %s76
      %p88 = scmp.eq.s32.totalorder %s24, 1
      %p89 = por %p87, %p88
      %p91 = scmp.ne.s32.totalorder %s76, %s90
      %p92 = scmp.eq.s32.totalorder %s24, 0
      %p93 = por %p91, %p92
      %s95 = sadd.s32 %s94, 1
      %p98 = scmp.eq.s32.totalorder %s18, 1
      %p99 = scmp.ne.s32.totalorder %s94, %s96
      %p100 = scmp.eq.s32.totalorder %s18, 0
      %p101 = por %p99, %p100
      %p102 = scmp.ne.s32.totalorder %s94, %s96
      %p103 = scmp.eq.s32.totalorder %s23, 1
      %p104 = por %p102, %p103
      %p105 = scmp.ne.s32.totalorder %s96, %s97
      %p106 = scmp.eq.s32.totalorder %s23, 0
      %p107 = por %p105, %p106
      %p108 = scmp.ne.s32.totalorder %s96, %s97
      %p109 = scmp.eq.s32.totalorder %s24, 1
      %p110 = por %p108, %p109
      %p112 = scmp.ne.s32.totalorder %s97, %s111
      %p113 = scmp.eq.s32.totalorder %s24, 0
      %p114 = por %p112, %p113
      %s115 = ssub.s32 %s18, %s25
      %p116 = scmp.eq.s32.totalorder %s115, 0
      %s118 = sadd.s32 %s117, 1
      %s119 = scalar_select %p116, %s117, %s118
      %p122 = pneg %p116
      %p123 = scmp.eq.s32.totalorder %s18, 1
      %p124 = por %p122, %p123
      %p125 = scmp.ne.s32.totalorder %s117, %s120
      %p126 = scmp.eq.s32.totalorder %s18, 0
      %p127 = por %p125, %p126
      %p128 = scmp.ne.s32.totalorder %s117, %s120
      %p129 = scmp.eq.s32.totalorder %s23, 1
      %p130 = por %p128, %p129
      %p131 = scmp.ne.s32.totalorder %s120, %s121
      %p132 = scmp.eq.s32.totalorder %s23, 0
      %p133 = por %p131, %p132
      %p134 = scmp.ne.s32.totalorder %s120, %s121
      %p135 = scmp.eq.s32.totalorder %s24, 1
      %p136 = por %p134, %p135
      %p138 = scmp.ne.s32.totalorder %s121, %s137
      %p139 = scmp.eq.s32.totalorder %s24, 0
      %p140 = por %p138, %p139
      %p141 = scmp.le.s32.totalorder 1, %s18
      %p142 = scmp.lt.s32.totalorder %s18, 3
      %p143 = pnand %p141, %p142
      %p144 = pneg %p143
      // Predicated region
      $region9: #{tpu_custom_call.1} parent=5 // pred_check
        _
      $region10: #{tpu_custom_call.1} parent=5 // pred_check_branch
        %146 = sbr.rel (%p143) target = $region12
      $region11: #{tpu_custom_call.1} parent=5 // pred_region
        %s147 = ssub.s32 %s18, 1
        // Predicated region
        $region13: #{tpu_custom_call.1} parent=11 // pred_check
          %p148 = pneg %p65
        $region14: #{tpu_custom_call.1} parent=11 // pred_check_branch
          %150 = sbr.rel (%p148) target = $region16
        $region15: #{tpu_custom_call.1} parent=11 // pred_region
          %s152 = ssub.s32 64, 64
          %153 = vsyncadd [#allocation8], %s152
          %s155 = sshll.u32 [#allocation7], 4
          %s156 = int_to_ptr.vmem [resolvable:$true] %s155
          %158 = dma.hbm_to_vmem [thread:$0]  %s1, 64, %s156, [#allocation8]
        $region16: #{tpu_custom_call.1} parent=11 // pred_fallthru
          _
        // Predicated region
        $region17: #{tpu_custom_call.1} parent=11 // pred_check
          %p159 = pneg %p86
        $region18: #{tpu_custom_call.1} parent=11 // pred_check_branch
          %161 = sbr.rel (%p159) target = $region20
        $region19: #{tpu_custom_call.1} parent=11 // pred_region
          _
        $region20: #{tpu_custom_call.1} parent=11 // pred_fallthru
          _
        // Predicated region
        $region21: #{tpu_custom_call.1} parent=11 // pred_check
          %p162 = pneg %p107
        $region22: #{tpu_custom_call.1} parent=11 // pred_check_branch
          %164 = sbr.rel (%p162) target = $region24
        $region23: #{tpu_custom_call.1} parent=11 // pred_region
          %s166 = ssub.s32 32, 32
          %167 = vsyncadd [#allocation6], %s166
          %s169 = sshll.u32 %s3, 4
          %s170 = int_to_ptr.vmem [resolvable:$true] %s169
          %172 = dma.vmem_to_smem %s170, 32, [#allocation9], [#allocation6]
        $region24: #{tpu_custom_call.1} parent=11 // pred_fallthru
          _
      $region12: #{tpu_custom_call.1} parent=5 // pred_fallthru
        _
      %p173 = scmp.lt.s32.totalorder %s18, 2
      // Predicated region
      $region25: #{tpu_custom_call.1} parent=5 // pred_check
        %p174 = pneg %p173
      $region26: #{tpu_custom_call.1} parent=5 // pred_check_branch
        %176 = sbr.rel (%p174) target = $region28
      $region27: #{tpu_custom_call.1} parent=5 // pred_region
        // Predicated region
        $region29: #{tpu_custom_call.1} parent=27 // pred_check
          %p177 = pneg %p38
        $region30: #{tpu_custom_call.1} parent=27 // pred_check_branch
          %179 = sbr.rel (%p177) target = $region32
        $region31: #{tpu_custom_call.1} parent=27 // pred_region
          %s180 = sand.u32 %s28, 1
          %s181 = scalar_lea.sflag [#allocation4], %s180
          %s182 = sand.u32 %s28, 1
          %s183 = smul.addr %s182, 8
          %s184 = scalar_lea.vmem [#allocation3], %s183
          %s186 = ssub.s32 128, 128
          %187 = vsyncadd %s181, %s186
          %s188 = smul.addr %s18, 2
          %s189 = smul.addr %s188, 64
          %s190 = scalar_lea.hbm %s0, %s189
          %s192 = sshll.u32 %s184, 4
          %s193 = int_to_ptr.vmem [resolvable:$true] %s192
          %195 = dma.hbm_to_vmem [thread:$0]  %s190, 128, %s193, %s181
        $region32: #{tpu_custom_call.1} parent=27 // pred_fallthru
          _
      $region28: #{tpu_custom_call.1} parent=5 // pred_fallthru
        _
      %p196 = scmp.le.s32.totalorder 1, %s18
      %p197 = scmp.lt.s32.totalorder %s18, 3
      %p198 = pnand %p196, %p197
      %p199 = pneg %p198
      // Predicated region
      $region33: #{tpu_custom_call.1} parent=5 // pred_check
        _
      $region34: #{tpu_custom_call.1} parent=5 // pred_check_branch
        %201 = sbr.rel (%p198) target = $region36
      $region35: #{tpu_custom_call.1} parent=5 // pred_region
        %s202 = ssub.s32 %s18, 1
        %s203 = sand.u32 %s31, 1
        %s204 = scalar_lea.sflag [#allocation4], %s203
        %s205 = sand.u32 %s31, 1
        %s206 = smul.addr %s205, 8
        %s207 = scalar_lea.vmem [#allocation3], %s206
        // Predicated region
        $region37: #{tpu_custom_call.1} parent=35 // pred_check
          %p208 = pneg %p44
        $region38: #{tpu_custom_call.1} parent=35 // pred_check_branch
          %210 = sbr.rel (%p208) target = $region40
        $region39: #{tpu_custom_call.1} parent=35 // pred_region
          %211 = dma.done %s204, 128
        $region40: #{tpu_custom_call.1} parent=35 // pred_fallthru
          _
        // Predicated region
        $region41: #{tpu_custom_call.1} parent=35 // pred_check
          %p212 = pneg %p65
        $region42: #{tpu_custom_call.1} parent=35 // pred_check_branch
          %214 = sbr.rel (%p212) target = $region44
        $region43: #{tpu_custom_call.1} parent=35 // pred_region
          %215 = dma.done [#allocation8], 64
        $region44: #{tpu_custom_call.1} parent=35 // pred_fallthru
          _
        // Predicated region
        $region45: #{tpu_custom_call.1} parent=35 // pred_check
          %p216 = pneg %p107
        $region46: #{tpu_custom_call.1} parent=35 // pred_check_branch
          %218 = sbr.rel (%p216) target = $region48
        $region47: #{tpu_custom_call.1} parent=35 // pred_region
          %219 = dma.done [#allocation6], 32
        $region48: #{tpu_custom_call.1} parent=35 // pred_fallthru
          _
        %220 = sfence
        %s221 = sand.u32 %s31, 1
        %s222 = scalar_lea.sflag [#allocation4], %s221
        %s223 = sand.u32 %s31, 1
        %s224 = smul.addr %s223, 8
        %s225 = scalar_lea.vmem [#allocation3], %s224
        %p226 = pneg %p44
        %p227 = pneg %p41
        %p228 = pneg %p65
        %p229 = pneg %p62
        %p230 = pneg %p86
        %p231 = pneg %p83
        %p232 = pneg %p107
        %p233 = pneg %p104
        %p234 = pneg %p133
        %p235 = pneg %p130
        %s236 = sand.u32 %s120, 1
        %s237 = scalar_lea.sflag [#allocation5], %s236
        %s238 = sand.u32 %s120, 1
        %s239 = smul.addr %s238, 8
        %s240 = scalar_lea.vmem [#allocation10], %s239
        %v241 = vld [vmem:[%s207] sm:$0xff]
        %v243 = vcombine.high %v241, %v241
        %vm245 = vcmask 1043456
        %v246 = vsel %vm245, %v241, 0.0
        %v247 = vsel %vm245, %v243, 0.0
        %v248 = vadd.f32 %v246, %v247
        %249 = vadd.xlane.f32.xlu0 %v248
        %v250 = vpop.xlane.xlu0 %249
        %v251 = vrcp.pop 256.0
        %v252 = vmul.f32 %v250, %v251
        %v253 = vld [vmem:[#allocation7] sm:$0xf]
        %v254 = vld [vmem:[%s2] sm:$0x1]
        %v256 = vlaneseq
        %v257 = vand.u32 %v256, 127
        %v258 = vlaneseq
        %v259 = vshrl.u32 %v258, 7
        %v260 = vsub.s32 %v257, %v259
        %v261 = vrot.slane %v252, %v260
        %vm262 = vcmask 31744
        %v263 = vsel %vm262, %v261, 0
        %v266 = vsel %vm245, %v253, 0
        %268 = vmatprep.subr.mxu0 0.0
        %269 = vmatpush1.msra.mxu0 %v266
        %270 = vmatprep.subr.mxu0 0.0
        %271 = vmatpush1.msra.mxu0 0.0
        %272 = vmatprep.subr.mxu0 0.0
        %273 = vmatpush1.msra.mxu0 0.0
        %274 = vmatprep.subr.mxu0 0.0
        %275 = vmatpush1.msra.mxu0 0.0
        %276 = vmatprep.subr.mxu0 0.0
        %277 = vmatpush1.msra.mxu0 0.0
        %278 = vmatprep.subr.mxu0 0.0
        %279 = vmatpush1.msra.mxu0 0.0
        %280 = vmatprep.subr.mxu0 0.0
        %281 = vmatpush1.msra.mxu0 0.0
        %282 = vmatprep.subr.mxu0 0.0
        %283 = vmatpush1.msra.mxu0 0.0
        %284 = vmatprep.subr.mxu0 0.0
        %285 = vmatpush1.msra.mxu0 0.0
        %286 = vmatprep.subr.mxu0 0.0
        %287 = vmatpush1.msra.mxu0 0.0
        %288 = vmatprep.subr.mxu0 0.0
        %289 = vmatpush1.msra.mxu0 0.0
        %290 = vmatprep.subr.mxu0 0.0
        %291 = vmatpush1.msra.mxu0 0.0
        %292 = vmatprep.subr.mxu0 0.0
        %293 = vmatpush1.msra.mxu0 0.0
        %294 = vmatprep.subr.mxu0 0.0
        %295 = vmatpush1.msra.mxu0 0.0
        %296 = vmatprep.subr.mxu0 0.0
        %297 = vmatpush1.msra.mxu0 0.0
        %298 = vmatprep.subr.mxu0 0.0
        %299 = vmatpush1.msra.mxu0 0.0
        %300 = vmatprep.subr.mxu0 0.0
        %301 = vmatpush1.msra.mxu0 0.0
        %302 = vmatprep.subr.mxu0 0.0
        %303 = vmatpush1.msra.mxu0 0.0
        %304 = vmatprep.subr.mxu0 0.0
        %305 = vmatpush1.msra.mxu0 0.0
        %306 = vmatprep.subr.mxu0 0.0
        %307 = vmatpush1.msra.mxu0 0.0
        %308 = vmatprep.subr.mxu0 0.0
        %309 = vmatpush1.msra.mxu0 0.0
        %310 = vmatprep.subr.mxu0 0.0
        %311 = vmatpush1.msra.mxu0 0.0
        %312 = vmatprep.subr.mxu0 0.0
        %313 = vmatpush1.msra.mxu0 0.0
        %314 = vmatprep.subr.mxu0 0.0
        %315 = vmatpush1.msra.mxu0 0.0
        %316 = vmatprep.subr.mxu0 0.0
        %317 = vmatpush1.msra.mxu0 0.0
        %318 = vmatprep.subr.mxu0 0.0
        %319 = vmatpush1.msra.mxu0 0.0
        %320 = vmatprep.subr.mxu0 0.0
        %321 = vmatpush1.msra.mxu0 0.0
        %322 = vmatprep.subr.mxu0 0.0
        %323 = vmatpush1.msra.mxu0 0.0
        %324 = vmatprep.subr.mxu0 0.0
        %325 = vmatpush1.msra.mxu0 0.0
        %326 = vmatprep.subr.mxu0 0.0
        %327 = vmatpush1.msra.mxu0 0.0
        %328 = vmatprep.subr.mxu0 0.0
        %329 = vmatpush1.msra.mxu0 0.0
        %330 = vmatprep.subr.mxu0 0.0
        %331 = vmatpush1.msra.mxu0 0.0
        %332 = vmatprep.mubr.f32.mxu0 0.0
        %333 = vmatmul.mubr.f32.gmra.mrb[0].mxu0 %v263
        %v334 = vpop.f32.mrb[0].mxu0
        %v335 = vadd.f32 %v254, %v334
        %v336 = vpop.f32.mrb[0].mxu0
        %337 = vdwg.mxu0
        %v338 = vxor.u32 %v335, 2147483648
        %v339 = vmul.f32 %v338, 1.442695
        %v340 = vpow.pop %v339
        %v341 = vadd.f32 %v340, 1.0
        %v342 = vrcp.pop %v341
        %v343 = vmul.f32 1.0, %v342
        %v344 = vlaneseq
        %v345 = vshrl.u32 %v344, 7
        %v346 = vsub.s32 0, %v345
        %v347 = vrot.slane %v343, %v346
        %349 = vbcast.lane.b32.xlu0 %v347, 256
        %v350 = vpop.permute.xlu0 %349
        %v353 = vunpack.c.l.s4 839922192
        %v354 = vunpack.c.0.s8 %v353
        %v355 = vlaneseq
        %v356 = vshrl.u32 %v355, 7
        %v357 = vsub.s32 %v354, %v356
        %v358 = vrot.slane %v350, %v357
        %v360 = vmul.f32 %v241, %v358
        %v362 = vcombine.high %v360, %v360
        %v364 = vsel %vm245, %v360, 0.0
        %v365 = vrot.slane %v364, 4
        %v366 = vadd.f32 %v364, %v365
        %v367 = vrot.slane %v366, 2
        %v368 = vadd.f32 %v366, %v367
        %v369 = vrot.slane %v368, 1
        %v370 = vadd.f32 %v368, %v369
        %v371 = vsel %vm245, %v362, 0.0
        %v372 = vrot.slane %v371, 4
        %v373 = vadd.f32 %v371, %v372
        %v374 = vrot.slane %v373, 2
        %v375 = vadd.f32 %v373, %v374
        %v376 = vrot.slane %v375, 1
        %v377 = vadd.f32 %v375, %v376
        %v378 = vrcp.pop 4.0
        %v379 = vmul.f32 %v370, %v378
        %v380 = vmul.f32 %v377, %v378
        %v381 = vsel %vm245, %v360, -inf
        %v382 = vrot.slane %v381, 4
        %v383 = vmax.f32 %v381, %v382
        %v384 = vrot.slane %v383, 2
        %v385 = vmax.f32 %v383, %v384
        %v386 = vrot.slane %v385, 1
        %v387 = vmax.f32 %v385, %v386
        %v388 = vsel %vm245, %v362, -inf
        %v389 = vrot.slane %v388, 4
        %v390 = vmax.f32 %v388, %v389
        %v391 = vrot.slane %v390, 2
        %v392 = vmax.f32 %v390, %v391
        %v393 = vrot.slane %v392, 1
        %v394 = vmax.f32 %v392, %v393
        %v395 = vlaneseq
        %vm396 = vcmp.ge.s32.totalorder %v395, 0
        %vm397 = vcmp.lt.s32.totalorder %v395, 358
        %vm398 = vmand %vm396, %vm397
        %399 = vst.msk [vmem:[#allocation2] sm:$0x7] %vm398, 0.0
        %400 = vst.msk [vmem:[#allocation2 + $0x3] sm:$0x7] %vm398, 0.0
        %v403 = vcombine.low %v379, %v380
        %v405 = vunpack.c.l.s4 1966171168
        %v406 = vunpack.c.0.s8 %v405
        %v407 = vlaneseq
        %v408 = vshrl.u32 %v407, 7
        %v409 = vsub.s32 %v406, %v408
        %v410 = vrot.slane %v403, %v409
        %v412 = vunpack.c.l.s4 1966171168
        %v413 = vunpack.c.0.s8 %v412
        %v414 = vlaneseq
        %v415 = vshrl.u32 %v414, 7
        %v416 = vsub.s32 %v413, %v415
        %v417 = vrot.slane %v410, %v416
        %418 = vrot.lane.b32.xlu0 %v417, 51
        %v419 = vpop.permute.xlu0 %418
        %v420 = vrot.slane %v419, 7
        %vm421 = vcmask 416768
        %v422 = vsel %vm421, %v420, %v419
        %vm424 = vcmp.ge.s32.totalorder %v395, 51
        %vm425 = vcmp.lt.s32.totalorder %v395, 307
        %vm426 = vmand %vm424, %vm425
        %427 = vst.msk [vmem:[#allocation2] sm:$0x7] %vm426, %v422
        %v430 = vcombine.low %v387, %v394
        %v432 = vunpack.c.l.s4 1966171168
        %v433 = vunpack.c.0.s8 %v432
        %v434 = vlaneseq
        %v435 = vshrl.u32 %v434, 7
        %v436 = vsub.s32 %v433, %v435
        %v437 = vrot.slane %v430, %v436
        %v439 = vunpack.c.l.s4 1966171168
        %v440 = vunpack.c.0.s8 %v439
        %v441 = vlaneseq
        %v442 = vshrl.u32 %v441, 7
        %v443 = vsub.s32 %v440, %v442
        %v444 = vrot.slane %v437, %v443
        %445 = vrot.lane.b32.xlu0 %v444, 51
        %v446 = vpop.permute.xlu0 %445
        %v447 = vrot.slane %v446, 7
        %v448 = vsel %vm421, %v447, %v446
        %s450 = scalar_lea.vmem [#allocation2], 3
        %451 = vst.msk [vmem:[%s450] sm:$0x7] %vm426, %v448
        %v452 = vld [vmem:[#allocation2] sm:$0x7]
        %v453 = vld [vmem:[#allocation2 + $0x3] sm:$0x7]
        %v454 = vadd.s32 %v257, 128
        %vm455 = vcmp.lt.s32.totalorder %v257, 0
        %v456 = vsub.s32 0, %v257
        %v457 = vsel %vm455, %v456, %v257
        %v458 = vshrl.u32 %v457, 4
        %v459 = vand.u32 %v457, 15
        %v460 = vsub.s32 0, %v459
        %v461 = vsel %vm455, %v460, %v459
        %vm462 = vcmp.lt.s32.totalorder %v454, 0
        %v463 = vsub.s32 0, %v454
        %v464 = vsel %vm462, %v463, %v454
        %v465 = vshrl.u32 %v464, 4
        %v466 = vand.u32 %v464, 15
        %v467 = vsub.s32 0, %v466
        %v468 = vsel %vm462, %v467, %v466
        %vm469 = vcmp.ne.s32.totalorder %v461, 0
        %vm470 = vcmp.ne.s32.totalorder %v468, 0
        %vm471 = vcmp.lt.s32.totalorder %v461, 0
        %vm472 = vcmp.lt.s32.totalorder %v468, 0
        %vm473 = vmand %vm471, %vm469
        %vm474 = vmand %vm472, %vm470
        %v475 = vadd.s32 %v461, 16
        %v476 = vadd.s32 %v468, 16
        %v477 = vsel %vm473, %v475, %v461
        %v478 = vsel %vm474, %v476, %v468
        %vm479 = vcmp.ge.s32.totalorder %v477, 3
        %vm480 = vcmp.ge.s32.totalorder %v478, 3
        %vm481 = vcmp.le.s32.totalorder %v477, 18
        %vm482 = vcmp.le.s32.totalorder %v478, 18
        %vm483 = vmand %vm479, %vm481
        %vm484 = vmand %vm480, %vm482
        %vm485 = vcmp.ge.s32.totalorder %v477, 2
        %vm486 = vcmp.ge.s32.totalorder %v478, 2
        %vm487 = vcmp.le.s32.totalorder %v477, 17
        %vm488 = vcmp.le.s32.totalorder %v478, 17
        %vm489 = vmand %vm485, %vm487
        %vm490 = vmand %vm486, %vm488
        %vm491 = vcmp.ge.s32.totalorder %v477, 1
        %vm492 = vcmp.ge.s32.totalorder %v478, 1
        %vm493 = vcmp.le.s32.totalorder %v477, 16
        %vm494 = vcmp.le.s32.totalorder %v478, 16
        %vm495 = vmand %vm491, %vm493
        %vm496 = vmand %vm492, %vm494
        %vm497 = vcmp.ge.s32.totalorder %v477, 0
        %vm498 = vcmp.ge.s32.totalorder %v478, 0
        %vm499 = vcmp.le.s32.totalorder %v477, 15
        %vm500 = vcmp.le.s32.totalorder %v478, 15
        %vm501 = vmand %vm497, %vm499
        %vm502 = vmand %vm498, %vm500
        %vm503 = vcmp.ge.s32.totalorder %v477, 4294967295
        %vm504 = vcmp.ge.s32.totalorder %v478, 4294967295
        %vm505 = vcmp.le.s32.totalorder %v477, 14
        %vm506 = vcmp.le.s32.totalorder %v478, 14
        %vm507 = vmand %vm503, %vm505
        %vm508 = vmand %vm504, %vm506
        %vm509 = vcmp.ge.s32.totalorder %v477, 4294967294
        %vm510 = vcmp.ge.s32.totalorder %v478, 4294967294
        %vm511 = vcmp.le.s32.totalorder %v477, 13
        %vm512 = vcmp.le.s32.totalorder %v478, 13
        %vm513 = vmand %vm509, %vm511
        %vm514 = vmand %vm510, %vm512
        %vm515 = vcmp.ge.s32.totalorder %v477, 4294967293
        %vm516 = vcmp.ge.s32.totalorder %v478, 4294967293
        %vm517 = vcmp.le.s32.totalorder %v477, 12
        %vm518 = vcmp.le.s32.totalorder %v478, 12
        %vm519 = vmand %vm515, %vm517
        %vm520 = vmand %vm516, %vm518
        %s521 = sld [smem:[#allocation9]]
        %v522 = vstv %s521
        %v523 = vmul.f32 %v522, %v452
        %s524 = sld [smem:[#allocation9 + $0x80]]
        %v525 = vstv %s524
        %v526 = vmul.f32 %v525, %v453
        %v527 = vadd.f32 %v523, %v526
        %v529 = vlaneseq
        %v530 = vshrl.u32 %v529, 7
        %v531 = vsub.s32 0, %v530
        %v532 = vrot.slane %v527, %v531
        %v533 = vlaneseq
        %v534 = vshrl.u32 %v533, 7
        %v535 = vsub.s32 1, %v534
        %v536 = vrot.slane %v527, %v535
        %v539 = vsel %vm483, %v532, 0.0
        %v540 = vsel %vm484, %v536, 0.0
        %v541 = vadd.f32 %v539, 0.0
        %v542 = vadd.f32 %v540, 0.0
        %s543 = sld [smem:[#allocation9 + $0x1]]
        %v544 = vstv %s543
        %v545 = vmul.f32 %v544, %v452
        %s546 = sld [smem:[#allocation9 + $0x81]]
        %v547 = vstv %s546
        %v548 = vmul.f32 %v547, %v453
        %v549 = vadd.f32 %v545, %v548
        %v551 = vlaneseq
        %v552 = vshrl.u32 %v551, 7
        %v553 = vsub.s32 0, %v552
        %v554 = vrot.slane %v549, %v553
        %v555 = vlaneseq
        %v556 = vshrl.u32 %v555, 7
        %v557 = vsub.s32 1, %v556
        %v558 = vrot.slane %v549, %v557
        %v559 = vlaneseq
        %v560 = vshrl.u32 %v559, 7
        %v561 = vsub.s32 2, %v560
        %v562 = vrot.slane %v549, %v561
        %563 = vrot.lane.b32.xlu0 %v554, 127
        %v564 = vpop.permute.xlu0 %563
        %565 = vrot.lane.b32.xlu0 %v558, 127
        %v566 = vpop.permute.xlu0 %565
        %567 = vrot.lane.b32.xlu0 %v562, 127
        %v568 = vpop.permute.xlu0 %567
        %vm569 = vcmask 1039360
        %v570 = vsel %vm569, %v564, %v566
        %v571 = vsel %vm569, %v566, %v568
        %v574 = vsel %vm489, %v570, 0.0
        %v575 = vsel %vm490, %v571, 0.0
        %v576 = vadd.f32 %v541, %v574
        %v577 = vadd.f32 %v542, %v575
        %s578 = sld [smem:[#allocation9 + $0x2]]
        %v579 = vstv %s578
        %v580 = vmul.f32 %v579, %v452
        %s581 = sld [smem:[#allocation9 + $0x82]]
        %v582 = vstv %s581
        %v583 = vmul.f32 %v582, %v453
        %v584 = vadd.f32 %v580, %v583
        %v586 = vlaneseq
        %v587 = vshrl.u32 %v586, 7
        %v588 = vsub.s32 0, %v587
        %v589 = vrot.slane %v584, %v588
        %v590 = vlaneseq
        %v591 = vshrl.u32 %v590, 7
        %v592 = vsub.s32 1, %v591
        %v593 = vrot.slane %v584, %v592
        %v594 = vlaneseq
        %v595 = vshrl.u32 %v594, 7
        %v596 = vsub.s32 2, %v595
        %v597 = vrot.slane %v584, %v596
        %598 = vrot.lane.b32.xlu0 %v589, 126
        %v599 = vpop.permute.xlu0 %598
        %600 = vrot.lane.b32.xlu0 %v593, 126
        %v601 = vpop.permute.xlu0 %600
        %602 = vrot.lane.b32.xlu0 %v597, 126
        %v603 = vpop.permute.xlu0 %602
        %vm604 = vcmask 1031168
        %v605 = vsel %vm604, %v599, %v601
        %v606 = vsel %vm604, %v601, %v603
        %v609 = vsel %vm495, %v605, 0.0
        %v610 = vsel %vm496, %v606, 0.0
        %v611 = vadd.f32 %v576, %v609
        %v612 = vadd.f32 %v577, %v610
        %s613 = sld [smem:[#allocation9 + $0x3]]
        %v614 = vstv %s613
        %v615 = vmul.f32 %v614, %v452
        %s616 = sld [smem:[#allocation9 + $0x83]]
        %v617 = vstv %s616
        %v618 = vmul.f32 %v617, %v453
        %v619 = vadd.f32 %v615, %v618
        %v621 = vlaneseq
        %v622 = vshrl.u32 %v621, 7
        %v623 = vsub.s32 0, %v622
        %v624 = vrot.slane %v619, %v623
        %v625 = vlaneseq
        %v626 = vshrl.u32 %v625, 7
        %v627 = vsub.s32 1, %v626
        %v628 = vrot.slane %v619, %v627
        %v629 = vlaneseq
        %v630 = vshrl.u32 %v629, 7
        %v631 = vsub.s32 2, %v630
        %v632 = vrot.slane %v619, %v631
        %633 = vrot.lane.b32.xlu0 %v624, 125
        %v634 = vpop.permute.xlu0 %633
        %635 = vrot.lane.b32.xlu0 %v628, 125
        %v636 = vpop.permute.xlu0 %635
        %637 = vrot.lane.b32.xlu0 %v632, 125
        %v638 = vpop.permute.xlu0 %637
        %vm639 = vcmask 1022976
        %v640 = vsel %vm639, %v634, %v636
        %v641 = vsel %vm639, %v636, %v638
        %v644 = vsel %vm501, %v640, 0.0
        %v645 = vsel %vm502, %v641, 0.0
        %v646 = vadd.f32 %v611, %v644
        %v647 = vadd.f32 %v612, %v645
        %s648 = sld [smem:[#allocation9 + $0x4]]
        %v649 = vstv %s648
        %v650 = vmul.f32 %v649, %v452
        %s651 = sld [smem:[#allocation9 + $0x84]]
        %v652 = vstv %s651
        %v653 = vmul.f32 %v652, %v453
        %v654 = vadd.f32 %v650, %v653
        %v656 = vlaneseq
        %v657 = vshrl.u32 %v656, 7
        %v658 = vsub.s32 0, %v657
        %v659 = vrot.slane %v654, %v658
        %v660 = vlaneseq
        %v661 = vshrl.u32 %v660, 7
        %v662 = vsub.s32 1, %v661
        %v663 = vrot.slane %v654, %v662
        %v664 = vlaneseq
        %v665 = vshrl.u32 %v664, 7
        %v666 = vsub.s32 2, %v665
        %v667 = vrot.slane %v654, %v666
        %668 = vrot.lane.b32.xlu0 %v659, 124
        %v669 = vpop.permute.xlu0 %668
        %670 = vrot.lane.b32.xlu0 %v663, 124
        %v671 = vpop.permute.xlu0 %670
        %672 = vrot.lane.b32.xlu0 %v667, 124
        %v673 = vpop.permute.xlu0 %672
        %vm674 = vcmask 1014784
        %v675 = vsel %vm674, %v669, %v671
        %v676 = vsel %vm674, %v671, %v673
        %v679 = vsel %vm507, %v675, 0.0
        %v680 = vsel %vm508, %v676, 0.0
        %v681 = vadd.f32 %v646, %v679
        %v682 = vadd.f32 %v647, %v680
        %s683 = sld [smem:[#allocation9 + $0x5]]
        %v684 = vstv %s683
        %v685 = vmul.f32 %v684, %v452
        %s686 = sld [smem:[#allocation9 + $0x85]]
        %v687 = vstv %s686
        %v688 = vmul.f32 %v687, %v453
        %v689 = vadd.f32 %v685, %v688
        %v691 = vlaneseq
        %v692 = vshrl.u32 %v691, 7
        %v693 = vsub.s32 0, %v692
        %v694 = vrot.slane %v689, %v693
        %v695 = vlaneseq
        %v696 = vshrl.u32 %v695, 7
        %v697 = vsub.s32 1, %v696
        %v698 = vrot.slane %v689, %v697
        %v699 = vlaneseq
        %v700 = vshrl.u32 %v699, 7
        %v701 = vsub.s32 2, %v700
        %v702 = vrot.slane %v689, %v701
        %703 = vrot.lane.b32.xlu0 %v694, 123
        %v704 = vpop.permute.xlu0 %703
        %705 = vrot.lane.b32.xlu0 %v698, 123
        %v706 = vpop.permute.xlu0 %705
        %707 = vrot.lane.b32.xlu0 %v702, 123
        %v708 = vpop.permute.xlu0 %707
        %vm709 = vcmask 1006592
        %v710 = vsel %vm709, %v704, %v706
        %v711 = vsel %vm709, %v706, %v708
        %v714 = vsel %vm513, %v710, 0.0
        %v715 = vsel %vm514, %v711, 0.0
        %v716 = vadd.f32 %v681, %v714
        %v717 = vadd.f32 %v682, %v715
        %s718 = sld [smem:[#allocation9 + $0x6]]
        %v719 = vstv %s718
        %v720 = vmul.f32 %v719, %v452
        %s721 = sld [smem:[#allocation9 + $0x86]]
        %v722 = vstv %s721
        %v723 = vmul.f32 %v722, %v453
        %v724 = vadd.f32 %v720, %v723
        %v726 = vlaneseq
        %v727 = vshrl.u32 %v726, 7
        %v728 = vsub.s32 0, %v727
        %v729 = vrot.slane %v724, %v728
        %v730 = vlaneseq
        %v731 = vshrl.u32 %v730, 7
        %v732 = vsub.s32 1, %v731
        %v733 = vrot.slane %v724, %v732
        %v734 = vlaneseq
        %v735 = vshrl.u32 %v734, 7
        %v736 = vsub.s32 2, %v735
        %v737 = vrot.slane %v724, %v736
        %738 = vrot.lane.b32.xlu0 %v729, 122
        %v739 = vpop.permute.xlu0 %738
        %740 = vrot.lane.b32.xlu0 %v733, 122
        %v741 = vpop.permute.xlu0 %740
        %742 = vrot.lane.b32.xlu0 %v737, 122
        %v743 = vpop.permute.xlu0 %742
        %vm744 = vcmask 998400
        %v745 = vsel %vm744, %v739, %v741
        %v746 = vsel %vm744, %v741, %v743
        %v749 = vsel %vm519, %v745, 0.0
        %v750 = vsel %vm520, %v746, 0.0
        %v751 = vadd.f32 %v716, %v749
        %v752 = vadd.f32 %v717, %v750
        %s753 = sld [smem:[#allocation9 + $0x7]]
        %v754 = vstv %s753
        %v755 = vmul.f32 %v754, %v452
        %s756 = sld [smem:[#allocation9 + $0x87]]
        %v757 = vstv %s756
        %v758 = vmul.f32 %v757, %v453
        %v759 = vadd.f32 %v755, %v758
        %v761 = vlaneseq
        %v762 = vshrl.u32 %v761, 7
        %v763 = vsub.s32 0, %v762
        %v764 = vrot.slane %v759, %v763
        %v765 = vlaneseq
        %v766 = vshrl.u32 %v765, 7
        %v767 = vsub.s32 1, %v766
        %v768 = vrot.slane %v759, %v767
        %v769 = vlaneseq
        %v770 = vshrl.u32 %v769, 7
        %v771 = vsub.s32 2, %v770
        %v772 = vrot.slane %v759, %v771
        %773 = vrot.lane.b32.xlu0 %v764, 112
        %v774 = vpop.permute.xlu0 %773
        %775 = vrot.lane.b32.xlu0 %v768, 112
        %v776 = vpop.permute.xlu0 %775
        %777 = vrot.lane.b32.xlu0 %v772, 112
        %v778 = vpop.permute.xlu0 %777
        %vm779 = vcmask 916480
        %v780 = vsel %vm779, %v774, %v776
        %v781 = vsel %vm779, %v776, %v778
        %v784 = vsel %vm483, %v780, 0.0
        %v785 = vsel %vm484, %v781, 0.0
        %v786 = vadd.f32 %v751, %v784
        %v787 = vadd.f32 %v752, %v785
        %s788 = sld [smem:[#allocation9 + $0x8]]
        %v789 = vstv %s788
        %v790 = vmul.f32 %v789, %v452
        %s791 = sld [smem:[#allocation9 + $0x88]]
        %v792 = vstv %s791
        %v793 = vmul.f32 %v792, %v453
        %v794 = vadd.f32 %v790, %v793
        %v796 = vlaneseq
        %v797 = vshrl.u32 %v796, 7
        %v798 = vsub.s32 0, %v797
        %v799 = vrot.slane %v794, %v798
        %v800 = vlaneseq
        %v801 = vshrl.u32 %v800, 7
        %v802 = vsub.s32 1, %v801
        %v803 = vrot.slane %v794, %v802
        %v804 = vlaneseq
        %v805 = vshrl.u32 %v804, 7
        %v806 = vsub.s32 2, %v805
        %v807 = vrot.slane %v794, %v806
        %808 = vrot.lane.b32.xlu0 %v799, 111
        %v809 = vpop.permute.xlu0 %808
        %810 = vrot.lane.b32.xlu0 %v803, 111
        %v811 = vpop.permute.xlu0 %810
        %812 = vrot.lane.b32.xlu0 %v807, 111
        %v813 = vpop.permute.xlu0 %812
        %vm814 = vcmask 908288
        %v815 = vsel %vm814, %v809, %v811
        %v816 = vsel %vm814, %v811, %v813
        %v819 = vsel %vm489, %v815, 0.0
        %v820 = vsel %vm490, %v816, 0.0
        %v821 = vadd.f32 %v786, %v819
        %v822 = vadd.f32 %v787, %v820
        %s823 = sld [smem:[#allocation9 + $0x9]]
        %v824 = vstv %s823
        %v825 = vmul.f32 %v824, %v452
        %s826 = sld [smem:[#allocation9 + $0x89]]
        %v827 = vstv %s826
        %v828 = vmul.f32 %v827, %v453
        %v829 = vadd.f32 %v825, %v828
        %v831 = vlaneseq
        %v832 = vshrl.u32 %v831, 7
        %v833 = vsub.s32 0, %v832
        %v834 = vrot.slane %v829, %v833
        %v835 = vlaneseq
        %v836 = vshrl.u32 %v835, 7
        %v837 = vsub.s32 1, %v836
        %v838 = vrot.slane %v829, %v837
        %v839 = vlaneseq
        %v840 = vshrl.u32 %v839, 7
        %v841 = vsub.s32 2, %v840
        %v842 = vrot.slane %v829, %v841
        %843 = vrot.lane.b32.xlu0 %v834, 110
        %v844 = vpop.permute.xlu0 %843
        %845 = vrot.lane.b32.xlu0 %v838, 110
        %v846 = vpop.permute.xlu0 %845
        %847 = vrot.lane.b32.xlu0 %v842, 110
        %v848 = vpop.permute.xlu0 %847
        %vm849 = vcmask 900096
        %v850 = vsel %vm849, %v844, %v846
        %v851 = vsel %vm849, %v846, %v848
        %v854 = vsel %vm495, %v850, 0.0
        %v855 = vsel %vm496, %v851, 0.0
        %v856 = vadd.f32 %v821, %v854
        %v857 = vadd.f32 %v822, %v855
        %s858 = sld [smem:[#allocation9 + $0xa]]
        %v859 = vstv %s858
        %v860 = vmul.f32 %v859, %v452
        %s861 = sld [smem:[#allocation9 + $0x8a]]
        %v862 = vstv %s861
        %v863 = vmul.f32 %v862, %v453
        %v864 = vadd.f32 %v860, %v863
        %v866 = vlaneseq
        %v867 = vshrl.u32 %v866, 7
        %v868 = vsub.s32 0, %v867
        %v869 = vrot.slane %v864, %v868
        %v870 = vlaneseq
        %v871 = vshrl.u32 %v870, 7
        %v872 = vsub.s32 1, %v871
        %v873 = vrot.slane %v864, %v872
        %v874 = vlaneseq
        %v875 = vshrl.u32 %v874, 7
        %v876 = vsub.s32 2, %v875
        %v877 = vrot.slane %v864, %v876
        %878 = vrot.lane.b32.xlu0 %v869, 109
        %v879 = vpop.permute.xlu0 %878
        %880 = vrot.lane.b32.xlu0 %v873, 109
        %v881 = vpop.permute.xlu0 %880
        %882 = vrot.lane.b32.xlu0 %v877, 109
        %v883 = vpop.permute.xlu0 %882
        %vm884 = vcmask 891904
        %v885 = vsel %vm884, %v879, %v881
        %v886 = vsel %vm884, %v881, %v883
        %v889 = vsel %vm501, %v885, 0.0
        %v890 = vsel %vm502, %v886, 0.0
        %v891 = vadd.f32 %v856, %v889
        %v892 = vadd.f32 %v857, %v890
        %s893 = sld [smem:[#allocation9 + $0xb]]
        %v894 = vstv %s893
        %v895 = vmul.f32 %v894, %v452
        %s896 = sld [smem:[#allocation9 + $0x8b]]
        %v897 = vstv %s896
        %v898 = vmul.f32 %v897, %v453
        %v899 = vadd.f32 %v895, %v898
        %v901 = vlaneseq
        %v902 = vshrl.u32 %v901, 7
        %v903 = vsub.s32 0, %v902
        %v904 = vrot.slane %v899, %v903
        %v905 = vlaneseq
        %v906 = vshrl.u32 %v905, 7
        %v907 = vsub.s32 1, %v906
        %v908 = vrot.slane %v899, %v907
        %v909 = vlaneseq
        %v910 = vshrl.u32 %v909, 7
        %v911 = vsub.s32 2, %v910
        %v912 = vrot.slane %v899, %v911
        %913 = vrot.lane.b32.xlu0 %v904, 108
        %v914 = vpop.permute.xlu0 %913
        %915 = vrot.lane.b32.xlu0 %v908, 108
        %v916 = vpop.permute.xlu0 %915
        %917 = vrot.lane.b32.xlu0 %v912, 108
        %v918 = vpop.permute.xlu0 %917
        %vm919 = vcmask 883712
        %v920 = vsel %vm919, %v914, %v916
        %v921 = vsel %vm919, %v916, %v918
        %v924 = vsel %vm507, %v920, 0.0
        %v925 = vsel %vm508, %v921, 0.0
        %v926 = vadd.f32 %v891, %v924
        %v927 = vadd.f32 %v892, %v925
        %s928 = sld [smem:[#allocation9 + $0xc]]
        %v929 = vstv %s928
        %v930 = vmul.f32 %v929, %v452
        %s931 = sld [smem:[#allocation9 + $0x8c]]
        %v932 = vstv %s931
        %v933 = vmul.f32 %v932, %v453
        %v934 = vadd.f32 %v930, %v933
        %v936 = vlaneseq
        %v937 = vshrl.u32 %v936, 7
        %v938 = vsub.s32 0, %v937
        %v939 = vrot.slane %v934, %v938
        %v940 = vlaneseq
        %v941 = vshrl.u32 %v940, 7
        %v942 = vsub.s32 1, %v941
        %v943 = vrot.slane %v934, %v942
        %v944 = vlaneseq
        %v945 = vshrl.u32 %v944, 7
        %v946 = vsub.s32 2, %v945
        %v947 = vrot.slane %v934, %v946
        %948 = vrot.lane.b32.xlu0 %v939, 107
        %v949 = vpop.permute.xlu0 %948
        %950 = vrot.lane.b32.xlu0 %v943, 107
        %v951 = vpop.permute.xlu0 %950
        %952 = vrot.lane.b32.xlu0 %v947, 107
        %v953 = vpop.permute.xlu0 %952
        %vm954 = vcmask 875520
        %v955 = vsel %vm954, %v949, %v951
        %v956 = vsel %vm954, %v951, %v953
        %v959 = vsel %vm513, %v955, 0.0
        %v960 = vsel %vm514, %v956, 0.0
        %v961 = vadd.f32 %v926, %v959
        %v962 = vadd.f32 %v927, %v960
        %s963 = sld [smem:[#allocation9 + $0xd]]
        %v964 = vstv %s963
        %v965 = vmul.f32 %v964, %v452
        %s966 = sld [smem:[#allocation9 + $0x8d]]
        %v967 = vstv %s966
        %v968 = vmul.f32 %v967, %v453
        %v969 = vadd.f32 %v965, %v968
        %v971 = vlaneseq
        %v972 = vshrl.u32 %v971, 7
        %v973 = vsub.s32 0, %v972
        %v974 = vrot.slane %v969, %v973
        %v975 = vlaneseq
        %v976 = vshrl.u32 %v975, 7
        %v977 = vsub.s32 1, %v976
        %v978 = vrot.slane %v969, %v977
        %v979 = vlaneseq
        %v980 = vshrl.u32 %v979, 7
        %v981 = vsub.s32 2, %v980
        %v982 = vrot.slane %v969, %v981
        %983 = vrot.lane.b32.xlu0 %v974, 106
        %v984 = vpop.permute.xlu0 %983
        %985 = vrot.lane.b32.xlu0 %v978, 106
        %v986 = vpop.permute.xlu0 %985
        %987 = vrot.lane.b32.xlu0 %v982, 106
        %v988 = vpop.permute.xlu0 %987
        %vm989 = vcmask 867328
        %v990 = vsel %vm989, %v984, %v986
        %v991 = vsel %vm989, %v986, %v988
        %v994 = vsel %vm519, %v990, 0.0
        %v995 = vsel %vm520, %v991, 0.0
        %v996 = vadd.f32 %v961, %v994
        %v997 = vadd.f32 %v962, %v995
        %s998 = sld [smem:[#allocation9 + $0xe]]
        %v999 = vstv %s998
        %v1000 = vmul.f32 %v999, %v452
        %s1001 = sld [smem:[#allocation9 + $0x8e]]
        %v1002 = vstv %s1001
        %v1003 = vmul.f32 %v1002, %v453
        %v1004 = vadd.f32 %v1000, %v1003
        %v1006 = vlaneseq
        %v1007 = vshrl.u32 %v1006, 7
        %v1008 = vsub.s32 0, %v1007
        %v1009 = vrot.slane %v1004, %v1008
        %v1010 = vlaneseq
        %v1011 = vshrl.u32 %v1010, 7
        %v1012 = vsub.s32 1, %v1011
        %v1013 = vrot.slane %v1004, %v1012
        %v1014 = vlaneseq
        %v1015 = vshrl.u32 %v1014, 7
        %v1016 = vsub.s32 2, %v1015
        %v1017 = vrot.slane %v1004, %v1016
        %1018 = vrot.lane.b32.xlu0 %v1009, 96
        %v1019 = vpop.permute.xlu0 %1018
        %1020 = vrot.lane.b32.xlu0 %v1013, 96
        %v1021 = vpop.permute.xlu0 %1020
        %1022 = vrot.lane.b32.xlu0 %v1017, 96
        %v1023 = vpop.permute.xlu0 %1022
        %vm1024 = vcmask 785408
        %v1025 = vsel %vm1024, %v1019, %v1021
        %v1026 = vsel %vm1024, %v1021, %v1023
        %v1029 = vsel %vm483, %v1025, 0.0
        %v1030 = vsel %vm484, %v1026, 0.0
        %v1031 = vadd.f32 %v996, %v1029
        %v1032 = vadd.f32 %v997, %v1030
        %s1033 = sld [smem:[#allocation9 + $0xf]]
        %v1034 = vstv %s1033
        %v1035 = vmul.f32 %v1034, %v452
        %s1036 = sld [smem:[#allocation9 + $0x8f]]
        %v1037 = vstv %s1036
        %v1038 = vmul.f32 %v1037, %v453
        %v1039 = vadd.f32 %v1035, %v1038
        %v1041 = vlaneseq
        %v1042 = vshrl.u32 %v1041, 7
        %v1043 = vsub.s32 0, %v1042
        %v1044 = vrot.slane %v1039, %v1043
        %v1045 = vlaneseq
        %v1046 = vshrl.u32 %v1045, 7
        %v1047 = vsub.s32 1, %v1046
        %v1048 = vrot.slane %v1039, %v1047
        %v1049 = vlaneseq
        %v1050 = vshrl.u32 %v1049, 7
        %v1051 = vsub.s32 2, %v1050
        %v1052 = vrot.slane %v1039, %v1051
        %1053 = vrot.lane.b32.xlu0 %v1044, 95
        %v1054 = vpop.permute.xlu0 %1053
        %1055 = vrot.lane.b32.xlu0 %v1048, 95
        %v1056 = vpop.permute.xlu0 %1055
        %1057 = vrot.lane.b32.xlu0 %v1052, 95
        %v1058 = vpop.permute.xlu0 %1057
        %vm1059 = vcmask 777216
        %v1060 = vsel %vm1059, %v1054, %v1056
        %v1061 = vsel %vm1059, %v1056, %v1058
        %v1064 = vsel %vm489, %v1060, 0.0
        %v1065 = vsel %vm490, %v1061, 0.0
        %v1066 = vadd.f32 %v1031, %v1064
        %v1067 = vadd.f32 %v1032, %v1065
        %s1068 = sld [smem:[#allocation9 + $0x10]]
        %v1069 = vstv %s1068
        %v1070 = vmul.f32 %v1069, %v452
        %s1071 = sld [smem:[#allocation9 + $0x90]]
        %v1072 = vstv %s1071
        %v1073 = vmul.f32 %v1072, %v453
        %v1074 = vadd.f32 %v1070, %v1073
        %v1076 = vlaneseq
        %v1077 = vshrl.u32 %v1076, 7
        %v1078 = vsub.s32 0, %v1077
        %v1079 = vrot.slane %v1074, %v1078
        %v1080 = vlaneseq
        %v1081 = vshrl.u32 %v1080, 7
        %v1082 = vsub.s32 1, %v1081
        %v1083 = vrot.slane %v1074, %v1082
        %v1084 = vlaneseq
        %v1085 = vshrl.u32 %v1084, 7
        %v1086 = vsub.s32 2, %v1085
        %v1087 = vrot.slane %v1074, %v1086
        %1088 = vrot.lane.b32.xlu0 %v1079, 94
        %v1089 = vpop.permute.xlu0 %1088
        %1090 = vrot.lane.b32.xlu0 %v1083, 94
        %v1091 = vpop.permute.xlu0 %1090
        %1092 = vrot.lane.b32.xlu0 %v1087, 94
        %v1093 = vpop.permute.xlu0 %1092
        %vm1094 = vcmask 769024
        %v1095 = vsel %vm1094, %v1089, %v1091
        %v1096 = vsel %vm1094, %v1091, %v1093
        %v1099 = vsel %vm495, %v1095, 0.0
        %v1100 = vsel %vm496, %v1096, 0.0
        %v1101 = vadd.f32 %v1066, %v1099
        %v1102 = vadd.f32 %v1067, %v1100
        %s1103 = sld [smem:[#allocation9 + $0x11]]
        %v1104 = vstv %s1103
        %v1105 = vmul.f32 %v1104, %v452
        %s1106 = sld [smem:[#allocation9 + $0x91]]
        %v1107 = vstv %s1106
        %v1108 = vmul.f32 %v1107, %v453
        %v1109 = vadd.f32 %v1105, %v1108
        %v1111 = vlaneseq
        %v1112 = vshrl.u32 %v1111, 7
        %v1113 = vsub.s32 0, %v1112
        %v1114 = vrot.slane %v1109, %v1113
        %v1115 = vlaneseq
        %v1116 = vshrl.u32 %v1115, 7
        %v1117 = vsub.s32 1, %v1116
        %v1118 = vrot.slane %v1109, %v1117
        %v1119 = vlaneseq
        %v1120 = vshrl.u32 %v1119, 7
        %v1121 = vsub.s32 2, %v1120
        %v1122 = vrot.slane %v1109, %v1121
        %1123 = vrot.lane.b32.xlu0 %v1114, 93
        %v1124 = vpop.permute.xlu0 %1123
        %1125 = vrot.lane.b32.xlu0 %v1118, 93
        %v1126 = vpop.permute.xlu0 %1125
        %1127 = vrot.lane.b32.xlu0 %v1122, 93
        %v1128 = vpop.permute.xlu0 %1127
        %vm1129 = vcmask 760832
        %v1130 = vsel %vm1129, %v1124, %v1126
        %v1131 = vsel %vm1129, %v1126, %v1128
        %v1134 = vsel %vm501, %v1130, 0.0
        %v1135 = vsel %vm502, %v1131, 0.0
        %v1136 = vadd.f32 %v1101, %v1134
        %v1137 = vadd.f32 %v1102, %v1135
        %s1138 = sld [smem:[#allocation9 + $0x12]]
        %v1139 = vstv %s1138
        %v1140 = vmul.f32 %v1139, %v452
        %s1141 = sld [smem:[#allocation9 + $0x92]]
        %v1142 = vstv %s1141
        %v1143 = vmul.f32 %v1142, %v453
        %v1144 = vadd.f32 %v1140, %v1143
        %v1146 = vlaneseq
        %v1147 = vshrl.u32 %v1146, 7
        %v1148 = vsub.s32 0, %v1147
        %v1149 = vrot.slane %v1144, %v1148
        %v1150 = vlaneseq
        %v1151 = vshrl.u32 %v1150, 7
        %v1152 = vsub.s32 1, %v1151
        %v1153 = vrot.slane %v1144, %v1152
        %v1154 = vlaneseq
        %v1155 = vshrl.u32 %v1154, 7
        %v1156 = vsub.s32 2, %v1155
        %v1157 = vrot.slane %v1144, %v1156
        %1158 = vrot.lane.b32.xlu0 %v1149, 92
        %v1159 = vpop.permute.xlu0 %1158
        %1160 = vrot.lane.b32.xlu0 %v1153, 92
        %v1161 = vpop.permute.xlu0 %1160
        %1162 = vrot.lane.b32.xlu0 %v1157, 92
        %v1163 = vpop.permute.xlu0 %1162
        %vm1164 = vcmask 752640
        %v1165 = vsel %vm1164, %v1159, %v1161
        %v1166 = vsel %vm1164, %v1161, %v1163
        %v1169 = vsel %vm507, %v1165, 0.0
        %v1170 = vsel %vm508, %v1166, 0.0
        %v1171 = vadd.f32 %v1136, %v1169
        %v1172 = vadd.f32 %v1137, %v1170
        %s1173 = sld [smem:[#allocation9 + $0x13]]
        %v1174 = vstv %s1173
        %v1175 = vmul.f32 %v1174, %v452
        %s1176 = sld [smem:[#allocation9 + $0x93]]
        %v1177 = vstv %s1176
        %v1178 = vmul.f32 %v1177, %v453
        %v1179 = vadd.f32 %v1175, %v1178
        %v1181 = vlaneseq
        %v1182 = vshrl.u32 %v1181, 7
        %v1183 = vsub.s32 0, %v1182
        %v1184 = vrot.slane %v1179, %v1183
        %v1185 = vlaneseq
        %v1186 = vshrl.u32 %v1185, 7
        %v1187 = vsub.s32 1, %v1186
        %v1188 = vrot.slane %v1179, %v1187
        %v1189 = vlaneseq
        %v1190 = vshrl.u32 %v1189, 7
        %v1191 = vsub.s32 2, %v1190
        %v1192 = vrot.slane %v1179, %v1191
        %1193 = vrot.lane.b32.xlu0 %v1184, 91
        %v1194 = vpop.permute.xlu0 %1193
        %1195 = vrot.lane.b32.xlu0 %v1188, 91
        %v1196 = vpop.permute.xlu0 %1195
        %1197 = vrot.lane.b32.xlu0 %v1192, 91
        %v1198 = vpop.permute.xlu0 %1197
        %vm1199 = vcmask 744448
        %v1200 = vsel %vm1199, %v1194, %v1196
        %v1201 = vsel %vm1199, %v1196, %v1198
        %v1204 = vsel %vm513, %v1200, 0.0
        %v1205 = vsel %vm514, %v1201, 0.0
        %v1206 = vadd.f32 %v1171, %v1204
        %v1207 = vadd.f32 %v1172, %v1205
        %s1208 = sld [smem:[#allocation9 + $0x14]]
        %v1209 = vstv %s1208
        %v1210 = vmul.f32 %v1209, %v452
        %s1211 = sld [smem:[#allocation9 + $0x94]]
        %v1212 = vstv %s1211
        %v1213 = vmul.f32 %v1212, %v453
        %v1214 = vadd.f32 %v1210, %v1213
        %v1216 = vlaneseq
        %v1217 = vshrl.u32 %v1216, 7
        %v1218 = vsub.s32 0, %v1217
        %v1219 = vrot.slane %v1214, %v1218
        %v1220 = vlaneseq
        %v1221 = vshrl.u32 %v1220, 7
        %v1222 = vsub.s32 1, %v1221
        %v1223 = vrot.slane %v1214, %v1222
        %v1224 = vlaneseq
        %v1225 = vshrl.u32 %v1224, 7
        %v1226 = vsub.s32 2, %v1225
        %v1227 = vrot.slane %v1214, %v1226
        %1228 = vrot.lane.b32.xlu0 %v1219, 90
        %v1229 = vpop.permute.xlu0 %1228
        %1230 = vrot.lane.b32.xlu0 %v1223, 90
        %v1231 = vpop.permute.xlu0 %1230
        %1232 = vrot.lane.b32.xlu0 %v1227, 90
        %v1233 = vpop.permute.xlu0 %1232
        %vm1234 = vcmask 736256
        %v1235 = vsel %vm1234, %v1229, %v1231
        %v1236 = vsel %vm1234, %v1231, %v1233
        %v1239 = vsel %vm519, %v1235, 0.0
        %v1240 = vsel %vm520, %v1236, 0.0
        %v1241 = vadd.f32 %v1206, %v1239
        %v1242 = vadd.f32 %v1207, %v1240
        %s1243 = sld [smem:[#allocation9 + $0x15]]
        %v1244 = vstv %s1243
        %v1245 = vmul.f32 %v1244, %v452
        %s1246 = sld [smem:[#allocation9 + $0x95]]
        %v1247 = vstv %s1246
        %v1248 = vmul.f32 %v1247, %v453
        %v1249 = vadd.f32 %v1245, %v1248
        %v1251 = vlaneseq
        %v1252 = vshrl.u32 %v1251, 7
        %v1253 = vsub.s32 0, %v1252
        %v1254 = vrot.slane %v1249, %v1253
        %v1255 = vlaneseq
        %v1256 = vshrl.u32 %v1255, 7
        %v1257 = vsub.s32 1, %v1256
        %v1258 = vrot.slane %v1249, %v1257
        %v1259 = vlaneseq
        %v1260 = vshrl.u32 %v1259, 7
        %v1261 = vsub.s32 2, %v1260
        %v1262 = vrot.slane %v1249, %v1261
        %1263 = vrot.lane.b32.xlu0 %v1254, 80
        %v1264 = vpop.permute.xlu0 %1263
        %1265 = vrot.lane.b32.xlu0 %v1258, 80
        %v1266 = vpop.permute.xlu0 %1265
        %1267 = vrot.lane.b32.xlu0 %v1262, 80
        %v1268 = vpop.permute.xlu0 %1267
        %vm1269 = vcmask 654336
        %v1270 = vsel %vm1269, %v1264, %v1266
        %v1271 = vsel %vm1269, %v1266, %v1268
        %v1274 = vsel %vm483, %v1270, 0.0
        %v1275 = vsel %vm484, %v1271, 0.0
        %v1276 = vadd.f32 %v1241, %v1274
        %v1277 = vadd.f32 %v1242, %v1275
        %s1278 = sld [smem:[#allocation9 + $0x16]]
        %v1279 = vstv %s1278
        %v1280 = vmul.f32 %v1279, %v452
        %s1281 = sld [smem:[#allocation9 + $0x96]]
        %v1282 = vstv %s1281
        %v1283 = vmul.f32 %v1282, %v453
        %v1284 = vadd.f32 %v1280, %v1283
        %v1286 = vlaneseq
        %v1287 = vshrl.u32 %v1286, 7
        %v1288 = vsub.s32 0, %v1287
        %v1289 = vrot.slane %v1284, %v1288
        %v1290 = vlaneseq
        %v1291 = vshrl.u32 %v1290, 7
        %v1292 = vsub.s32 1, %v1291
        %v1293 = vrot.slane %v1284, %v1292
        %v1294 = vlaneseq
        %v1295 = vshrl.u32 %v1294, 7
        %v1296 = vsub.s32 2, %v1295
        %v1297 = vrot.slane %v1284, %v1296
        %1298 = vrot.lane.b32.xlu0 %v1289, 79
        %v1299 = vpop.permute.xlu0 %1298
        %1300 = vrot.lane.b32.xlu0 %v1293, 79
        %v1301 = vpop.permute.xlu0 %1300
        %1302 = vrot.lane.b32.xlu0 %v1297, 79
        %v1303 = vpop.permute.xlu0 %1302
        %vm1304 = vcmask 646144
        %v1305 = vsel %vm1304, %v1299, %v1301
        %v1306 = vsel %vm1304, %v1301, %v1303
        %v1309 = vsel %vm489, %v1305, 0.0
        %v1310 = vsel %vm490, %v1306, 0.0
        %v1311 = vadd.f32 %v1276, %v1309
        %v1312 = vadd.f32 %v1277, %v1310
        %s1313 = sld [smem:[#allocation9 + $0x17]]
        %v1314 = vstv %s1313
        %v1315 = vmul.f32 %v1314, %v452
        %s1316 = sld [smem:[#allocation9 + $0x97]]
        %v1317 = vstv %s1316
        %v1318 = vmul.f32 %v1317, %v453
        %v1319 = vadd.f32 %v1315, %v1318
        %v1321 = vlaneseq
        %v1322 = vshrl.u32 %v1321, 7
        %v1323 = vsub.s32 0, %v1322
        %v1324 = vrot.slane %v1319, %v1323
        %v1325 = vlaneseq
        %v1326 = vshrl.u32 %v1325, 7
        %v1327 = vsub.s32 1, %v1326
        %v1328 = vrot.slane %v1319, %v1327
        %v1329 = vlaneseq
        %v1330 = vshrl.u32 %v1329, 7
        %v1331 = vsub.s32 2, %v1330
        %v1332 = vrot.slane %v1319, %v1331
        %1333 = vrot.lane.b32.xlu0 %v1324, 78
        %v1334 = vpop.permute.xlu0 %1333
        %1335 = vrot.lane.b32.xlu0 %v1328, 78
        %v1336 = vpop.permute.xlu0 %1335
        %1337 = vrot.lane.b32.xlu0 %v1332, 78
        %v1338 = vpop.permute.xlu0 %1337
        %vm1339 = vcmask 637952
        %v1340 = vsel %vm1339, %v1334, %v1336
        %v1341 = vsel %vm1339, %v1336, %v1338
        %v1344 = vsel %vm495, %v1340, 0.0
        %v1345 = vsel %vm496, %v1341, 0.0
        %v1346 = vadd.f32 %v1311, %v1344
        %v1347 = vadd.f32 %v1312, %v1345
        %s1348 = sld [smem:[#allocation9 + $0x18]]
        %v1349 = vstv %s1348
        %v1350 = vmul.f32 %v1349, %v452
        %s1351 = sld [smem:[#allocation9 + $0x98]]
        %v1352 = vstv %s1351
        %v1353 = vmul.f32 %v1352, %v453
        %v1354 = vadd.f32 %v1350, %v1353
        %v1356 = vlaneseq
        %v1357 = vshrl.u32 %v1356, 7
        %v1358 = vsub.s32 0, %v1357
        %v1359 = vrot.slane %v1354, %v1358
        %v1360 = vlaneseq
        %v1361 = vshrl.u32 %v1360, 7
        %v1362 = vsub.s32 1, %v1361
        %v1363 = vrot.slane %v1354, %v1362
        %v1364 = vlaneseq
        %v1365 = vshrl.u32 %v1364, 7
        %v1366 = vsub.s32 2, %v1365
        %v1367 = vrot.slane %v1354, %v1366
        %1368 = vrot.lane.b32.xlu0 %v1359, 77
        %v1369 = vpop.permute.xlu0 %1368
        %1370 = vrot.lane.b32.xlu0 %v1363, 77
        %v1371 = vpop.permute.xlu0 %1370
        %1372 = vrot.lane.b32.xlu0 %v1367, 77
        %v1373 = vpop.permute.xlu0 %1372
        %vm1374 = vcmask 629760
        %v1375 = vsel %vm1374, %v1369, %v1371
        %v1376 = vsel %vm1374, %v1371, %v1373
        %v1379 = vsel %vm501, %v1375, 0.0
        %v1380 = vsel %vm502, %v1376, 0.0
        %v1381 = vadd.f32 %v1346, %v1379
        %v1382 = vadd.f32 %v1347, %v1380
        %s1383 = sld [smem:[#allocation9 + $0x19]]
        %v1384 = vstv %s1383
        %v1385 = vmul.f32 %v1384, %v452
        %s1386 = sld [smem:[#allocation9 + $0x99]]
        %v1387 = vstv %s1386
        %v1388 = vmul.f32 %v1387, %v453
        %v1389 = vadd.f32 %v1385, %v1388
        %v1391 = vlaneseq
        %v1392 = vshrl.u32 %v1391, 7
        %v1393 = vsub.s32 0, %v1392
        %v1394 = vrot.slane %v1389, %v1393
        %v1395 = vlaneseq
        %v1396 = vshrl.u32 %v1395, 7
        %v1397 = vsub.s32 1, %v1396
        %v1398 = vrot.slane %v1389, %v1397
        %v1399 = vlaneseq
        %v1400 = vshrl.u32 %v1399, 7
        %v1401 = vsub.s32 2, %v1400
        %v1402 = vrot.slane %v1389, %v1401
        %1403 = vrot.lane.b32.xlu0 %v1394, 76
        %v1404 = vpop.permute.xlu0 %1403
        %1405 = vrot.lane.b32.xlu0 %v1398, 76
        %v1406 = vpop.permute.xlu0 %1405
        %1407 = vrot.lane.b32.xlu0 %v1402, 76
        %v1408 = vpop.permute.xlu0 %1407
        %vm1409 = vcmask 621568
        %v1410 = vsel %vm1409, %v1404, %v1406
        %v1411 = vsel %vm1409, %v1406, %v1408
        %v1414 = vsel %vm507, %v1410, 0.0
        %v1415 = vsel %vm508, %v1411, 0.0
        %v1416 = vadd.f32 %v1381, %v1414
        %v1417 = vadd.f32 %v1382, %v1415
        %s1418 = sld [smem:[#allocation9 + $0x1a]]
        %v1419 = vstv %s1418
        %v1420 = vmul.f32 %v1419, %v452
        %s1421 = sld [smem:[#allocation9 + $0x9a]]
        %v1422 = vstv %s1421
        %v1423 = vmul.f32 %v1422, %v453
        %v1424 = vadd.f32 %v1420, %v1423
        %v1426 = vlaneseq
        %v1427 = vshrl.u32 %v1426, 7
        %v1428 = vsub.s32 0, %v1427
        %v1429 = vrot.slane %v1424, %v1428
        %v1430 = vlaneseq
        %v1431 = vshrl.u32 %v1430, 7
        %v1432 = vsub.s32 1, %v1431
        %v1433 = vrot.slane %v1424, %v1432
        %v1434 = vlaneseq
        %v1435 = vshrl.u32 %v1434, 7
        %v1436 = vsub.s32 2, %v1435
        %v1437 = vrot.slane %v1424, %v1436
        %1438 = vrot.lane.b32.xlu0 %v1429, 75
        %v1439 = vpop.permute.xlu0 %1438
        %1440 = vrot.lane.b32.xlu0 %v1433, 75
        %v1441 = vpop.permute.xlu0 %1440
        %1442 = vrot.lane.b32.xlu0 %v1437, 75
        %v1443 = vpop.permute.xlu0 %1442
        %vm1444 = vcmask 613376
        %v1445 = vsel %vm1444, %v1439, %v1441
        %v1446 = vsel %vm1444, %v1441, %v1443
        %v1449 = vsel %vm513, %v1445, 0.0
        %v1450 = vsel %vm514, %v1446, 0.0
        %v1451 = vadd.f32 %v1416, %v1449
        %v1452 = vadd.f32 %v1417, %v1450
        %s1453 = sld [smem:[#allocation9 + $0x1b]]
        %v1454 = vstv %s1453
        %v1455 = vmul.f32 %v1454, %v452
        %s1456 = sld [smem:[#allocation9 + $0x9b]]
        %v1457 = vstv %s1456
        %v1458 = vmul.f32 %v1457, %v453
        %v1459 = vadd.f32 %v1455, %v1458
        %v1461 = vlaneseq
        %v1462 = vshrl.u32 %v1461, 7
        %v1463 = vsub.s32 0, %v1462
        %v1464 = vrot.slane %v1459, %v1463
        %v1465 = vlaneseq
        %v1466 = vshrl.u32 %v1465, 7
        %v1467 = vsub.s32 1, %v1466
        %v1468 = vrot.slane %v1459, %v1467
        %v1469 = vlaneseq
        %v1470 = vshrl.u32 %v1469, 7
        %v1471 = vsub.s32 2, %v1470
        %v1472 = vrot.slane %v1459, %v1471
        %1473 = vrot.lane.b32.xlu0 %v1464, 74
        %v1474 = vpop.permute.xlu0 %1473
        %1475 = vrot.lane.b32.xlu0 %v1468, 74
        %v1476 = vpop.permute.xlu0 %1475
        %1477 = vrot.lane.b32.xlu0 %v1472, 74
        %v1478 = vpop.permute.xlu0 %1477
        %vm1479 = vcmask 605184
        %v1480 = vsel %vm1479, %v1474, %v1476
        %v1481 = vsel %vm1479, %v1476, %v1478
        %v1484 = vsel %vm519, %v1480, 0.0
        %v1485 = vsel %vm520, %v1481, 0.0
        %v1486 = vadd.f32 %v1451, %v1484
        %v1487 = vadd.f32 %v1452, %v1485
        %s1488 = sld [smem:[#allocation9 + $0x1c]]
        %v1489 = vstv %s1488
        %v1490 = vmul.f32 %v1489, %v452
        %s1491 = sld [smem:[#allocation9 + $0x9c]]
        %v1492 = vstv %s1491
        %v1493 = vmul.f32 %v1492, %v453
        %v1494 = vadd.f32 %v1490, %v1493
        %v1496 = vlaneseq
        %v1497 = vshrl.u32 %v1496, 7
        %v1498 = vsub.s32 0, %v1497
        %v1499 = vrot.slane %v1494, %v1498
        %v1500 = vlaneseq
        %v1501 = vshrl.u32 %v1500, 7
        %v1502 = vsub.s32 1, %v1501
        %v1503 = vrot.slane %v1494, %v1502
        %v1504 = vlaneseq
        %v1505 = vshrl.u32 %v1504, 7
        %v1506 = vsub.s32 2, %v1505
        %v1507 = vrot.slane %v1494, %v1506
        %1508 = vrot.lane.b32.xlu0 %v1499, 64
        %v1509 = vpop.permute.xlu0 %1508
        %1510 = vrot.lane.b32.xlu0 %v1503, 64
        %v1511 = vpop.permute.xlu0 %1510
        %1512 = vrot.lane.b32.xlu0 %v1507, 64
        %v1513 = vpop.permute.xlu0 %1512
        %vm1514 = vcmask 523264
        %v1515 = vsel %vm1514, %v1509, %v1511
        %v1516 = vsel %vm1514, %v1511, %v1513
        %v1519 = vsel %vm483, %v1515, 0.0
        %v1520 = vsel %vm484, %v1516, 0.0
        %v1521 = vadd.f32 %v1486, %v1519
        %v1522 = vadd.f32 %v1487, %v1520
        %s1523 = sld [smem:[#allocation9 + $0x1d]]
        %v1524 = vstv %s1523
        %v1525 = vmul.f32 %v1524, %v452
        %s1526 = sld [smem:[#allocation9 + $0x9d]]
        %v1527 = vstv %s1526
        %v1528 = vmul.f32 %v1527, %v453
        %v1529 = vadd.f32 %v1525, %v1528
        %v1531 = vlaneseq
        %v1532 = vshrl.u32 %v1531, 7
        %v1533 = vsub.s32 0, %v1532
        %v1534 = vrot.slane %v1529, %v1533
        %v1535 = vlaneseq
        %v1536 = vshrl.u32 %v1535, 7
        %v1537 = vsub.s32 1, %v1536
        %v1538 = vrot.slane %v1529, %v1537
        %v1539 = vlaneseq
        %v1540 = vshrl.u32 %v1539, 7
        %v1541 = vsub.s32 2, %v1540
        %v1542 = vrot.slane %v1529, %v1541
        %1543 = vrot.lane.b32.xlu0 %v1534, 63
        %v1544 = vpop.permute.xlu0 %1543
        %1545 = vrot.lane.b32.xlu0 %v1538, 63
        %v1546 = vpop.permute.xlu0 %1545
        %1547 = vrot.lane.b32.xlu0 %v1542, 63
        %v1548 = vpop.permute.xlu0 %1547
        %vm1549 = vcmask 515072
        %v1550 = vsel %vm1549, %v1544, %v1546
        %v1551 = vsel %vm1549, %v1546, %v1548
        %v1554 = vsel %vm489, %v1550, 0.0
        %v1555 = vsel %vm490, %v1551, 0.0
        %v1556 = vadd.f32 %v1521, %v1554
        %v1557 = vadd.f32 %v1522, %v1555
        %s1558 = sld [smem:[#allocation9 + $0x1e]]
        %v1559 = vstv %s1558
        %v1560 = vmul.f32 %v1559, %v452
        %s1561 = sld [smem:[#allocation9 + $0x9e]]
        %v1562 = vstv %s1561
        %v1563 = vmul.f32 %v1562, %v453
        %v1564 = vadd.f32 %v1560, %v1563
        %v1566 = vlaneseq
        %v1567 = vshrl.u32 %v1566, 7
        %v1568 = vsub.s32 0, %v1567
        %v1569 = vrot.slane %v1564, %v1568
        %v1570 = vlaneseq
        %v1571 = vshrl.u32 %v1570, 7
        %v1572 = vsub.s32 1, %v1571
        %v1573 = vrot.slane %v1564, %v1572
        %v1574 = vlaneseq
        %v1575 = vshrl.u32 %v1574, 7
        %v1576 = vsub.s32 2, %v1575
        %v1577 = vrot.slane %v1564, %v1576
        %1578 = vrot.lane.b32.xlu0 %v1569, 62
        %v1579 = vpop.permute.xlu0 %1578
        %1580 = vrot.lane.b32.xlu0 %v1573, 62
        %v1581 = vpop.permute.xlu0 %1580
        %1582 = vrot.lane.b32.xlu0 %v1577, 62
        %v1583 = vpop.permute.xlu0 %1582
        %vm1584 = vcmask 506880
        %v1585 = vsel %vm1584, %v1579, %v1581
        %v1586 = vsel %vm1584, %v1581, %v1583
        %v1589 = vsel %vm495, %v1585, 0.0
        %v1590 = vsel %vm496, %v1586, 0.0
        %v1591 = vadd.f32 %v1556, %v1589
        %v1592 = vadd.f32 %v1557, %v1590
        %s1593 = sld [smem:[#allocation9 + $0x1f]]
        %v1594 = vstv %s1593
        %v1595 = vmul.f32 %v1594, %v452
        %s1596 = sld [smem:[#allocation9 + $0x9f]]
        %v1597 = vstv %s1596
        %v1598 = vmul.f32 %v1597, %v453
        %v1599 = vadd.f32 %v1595, %v1598
        %v1601 = vlaneseq
        %v1602 = vshrl.u32 %v1601, 7
        %v1603 = vsub.s32 0, %v1602
        %v1604 = vrot.slane %v1599, %v1603
        %v1605 = vlaneseq
        %v1606 = vshrl.u32 %v1605, 7
        %v1607 = vsub.s32 1, %v1606
        %v1608 = vrot.slane %v1599, %v1607
        %v1609 = vlaneseq
        %v1610 = vshrl.u32 %v1609, 7
        %v1611 = vsub.s32 2, %v1610
        %v1612 = vrot.slane %v1599, %v1611
        %1613 = vrot.lane.b32.xlu0 %v1604, 61
        %v1614 = vpop.permute.xlu0 %1613
        %1615 = vrot.lane.b32.xlu0 %v1608, 61
        %v1616 = vpop.permute.xlu0 %1615
        %1617 = vrot.lane.b32.xlu0 %v1612, 61
        %v1618 = vpop.permute.xlu0 %1617
        %vm1619 = vcmask 498688
        %v1620 = vsel %vm1619, %v1614, %v1616
        %v1621 = vsel %vm1619, %v1616, %v1618
        %v1624 = vsel %vm501, %v1620, 0.0
        %v1625 = vsel %vm502, %v1621, 0.0
        %v1626 = vadd.f32 %v1591, %v1624
        %v1627 = vadd.f32 %v1592, %v1625
        %s1628 = sld [smem:[#allocation9 + $0x20]]
        %v1629 = vstv %s1628
        %v1630 = vmul.f32 %v1629, %v452
        %s1631 = sld [smem:[#allocation9 + $0xa0]]
        %v1632 = vstv %s1631
        %v1633 = vmul.f32 %v1632, %v453
        %v1634 = vadd.f32 %v1630, %v1633
        %v1636 = vlaneseq
        %v1637 = vshrl.u32 %v1636, 7
        %v1638 = vsub.s32 0, %v1637
        %v1639 = vrot.slane %v1634, %v1638
        %v1640 = vlaneseq
        %v1641 = vshrl.u32 %v1640, 7
        %v1642 = vsub.s32 1, %v1641
        %v1643 = vrot.slane %v1634, %v1642
        %v1644 = vlaneseq
        %v1645 = vshrl.u32 %v1644, 7
        %v1646 = vsub.s32 2, %v1645
        %v1647 = vrot.slane %v1634, %v1646
        %1648 = vrot.lane.b32.xlu0 %v1639, 60
        %v1649 = vpop.permute.xlu0 %1648
        %1650 = vrot.lane.b32.xlu0 %v1643, 60
        %v1651 = vpop.permute.xlu0 %1650
        %1652 = vrot.lane.b32.xlu0 %v1647, 60
        %v1653 = vpop.permute.xlu0 %1652
        %vm1654 = vcmask 490496
        %v1655 = vsel %vm1654, %v1649, %v1651
        %v1656 = vsel %vm1654, %v1651, %v1653
        %v1659 = vsel %vm507, %v1655, 0.0
        %v1660 = vsel %vm508, %v1656, 0.0
        %v1661 = vadd.f32 %v1626, %v1659
        %v1662 = vadd.f32 %v1627, %v1660
        %s1663 = sld [smem:[#allocation9 + $0x21]]
        %v1664 = vstv %s1663
        %v1665 = vmul.f32 %v1664, %v452
        %s1666 = sld [smem:[#allocation9 + $0xa1]]
        %v1667 = vstv %s1666
        %v1668 = vmul.f32 %v1667, %v453
        %v1669 = vadd.f32 %v1665, %v1668
        %v1671 = vlaneseq
        %v1672 = vshrl.u32 %v1671, 7
        %v1673 = vsub.s32 0, %v1672
        %v1674 = vrot.slane %v1669, %v1673
        %v1675 = vlaneseq
        %v1676 = vshrl.u32 %v1675, 7
        %v1677 = vsub.s32 1, %v1676
        %v1678 = vrot.slane %v1669, %v1677
        %v1679 = vlaneseq
        %v1680 = vshrl.u32 %v1679, 7
        %v1681 = vsub.s32 2, %v1680
        %v1682 = vrot.slane %v1669, %v1681
        %1683 = vrot.lane.b32.xlu0 %v1674, 59
        %v1684 = vpop.permute.xlu0 %1683
        %1685 = vrot.lane.b32.xlu0 %v1678, 59
        %v1686 = vpop.permute.xlu0 %1685
        %1687 = vrot.lane.b32.xlu0 %v1682, 59
        %v1688 = vpop.permute.xlu0 %1687
        %vm1689 = vcmask 482304
        %v1690 = vsel %vm1689, %v1684, %v1686
        %v1691 = vsel %vm1689, %v1686, %v1688
        %v1694 = vsel %vm513, %v1690, 0.0
        %v1695 = vsel %vm514, %v1691, 0.0
        %v1696 = vadd.f32 %v1661, %v1694
        %v1697 = vadd.f32 %v1662, %v1695
        %s1698 = sld [smem:[#allocation9 + $0x22]]
        %v1699 = vstv %s1698
        %v1700 = vmul.f32 %v1699, %v452
        %s1701 = sld [smem:[#allocation9 + $0xa2]]
        %v1702 = vstv %s1701
        %v1703 = vmul.f32 %v1702, %v453
        %v1704 = vadd.f32 %v1700, %v1703
        %v1706 = vlaneseq
        %v1707 = vshrl.u32 %v1706, 7
        %v1708 = vsub.s32 0, %v1707
        %v1709 = vrot.slane %v1704, %v1708
        %v1710 = vlaneseq
        %v1711 = vshrl.u32 %v1710, 7
        %v1712 = vsub.s32 1, %v1711
        %v1713 = vrot.slane %v1704, %v1712
        %v1714 = vlaneseq
        %v1715 = vshrl.u32 %v1714, 7
        %v1716 = vsub.s32 2, %v1715
        %v1717 = vrot.slane %v1704, %v1716
        %1718 = vrot.lane.b32.xlu0 %v1709, 58
        %v1719 = vpop.permute.xlu0 %1718
        %1720 = vrot.lane.b32.xlu0 %v1713, 58
        %v1721 = vpop.permute.xlu0 %1720
        %1722 = vrot.lane.b32.xlu0 %v1717, 58
        %v1723 = vpop.permute.xlu0 %1722
        %vm1724 = vcmask 474112
        %v1725 = vsel %vm1724, %v1719, %v1721
        %v1726 = vsel %vm1724, %v1721, %v1723
        %v1729 = vsel %vm519, %v1725, 0.0
        %v1730 = vsel %vm520, %v1726, 0.0
        %v1731 = vadd.f32 %v1696, %v1729
        %v1732 = vadd.f32 %v1697, %v1730
        %s1733 = sld [smem:[#allocation9 + $0x23]]
        %v1734 = vstv %s1733
        %v1735 = vmul.f32 %v1734, %v452
        %s1736 = sld [smem:[#allocation9 + $0xa3]]
        %v1737 = vstv %s1736
        %v1738 = vmul.f32 %v1737, %v453
        %v1739 = vadd.f32 %v1735, %v1738
        %v1741 = vlaneseq
        %v1742 = vshrl.u32 %v1741, 7
        %v1743 = vsub.s32 0, %v1742
        %v1744 = vrot.slane %v1739, %v1743
        %v1745 = vlaneseq
        %v1746 = vshrl.u32 %v1745, 7
        %v1747 = vsub.s32 1, %v1746
        %v1748 = vrot.slane %v1739, %v1747
        %v1749 = vlaneseq
        %v1750 = vshrl.u32 %v1749, 7
        %v1751 = vsub.s32 2, %v1750
        %v1752 = vrot.slane %v1739, %v1751
        %1753 = vrot.lane.b32.xlu0 %v1744, 48
        %v1754 = vpop.permute.xlu0 %1753
        %1755 = vrot.lane.b32.xlu0 %v1748, 48
        %v1756 = vpop.permute.xlu0 %1755
        %1757 = vrot.lane.b32.xlu0 %v1752, 48
        %v1758 = vpop.permute.xlu0 %1757
        %vm1759 = vcmask 392192
        %v1760 = vsel %vm1759, %v1754, %v1756
        %v1761 = vsel %vm1759, %v1756, %v1758
        %v1764 = vsel %vm483, %v1760, 0.0
        %v1765 = vsel %vm484, %v1761, 0.0
        %v1766 = vadd.f32 %v1731, %v1764
        %v1767 = vadd.f32 %v1732, %v1765
        %s1768 = sld [smem:[#allocation9 + $0x24]]
        %v1769 = vstv %s1768
        %v1770 = vmul.f32 %v1769, %v452
        %s1771 = sld [smem:[#allocation9 + $0xa4]]
        %v1772 = vstv %s1771
        %v1773 = vmul.f32 %v1772, %v453
        %v1774 = vadd.f32 %v1770, %v1773
        %v1776 = vlaneseq
        %v1777 = vshrl.u32 %v1776, 7
        %v1778 = vsub.s32 0, %v1777
        %v1779 = vrot.slane %v1774, %v1778
        %v1780 = vlaneseq
        %v1781 = vshrl.u32 %v1780, 7
        %v1782 = vsub.s32 1, %v1781
        %v1783 = vrot.slane %v1774, %v1782
        %v1784 = vlaneseq
        %v1785 = vshrl.u32 %v1784, 7
        %v1786 = vsub.s32 2, %v1785
        %v1787 = vrot.slane %v1774, %v1786
        %1788 = vrot.lane.b32.xlu0 %v1779, 47
        %v1789 = vpop.permute.xlu0 %1788
        %1790 = vrot.lane.b32.xlu0 %v1783, 47
        %v1791 = vpop.permute.xlu0 %1790
        %1792 = vrot.lane.b32.xlu0 %v1787, 47
        %v1793 = vpop.permute.xlu0 %1792
        %vm1794 = vcmask 384000
        %v1795 = vsel %vm1794, %v1789, %v1791
        %v1796 = vsel %vm1794, %v1791, %v1793
        %v1799 = vsel %vm489, %v1795, 0.0
        %v1800 = vsel %vm490, %v1796, 0.0
        %v1801 = vadd.f32 %v1766, %v1799
        %v1802 = vadd.f32 %v1767, %v1800
        %s1803 = sld [smem:[#allocation9 + $0x25]]
        %v1804 = vstv %s1803
        %v1805 = vmul.f32 %v1804, %v452
        %s1806 = sld [smem:[#allocation9 + $0xa5]]
        %v1807 = vstv %s1806
        %v1808 = vmul.f32 %v1807, %v453
        %v1809 = vadd.f32 %v1805, %v1808
        %v1811 = vlaneseq
        %v1812 = vshrl.u32 %v1811, 7
        %v1813 = vsub.s32 0, %v1812
        %v1814 = vrot.slane %v1809, %v1813
        %v1815 = vlaneseq
        %v1816 = vshrl.u32 %v1815, 7
        %v1817 = vsub.s32 1, %v1816
        %v1818 = vrot.slane %v1809, %v1817
        %v1819 = vlaneseq
        %v1820 = vshrl.u32 %v1819, 7
        %v1821 = vsub.s32 2, %v1820
        %v1822 = vrot.slane %v1809, %v1821
        %1823 = vrot.lane.b32.xlu0 %v1814, 46
        %v1824 = vpop.permute.xlu0 %1823
        %1825 = vrot.lane.b32.xlu0 %v1818, 46
        %v1826 = vpop.permute.xlu0 %1825
        %1827 = vrot.lane.b32.xlu0 %v1822, 46
        %v1828 = vpop.permute.xlu0 %1827
        %vm1829 = vcmask 375808
        %v1830 = vsel %vm1829, %v1824, %v1826
        %v1831 = vsel %vm1829, %v1826, %v1828
        %v1834 = vsel %vm495, %v1830, 0.0
        %v1835 = vsel %vm496, %v1831, 0.0
        %v1836 = vadd.f32 %v1801, %v1834
        %v1837 = vadd.f32 %v1802, %v1835
        %s1838 = sld [smem:[#allocation9 + $0x26]]
        %v1839 = vstv %s1838
        %v1840 = vmul.f32 %v1839, %v452
        %s1841 = sld [smem:[#allocation9 + $0xa6]]
        %v1842 = vstv %s1841
        %v1843 = vmul.f32 %v1842, %v453
        %v1844 = vadd.f32 %v1840, %v1843
        %v1846 = vlaneseq
        %v1847 = vshrl.u32 %v1846, 7
        %v1848 = vsub.s32 0, %v1847
        %v1849 = vrot.slane %v1844, %v1848
        %v1850 = vlaneseq
        %v1851 = vshrl.u32 %v1850, 7
        %v1852 = vsub.s32 1, %v1851
        %v1853 = vrot.slane %v1844, %v1852
        %v1854 = vlaneseq
        %v1855 = vshrl.u32 %v1854, 7
        %v1856 = vsub.s32 2, %v1855
        %v1857 = vrot.slane %v1844, %v1856
        %1858 = vrot.lane.b32.xlu0 %v1849, 45
        %v1859 = vpop.permute.xlu0 %1858
        %1860 = vrot.lane.b32.xlu0 %v1853, 45
        %v1861 = vpop.permute.xlu0 %1860
        %1862 = vrot.lane.b32.xlu0 %v1857, 45
        %v1863 = vpop.permute.xlu0 %1862
        %vm1864 = vcmask 367616
        %v1865 = vsel %vm1864, %v1859, %v1861
        %v1866 = vsel %vm1864, %v1861, %v1863
        %v1869 = vsel %vm501, %v1865, 0.0
        %v1870 = vsel %vm502, %v1866, 0.0
        %v1871 = vadd.f32 %v1836, %v1869
        %v1872 = vadd.f32 %v1837, %v1870
        %s1873 = sld [smem:[#allocation9 + $0x27]]
        %v1874 = vstv %s1873
        %v1875 = vmul.f32 %v1874, %v452
        %s1876 = sld [smem:[#allocation9 + $0xa7]]
        %v1877 = vstv %s1876
        %v1878 = vmul.f32 %v1877, %v453
        %v1879 = vadd.f32 %v1875, %v1878
        %v1881 = vlaneseq
        %v1882 = vshrl.u32 %v1881, 7
        %v1883 = vsub.s32 0, %v1882
        %v1884 = vrot.slane %v1879, %v1883
        %v1885 = vlaneseq
        %v1886 = vshrl.u32 %v1885, 7
        %v1887 = vsub.s32 1, %v1886
        %v1888 = vrot.slane %v1879, %v1887
        %v1889 = vlaneseq
        %v1890 = vshrl.u32 %v1889, 7
        %v1891 = vsub.s32 2, %v1890
        %v1892 = vrot.slane %v1879, %v1891
        %1893 = vrot.lane.b32.xlu0 %v1884, 44
        %v1894 = vpop.permute.xlu0 %1893
        %1895 = vrot.lane.b32.xlu0 %v1888, 44
        %v1896 = vpop.permute.xlu0 %1895
        %1897 = vrot.lane.b32.xlu0 %v1892, 44
        %v1898 = vpop.permute.xlu0 %1897
        %vm1899 = vcmask 359424
        %v1900 = vsel %vm1899, %v1894, %v1896
        %v1901 = vsel %vm1899, %v1896, %v1898
        %v1904 = vsel %vm507, %v1900, 0.0
        %v1905 = vsel %vm508, %v1901, 0.0
        %v1906 = vadd.f32 %v1871, %v1904
        %v1907 = vadd.f32 %v1872, %v1905
        %s1908 = sld [smem:[#allocation9 + $0x28]]
        %v1909 = vstv %s1908
        %v1910 = vmul.f32 %v1909, %v452
        %s1911 = sld [smem:[#allocation9 + $0xa8]]
        %v1912 = vstv %s1911
        %v1913 = vmul.f32 %v1912, %v453
        %v1914 = vadd.f32 %v1910, %v1913
        %v1916 = vlaneseq
        %v1917 = vshrl.u32 %v1916, 7
        %v1918 = vsub.s32 0, %v1917
        %v1919 = vrot.slane %v1914, %v1918
        %v1920 = vlaneseq
        %v1921 = vshrl.u32 %v1920, 7
        %v1922 = vsub.s32 1, %v1921
        %v1923 = vrot.slane %v1914, %v1922
        %v1924 = vlaneseq
        %v1925 = vshrl.u32 %v1924, 7
        %v1926 = vsub.s32 2, %v1925
        %v1927 = vrot.slane %v1914, %v1926
        %1928 = vrot.lane.b32.xlu0 %v1919, 43
        %v1929 = vpop.permute.xlu0 %1928
        %1930 = vrot.lane.b32.xlu0 %v1923, 43
        %v1931 = vpop.permute.xlu0 %1930
        %1932 = vrot.lane.b32.xlu0 %v1927, 43
        %v1933 = vpop.permute.xlu0 %1932
        %vm1934 = vcmask 351232
        %v1935 = vsel %vm1934, %v1929, %v1931
        %v1936 = vsel %vm1934, %v1931, %v1933
        %v1939 = vsel %vm513, %v1935, 0.0
        %v1940 = vsel %vm514, %v1936, 0.0
        %v1941 = vadd.f32 %v1906, %v1939
        %v1942 = vadd.f32 %v1907, %v1940
        %s1943 = sld [smem:[#allocation9 + $0x29]]
        %v1944 = vstv %s1943
        %v1945 = vmul.f32 %v1944, %v452
        %s1946 = sld [smem:[#allocation9 + $0xa9]]
        %v1947 = vstv %s1946
        %v1948 = vmul.f32 %v1947, %v453
        %v1949 = vadd.f32 %v1945, %v1948
        %v1951 = vlaneseq
        %v1952 = vshrl.u32 %v1951, 7
        %v1953 = vsub.s32 0, %v1952
        %v1954 = vrot.slane %v1949, %v1953
        %v1955 = vlaneseq
        %v1956 = vshrl.u32 %v1955, 7
        %v1957 = vsub.s32 1, %v1956
        %v1958 = vrot.slane %v1949, %v1957
        %v1959 = vlaneseq
        %v1960 = vshrl.u32 %v1959, 7
        %v1961 = vsub.s32 2, %v1960
        %v1962 = vrot.slane %v1949, %v1961
        %1963 = vrot.lane.b32.xlu0 %v1954, 42
        %v1964 = vpop.permute.xlu0 %1963
        %1965 = vrot.lane.b32.xlu0 %v1958, 42
        %v1966 = vpop.permute.xlu0 %1965
        %1967 = vrot.lane.b32.xlu0 %v1962, 42
        %v1968 = vpop.permute.xlu0 %1967
        %vm1969 = vcmask 343040
        %v1970 = vsel %vm1969, %v1964, %v1966
        %v1971 = vsel %vm1969, %v1966, %v1968
        %v1974 = vsel %vm519, %v1970, 0.0
        %v1975 = vsel %vm520, %v1971, 0.0
        %v1976 = vadd.f32 %v1941, %v1974
        %v1977 = vadd.f32 %v1942, %v1975
        %s1978 = sld [smem:[#allocation9 + $0x2a]]
        %v1979 = vstv %s1978
        %v1980 = vmul.f32 %v1979, %v452
        %s1981 = sld [smem:[#allocation9 + $0xaa]]
        %v1982 = vstv %s1981
        %v1983 = vmul.f32 %v1982, %v453
        %v1984 = vadd.f32 %v1980, %v1983
        %v1986 = vlaneseq
        %v1987 = vshrl.u32 %v1986, 7
        %v1988 = vsub.s32 0, %v1987
        %v1989 = vrot.slane %v1984, %v1988
        %v1990 = vlaneseq
        %v1991 = vshrl.u32 %v1990, 7
        %v1992 = vsub.s32 1, %v1991
        %v1993 = vrot.slane %v1984, %v1992
        %v1994 = vlaneseq
        %v1995 = vshrl.u32 %v1994, 7
        %v1996 = vsub.s32 2, %v1995
        %v1997 = vrot.slane %v1984, %v1996
        %1998 = vrot.lane.b32.xlu0 %v1989, 32
        %v1999 = vpop.permute.xlu0 %1998
        %2000 = vrot.lane.b32.xlu0 %v1993, 32
        %v2001 = vpop.permute.xlu0 %2000
        %2002 = vrot.lane.b32.xlu0 %v1997, 32
        %v2003 = vpop.permute.xlu0 %2002
        %vm2004 = vcmask 261120
        %v2005 = vsel %vm2004, %v1999, %v2001
        %v2006 = vsel %vm2004, %v2001, %v2003
        %v2009 = vsel %vm483, %v2005, 0.0
        %v2010 = vsel %vm484, %v2006, 0.0
        %v2011 = vadd.f32 %v1976, %v2009
        %v2012 = vadd.f32 %v1977, %v2010
        %s2013 = sld [smem:[#allocation9 + $0x2b]]
        %v2014 = vstv %s2013
        %v2015 = vmul.f32 %v2014, %v452
        %s2016 = sld [smem:[#allocation9 + $0xab]]
        %v2017 = vstv %s2016
        %v2018 = vmul.f32 %v2017, %v453
        %v2019 = vadd.f32 %v2015, %v2018
        %v2021 = vlaneseq
        %v2022 = vshrl.u32 %v2021, 7
        %v2023 = vsub.s32 0, %v2022
        %v2024 = vrot.slane %v2019, %v2023
        %v2025 = vlaneseq
        %v2026 = vshrl.u32 %v2025, 7
        %v2027 = vsub.s32 1, %v2026
        %v2028 = vrot.slane %v2019, %v2027
        %v2029 = vlaneseq
        %v2030 = vshrl.u32 %v2029, 7
        %v2031 = vsub.s32 2, %v2030
        %v2032 = vrot.slane %v2019, %v2031
        %2033 = vrot.lane.b32.xlu0 %v2024, 31
        %v2034 = vpop.permute.xlu0 %2033
        %2035 = vrot.lane.b32.xlu0 %v2028, 31
        %v2036 = vpop.permute.xlu0 %2035
        %2037 = vrot.lane.b32.xlu0 %v2032, 31
        %v2038 = vpop.permute.xlu0 %2037
        %vm2039 = vcmask 252928
        %v2040 = vsel %vm2039, %v2034, %v2036
        %v2041 = vsel %vm2039, %v2036, %v2038
        %v2044 = vsel %vm489, %v2040, 0.0
        %v2045 = vsel %vm490, %v2041, 0.0
        %v2046 = vadd.f32 %v2011, %v2044
        %v2047 = vadd.f32 %v2012, %v2045
        %s2048 = sld [smem:[#allocation9 + $0x2c]]
        %v2049 = vstv %s2048
        %v2050 = vmul.f32 %v2049, %v452
        %s2051 = sld [smem:[#allocation9 + $0xac]]
        %v2052 = vstv %s2051
        %v2053 = vmul.f32 %v2052, %v453
        %v2054 = vadd.f32 %v2050, %v2053
        %v2056 = vlaneseq
        %v2057 = vshrl.u32 %v2056, 7
        %v2058 = vsub.s32 0, %v2057
        %v2059 = vrot.slane %v2054, %v2058
        %v2060 = vlaneseq
        %v2061 = vshrl.u32 %v2060, 7
        %v2062 = vsub.s32 1, %v2061
        %v2063 = vrot.slane %v2054, %v2062
        %v2064 = vlaneseq
        %v2065 = vshrl.u32 %v2064, 7
        %v2066 = vsub.s32 2, %v2065
        %v2067 = vrot.slane %v2054, %v2066
        %2068 = vrot.lane.b32.xlu0 %v2059, 30
        %v2069 = vpop.permute.xlu0 %2068
        %2070 = vrot.lane.b32.xlu0 %v2063, 30
        %v2071 = vpop.permute.xlu0 %2070
        %2072 = vrot.lane.b32.xlu0 %v2067, 30
        %v2073 = vpop.permute.xlu0 %2072
        %vm2074 = vcmask 244736
        %v2075 = vsel %vm2074, %v2069, %v2071
        %v2076 = vsel %vm2074, %v2071, %v2073
        %v2079 = vsel %vm495, %v2075, 0.0
        %v2080 = vsel %vm496, %v2076, 0.0
        %v2081 = vadd.f32 %v2046, %v2079
        %v2082 = vadd.f32 %v2047, %v2080
        %s2083 = sld [smem:[#allocation9 + $0x2d]]
        %v2084 = vstv %s2083
        %v2085 = vmul.f32 %v2084, %v452
        %s2086 = sld [smem:[#allocation9 + $0xad]]
        %v2087 = vstv %s2086
        %v2088 = vmul.f32 %v2087, %v453
        %v2089 = vadd.f32 %v2085, %v2088
        %v2091 = vlaneseq
        %v2092 = vshrl.u32 %v2091, 7
        %v2093 = vsub.s32 0, %v2092
        %v2094 = vrot.slane %v2089, %v2093
        %v2095 = vlaneseq
        %v2096 = vshrl.u32 %v2095, 7
        %v2097 = vsub.s32 1, %v2096
        %v2098 = vrot.slane %v2089, %v2097
        %v2099 = vlaneseq
        %v2100 = vshrl.u32 %v2099, 7
        %v2101 = vsub.s32 2, %v2100
        %v2102 = vrot.slane %v2089, %v2101
        %2103 = vrot.lane.b32.xlu0 %v2094, 29
        %v2104 = vpop.permute.xlu0 %2103
        %2105 = vrot.lane.b32.xlu0 %v2098, 29
        %v2106 = vpop.permute.xlu0 %2105
        %2107 = vrot.lane.b32.xlu0 %v2102, 29
        %v2108 = vpop.permute.xlu0 %2107
        %vm2109 = vcmask 236544
        %v2110 = vsel %vm2109, %v2104, %v2106
        %v2111 = vsel %vm2109, %v2106, %v2108
        %v2114 = vsel %vm501, %v2110, 0.0
        %v2115 = vsel %vm502, %v2111, 0.0
        %v2116 = vadd.f32 %v2081, %v2114
        %v2117 = vadd.f32 %v2082, %v2115
        %s2118 = sld [smem:[#allocation9 + $0x2e]]
        %v2119 = vstv %s2118
        %v2120 = vmul.f32 %v2119, %v452
        %s2121 = sld [smem:[#allocation9 + $0xae]]
        %v2122 = vstv %s2121
        %v2123 = vmul.f32 %v2122, %v453
        %v2124 = vadd.f32 %v2120, %v2123
        %v2126 = vlaneseq
        %v2127 = vshrl.u32 %v2126, 7
        %v2128 = vsub.s32 0, %v2127
        %v2129 = vrot.slane %v2124, %v2128
        %v2130 = vlaneseq
        %v2131 = vshrl.u32 %v2130, 7
        %v2132 = vsub.s32 1, %v2131
        %v2133 = vrot.slane %v2124, %v2132
        %v2134 = vlaneseq
        %v2135 = vshrl.u32 %v2134, 7
        %v2136 = vsub.s32 2, %v2135
        %v2137 = vrot.slane %v2124, %v2136
        %2138 = vrot.lane.b32.xlu0 %v2129, 28
        %v2139 = vpop.permute.xlu0 %2138
        %2140 = vrot.lane.b32.xlu0 %v2133, 28
        %v2141 = vpop.permute.xlu0 %2140
        %2142 = vrot.lane.b32.xlu0 %v2137, 28
        %v2143 = vpop.permute.xlu0 %2142
        %vm2144 = vcmask 228352
        %v2145 = vsel %vm2144, %v2139, %v2141
        %v2146 = vsel %vm2144, %v2141, %v2143
        %v2149 = vsel %vm507, %v2145, 0.0
        %v2150 = vsel %vm508, %v2146, 0.0
        %v2151 = vadd.f32 %v2116, %v2149
        %v2152 = vadd.f32 %v2117, %v2150
        %s2153 = sld [smem:[#allocation9 + $0x2f]]
        %v2154 = vstv %s2153
        %v2155 = vmul.f32 %v2154, %v452
        %s2156 = sld [smem:[#allocation9 + $0xaf]]
        %v2157 = vstv %s2156
        %v2158 = vmul.f32 %v2157, %v453
        %v2159 = vadd.f32 %v2155, %v2158
        %v2161 = vlaneseq
        %v2162 = vshrl.u32 %v2161, 7
        %v2163 = vsub.s32 0, %v2162
        %v2164 = vrot.slane %v2159, %v2163
        %v2165 = vlaneseq
        %v2166 = vshrl.u32 %v2165, 7
        %v2167 = vsub.s32 1, %v2166
        %v2168 = vrot.slane %v2159, %v2167
        %v2169 = vlaneseq
        %v2170 = vshrl.u32 %v2169, 7
        %v2171 = vsub.s32 2, %v2170
        %v2172 = vrot.slane %v2159, %v2171
        %2173 = vrot.lane.b32.xlu0 %v2164, 27
        %v2174 = vpop.permute.xlu0 %2173
        %2175 = vrot.lane.b32.xlu0 %v2168, 27
        %v2176 = vpop.permute.xlu0 %2175
        %2177 = vrot.lane.b32.xlu0 %v2172, 27
        %v2178 = vpop.permute.xlu0 %2177
        %vm2179 = vcmask 220160
        %v2180 = vsel %vm2179, %v2174, %v2176
        %v2181 = vsel %vm2179, %v2176, %v2178
        %v2184 = vsel %vm513, %v2180, 0.0
        %v2185 = vsel %vm514, %v2181, 0.0
        %v2186 = vadd.f32 %v2151, %v2184
        %v2187 = vadd.f32 %v2152, %v2185
        %s2188 = sld [smem:[#allocation9 + $0x30]]
        %v2189 = vstv %s2188
        %v2190 = vmul.f32 %v2189, %v452
        %s2191 = sld [smem:[#allocation9 + $0xb0]]
        %v2192 = vstv %s2191
        %v2193 = vmul.f32 %v2192, %v453
        %v2194 = vadd.f32 %v2190, %v2193
        %v2196 = vlaneseq
        %v2197 = vshrl.u32 %v2196, 7
        %v2198 = vsub.s32 0, %v2197
        %v2199 = vrot.slane %v2194, %v2198
        %v2200 = vlaneseq
        %v2201 = vshrl.u32 %v2200, 7
        %v2202 = vsub.s32 1, %v2201
        %v2203 = vrot.slane %v2194, %v2202
        %v2204 = vlaneseq
        %v2205 = vshrl.u32 %v2204, 7
        %v2206 = vsub.s32 2, %v2205
        %v2207 = vrot.slane %v2194, %v2206
        %2208 = vrot.lane.b32.xlu0 %v2199, 26
        %v2209 = vpop.permute.xlu0 %2208
        %2210 = vrot.lane.b32.xlu0 %v2203, 26
        %v2211 = vpop.permute.xlu0 %2210
        %2212 = vrot.lane.b32.xlu0 %v2207, 26
        %v2213 = vpop.permute.xlu0 %2212
        %vm2214 = vcmask 211968
        %v2215 = vsel %vm2214, %v2209, %v2211
        %v2216 = vsel %vm2214, %v2211, %v2213
        %v2219 = vsel %vm519, %v2215, 0.0
        %v2220 = vsel %vm520, %v2216, 0.0
        %v2221 = vadd.f32 %v2186, %v2219
        %v2222 = vadd.f32 %v2187, %v2220
        %v2223 = vxor.u32 %v2221, 2147483648
        %v2224 = vxor.u32 %v2222, 2147483648
        %v2225 = vmul.f32 %v2223, 1.442695
        %v2226 = vpow.pop %v2225
        %v2227 = vmul.f32 %v2224, 1.442695
        %v2228 = vpow.pop %v2227
        %v2229 = vadd.f32 %v2226, 1.0
        %v2230 = vadd.f32 %v2228, 1.0
        %v2231 = vrcp.pop %v2229
        %v2232 = vmul.f32 1.0, %v2231
        %v2233 = vrcp.pop %v2230
        %v2234 = vmul.f32 1.0, %v2233
        %v2235 = vlaneseq
        %v2236 = vshrl.u32 %v2235, 7
        %v2237 = vsub.s32 0, %v2236
        %v2238 = vrot.slane %v2232, %v2237
        %v2239 = vlaneseq
        %v2240 = vshrl.u32 %v2239, 7
        %v2241 = vsub.s32 0, %v2240
        %v2242 = vrot.slane %v2234, %v2241
        %v2245 = vcombine.low %v2238, %v2242
        %v2247 = vmul.f32 %v360, %v2245
        %2248 = vst [vmem:[%s240] sm:$0xff] %v2247
        %s2249 = sand.u32 %s120, 1
        %s2250 = scalar_lea.sflag [#allocation5], %s2249
        %s2251 = sand.u32 %s120, 1
        %s2252 = smul.addr %s2251, 8
        %s2253 = scalar_lea.vmem [#allocation10], %s2252
        // Predicated region
        $region49: #{tpu_custom_call.1} parent=35 // pred_check
          %p2254 = pneg %p130
        $region50: #{tpu_custom_call.1} parent=35 // pred_check_branch
          %2256 = sbr.rel (%p2254) target = $region52
        $region51: #{tpu_custom_call.1} parent=35 // pred_region
          %s2258 = ssub.s32 128, 128
          %2259 = vsyncadd %s2250, %s2258
          %s2260 = smul.addr %s23, 2
          %s2261 = smul.addr %s2260, 64
          %s2262 = scalar_lea.hbm %s4, %s2261
          %s2264 = sshll.u32 %s2253, 4
          %s2265 = int_to_ptr.vmem [resolvable:$true] %s2264
          %2267 = dma.vmem_to_hbm [thread:$0]  %s2265, 128, %s2262, %s2250
        $region52: #{tpu_custom_call.1} parent=35 // pred_fallthru
          _
      $region36: #{tpu_custom_call.1} parent=5 // pred_fallthru
        _
      %p2268 = scmp.le.s32.totalorder 2, %s18
      // Predicated region
      $region53: #{tpu_custom_call.1} parent=5 // pred_check
        %p2269 = pneg %p2268
      $region54: #{tpu_custom_call.1} parent=5 // pred_check_branch
        %2271 = sbr.rel (%p2269) target = $region56
      $region55: #{tpu_custom_call.1} parent=5 // pred_region
        %s2272 = ssub.s32 %s18, 2
        // Predicated region
        $region57: #{tpu_custom_call.1} parent=55 // pred_check
          %p2273 = pneg %p136
        $region58: #{tpu_custom_call.1} parent=55 // pred_check_branch
          %2275 = sbr.rel (%p2273) target = $region60
        $region59: #{tpu_custom_call.1} parent=55 // pred_region
          %s2276 = sand.u32 %s121, 1
          %s2277 = scalar_lea.sflag [#allocation5], %s2276
          %s2278 = sand.u32 %s121, 1
          %s2279 = smul.addr %s2278, 8
          %s2280 = scalar_lea.vmem [#allocation10], %s2279
          %2281 = dma.done %s2277, 128
        $region60: #{tpu_custom_call.1} parent=55 // pred_fallthru
          _
      $region56: #{tpu_custom_call.1} parent=5 // pred_fallthru
        _
    $region6: #{tpu_custom_call.1} parent=1 // loop_footer
      %s22 = sadd.s32 1, %s18
    $region7: #{tpu_custom_call.1} parent=1 // loop_footer_branch
      %17 = sbr.rel target = $region3
    $region8: #{tpu_custom_call.1} parent=1 // loop_exit
      _
    %2282 = vsyncpa [#allocation4], 1
    %s2283 = scalar_lea.sflag [#allocation4], 1
    %2284 = vsyncpa %s2283, 1
    %2285 = vsyncpa [#allocation8], 1
    %2286 = vsyncpa [#allocation5], 1
    %s2287 = scalar_lea.sflag [#allocation5], 1
    %2288 = vsyncpa %s2287, 1
    %2289 = vsyncpa [#allocation6], 1
    %s2290 = scalar_lea.sflag [#allocation6], 1
    %2291 = vsyncpa %s2290, 1

</llo_original>
